<compile_context>
chip_gen: v7x
topology: tpu7x:2x2x1
jax: 0.10.0
libtpu: 0.0.40
codegen_flags: <defaults>
</compile_context>

<pallas_src>
import numpy as np

import jax
import jax.numpy as jnp
from jax.experimental import pallas as pl
from jax.experimental.pallas import tpu as pltpu

TARGET_SIZE = 5   # GlobalConfig.target_size (synthetic choice)
BN_EPS = 1e-5


# --------------------------------------------------------------------------------------
# The single fused Pallas kernel: whole forward pass, everything VMEM-resident.
# --------------------------------------------------------------------------------------
def _resnet_kernel(*refs):
    (x_ref,
     stem_r, stem_m, stem_b,
     pool_re, pool_ro, pool_ce, pool_co,
     l1a_r, l1a_m, l1a_b,
     l1b_r, l1b_m, l1b_b,
     ds_r, ds_m, ds_b,
     l2a_r, l2a_m, l2a_b,
     l2b_r, l2b_m, l2b_b,
     gap_rows, head_m, fc_b,
     out_ref) = refs

    def dot(a, b):
        return jnp.dot(a, b, preferred_element_type=jnp.float32)

    def conv_bn(x, r_ref, m_ref, b_ref, relu, residual=None):
        # y = sum_di (R_di @ x) @ M_di + bias  (+ residual)  [ReLU]
        acc = None
        for di in range(r_ref.shape[0]):            # kh is static (1 or 3) -> unrolled
            part = dot(dot(r_ref[di], x), m_ref[di])
            acc = part if acc is None else acc + part
        acc = acc + b_ref[...]
        if residual is not None:
            acc = acc + residual
        if relu:
            acc = jnp.maximum(acc, 0.0)
        return acc

    x = x_ref[...]                                              # (N*16, 16*3)

    # stem: conv3x3 + BN + ReLU                                 -> (N*16, 16*16)
    x = conv_bn(x, stem_r, stem_m, stem_b, relu=True)

    # maxpool 2x2: elementwise max over the 4 gathered taps     -> (N*8, 8*16)
    xe = dot(pool_re[...], x)
    xo = dot(pool_ro[...], x)
    x = jnp.maximum(
        jnp.maximum(dot(xe, pool_ce[...]), dot(xe, pool_co[...])),
        jnp.maximum(dot(xo, pool_ce[...]), dot(xo, pool_co[...])))

    # layer1 BasicBlock (identity shortcut)                     -> (N*8, 8*16)
    y = conv_bn(x, l1a_r, l1a_m, l1a_b, relu=True)
    x = conv_bn(y, l1b_r, l1b_m, l1b_b, relu=True, residual=x)

    # layer2 BasicBlock (stride 2, 1x1-conv+BN downsample)      -> (N*4, 4*32)
    d = conv_bn(x, ds_r, ds_m, ds_b, relu=False)
    y = conv_bn(x, l2a_r, l2a_m, l2a_b, relu=True)
    x = conv_bn(y, l2b_r, l2b_m, l2b_b, relu=True, residual=d)

    # head: GAP folded into fc                                  -> (N, TARGET_SIZE)
    feat = dot(gap_rows[...], x)                 # mean over spatial rows: (N, 4*32)
    out_ref[...] = (dot(feat, head_m[...]) + fc_b[...]).astype(out_ref.dtype)


# --------------------------------------------------------------------------------------
# Trace-time constant folding (numpy; runs once when the forward fn is built)
# --------------------------------------------------------------------------------------
def _fold_bn(bn):
    scale = bn["gamma"] / np.sqrt(bn["var"] + BN_EPS)
    bias = bn["beta"] - bn["mean"] * scale
    return scale.astype(np.float32), bias.astype(np.float32)


def _conv_bn_constants(w_oihw, bn, n, h, w, stride, pad):
    """Fold conv+BN into (R, M, b) so that y = sum_di (R[di] @ x) @ M[di] + b,
    with x:(n*h, w*cin) and y:(n*ho, wo*cout) in row-major (batch,row)/(col,channel)."""
    cout, cin, kh, kw = w_oihw.shape
    ho = (h + 2 * pad - kh) // stride + 1
    wo = (w + 2 * pad - kw) // stride + 1
    scale, bias = _fold_bn(bn)
    w_scaled = w_oihw.astype(np.float32) * scale[:, None, None, None]   # (cout,cin,kh,kw)

    r = np.zeros((kh, n * ho, n * h), np.float32)
    for di in range(kh):
        for b_ in range(n):
            for o in range(ho):
                hi = o * stride + di - pad
                if 0 <= hi < h:
                    r[di, b_ * ho + o, b_ * h + hi] = 1.0

    m = np.zeros((kh, w * cin, wo * cout), np.float32)
    for di in range(kh):
        for o in range(wo):
            for dj in range(kw):
                wi = o * stride + dj - pad
                if 0 <= wi < w:
                    m[di, wi * cin:(wi + 1) * cin, o * cout:(o + 1) * cout] = \
                        w_scaled[:, :, di, dj].T
    b = np.tile(bias, wo)[None, :].astype(np.float32)                   # (1, wo*cout)
    return r, m, b, (ho, wo, cout)


def _maxpool2x2_constants(n, h, w, c):
    ho, wo = h // 2, w // 2
    re = np.zeros((n * ho, n * h), np.float32)
    ro = np.zeros((n * ho, n * h), np.float32)
    for b_ in range(n):
        for o in range(ho):
            re[b_ * ho + o, b_ * h + 2 * o] = 1.0
            ro[b_ * ho + o, b_ * h + 2 * o + 1] = 1.0
    eye = np.eye(c, dtype=np.float32)
    ce = np.zeros((w * c, wo * c), np.float32)
    co = np.zeros((w * c, wo * c), np.float32)
    for o in range(wo):
        ce[(2 * o) * c:(2 * o + 1) * c, o * c:(o + 1) * c] = eye
        co[(2 * o + 1) * c:(2 * o + 2) * c, o * c:(o + 1) * c] = eye
    return re, ro, ce, co, (ho, wo)


def _head_constants(n, h, w, c, fc_w, fc_b):
    # GAP folded into fc:  logits = (Grows @ x) @ (Gcols @ fc_w.T) + fc_b
    gap_rows = np.zeros((n, n * h), np.float32)
    for b_ in range(n):
        gap_rows[b_, b_ * h:(b_ + 1) * h] = 1.0 / h
    gap_cols = np.zeros((w * c, c), np.float32)
    eye = np.eye(c, dtype=np.float32)
    for o in range(w):
        gap_cols[o * c:(o + 1) * c, :] = eye / w
    head_m = gap_cols @ fc_w.astype(np.float32).T                       # (w*c, TARGET)
    return gap_rows, head_m, fc_b.astype(np.float32)[None, :]


def make_pallas_forward(params, input_shape):
    """Fold all weights/BN into kernel constants; return forward(x_nchw) -> logits."""
    n, cin, h, w = input_shape
    p = jax.tree_util.tree_map(np.asarray, params)

    consts = []
    # stem conv3x3 s1 p1 (cin -> 16)
    r, m, b, (h1, w1, c1) = _conv_bn_constants(p["stem_w"], p["stem_bn"], n, h, w, 1, 1)
    consts += [r, m, b]
    # maxpool 2x2
    re, ro, ce, co, (h2, w2) = _maxpool2x2_constants(n, h1, w1, c1)
    consts += [re, ro, ce, co]
    # layer1 BasicBlock (16 -> 16)
    r, m, b, _ = _conv_bn_constants(p["l1_w1"], p["l1_bn1"], n, h2, w2, 1, 1)
    consts += [r, m, b]
    r, m, b, _ = _conv_bn_constants(p["l1_w2"], p["l1_bn2"], n, h2, w2, 1, 1)
    consts += [r, m, b]
    # layer2 BasicBlock (16 -> 32, stride 2) with 1x1 downsample shortcut
    r, m, b, _ = _conv_bn_constants(p["l2_dw"], p["l2_dbn"], n, h2, w2, 2, 0)
    consts += [r, m, b]
    r, m, b, _ = _conv_bn_constants(p["l2_w1"], p["l2_bn1"], n, h2, w2, 2, 1)
    consts += [r, m, b]
    r, m, b, (h3, w3, c3) = _conv_bn_constants(p["l2_w2"], p["l2_bn2"],
                                               n, h2 // 2, w2 // 2, 1, 1)
    consts += [r, m, b]
    # head: GAP folded into fc
    gr, hm, fb = _head_constants(n, h3, w3, c3, p["fc_w"], p["fc_b"])
    consts += [gr, hm, fb]

    consts = [jnp.asarray(c, dtype=jnp.float32) for c in consts]
    n_inputs = 1 + len(consts)
    vmem = pl.BlockSpec(memory_space=pltpu.MemorySpace.VMEM)

    call = pl.pallas_call(
        _resnet_kernel,
        out_shape=jax.ShapeDtypeStruct((n, TARGET_SIZE), jnp.float32),
        in_specs=[vmem] * n_inputs,
        out_specs=vmem,
    )

    def forward(x_nchw):
        # NCHW -> lane-dense (N*H, W*Cin) layout (tiny one-time glue on the raw input)
        x2d = jnp.transpose(x_nchw.astype(jnp.float32), (0, 2, 3, 1)).reshape(n * h, w * cin)
        return call(x2d, *consts)

    return forward


# --------------------------------------------------------------------------------------
# Parameters + independent pure-JAX reference (lax.conv) for correctness checking
# --------------------------------------------------------------------------------------
def init_params(key):
    # TODO(synk): timm.create_model / pretrained weights have no Pallas equivalent;
    # the backbone is reproduced as a scaled-down ResNet with random weights.
    ks = iter(jax.random.split(key, 64))

    def conv(cout, cin, k):
        fan_in = cin * k * k
        return jax.random.normal(next(ks), (cout, cin, k, k), jnp.float32) / jnp.sqrt(fan_in)

    def bn(c):
        return dict(
            gamma=1.0 + 0.1 * jax.random.normal(next(ks), (c,), jnp.float32),
            beta=0.1 * jax.random.normal(next(ks), (c,), jnp.float32),
            mean=0.1 * jax.random.normal(next(ks), (c,), jnp.float32),
            var=1.0 + 0.1 * jnp.abs(jax.random.normal(next(ks), (c,), jnp.float32)),
        )

    return dict(
        stem_w=conv(16, 3, 3), stem_bn=bn(16),
        l1_w1=conv(16, 16, 3), l1_bn1=bn(16),
        l1_w2=conv(16, 16, 3), l1_bn2=bn(16),
        l2_w1=conv(32, 16, 3), l2_bn1=bn(32),
        l2_w2=conv(32, 32, 3), l2_bn2=bn(32),
        l2_dw=conv(32, 16, 1), l2_dbn=bn(32),
        fc_w=jax.random.normal(next(ks), (TARGET_SIZE, 32), jnp.float32) / jnp.sqrt(32.0),
        fc_b=0.1 * jax.random.normal(next(ks), (TARGET_SIZE,), jnp.float32),
    )


def reference_forward(x_nchw, params):
    def conv_bn(x, wgt, bn, stride, pad, relu, residual=None):
        y = jax.lax.conv_general_dilated(
            x, wgt, (stride, stride), [(pad, pad), (pad, pad)],
            dimension_numbers=("NCHW", "OIHW", "NCHW"),
            precision=jax.lax.Precision.HIGHEST)
        scale = bn["gamma"] / jnp.sqrt(bn["var"] + BN_EPS)
        bias = bn["beta"] - bn["mean"] * scale
        y = y * scale[None, :, None, None] + bias[None, :, None, None]
        if residual is not None:
            y = y + residual
        return jnp.maximum(y, 0.0) if relu else y

    x = x_nchw.astype(jnp.float32)
    x = conv_bn(x, params["stem_w"], params["stem_bn"], 1, 1, True)
    n, c, h, w = x.shape
    x = x.reshape(n, c, h // 2, 2, w // 2, 2).max(axis=(3, 5))          # maxpool 2x2
    y = conv_bn(x, params["l1_w1"], params["l1_bn1"], 1, 1, True)
    x = conv_bn(y, params["l1_w2"], params["l1_bn2"], 1, 1, True, residual=x)
    d = conv_bn(x, params["l2_dw"], params["l2_dbn"], 2, 0, False)
    y = conv_bn(x, params["l2_w1"], params["l2_bn1"], 2, 1, True)
    x = conv_bn(y, params["l2_w2"], params["l2_bn2"], 1, 1, True, residual=d)
    feat = x.mean(axis=(2, 3))
    return feat @ params["fc_w"].T + params["fc_b"]


# --------------------------------------------------------------------------------------
if __name__ == "__main__":
    key = jax.random.PRNGKey(0)
    kx, kp = jax.random.split(key)

    x = jax.random.normal(kx, (2, 3, 16, 16), jnp.float32)   # NCHW, like the PyTorch input
    params = init_params(kp)

    forward = make_pallas_forward(params, x.shape)
    out = jax.block_until_ready(forward(x))

    ref = jax.block_until_ready(reference_forward(x, params))
    assert out.shape == (2, TARGET_SIZE)
    assert jnp.allclose(out, ref, atol=1e-2, rtol=1e-2), (out, ref)

    print("KERNEL_OK")
</pallas_src>

<mosaic_0001>
module attributes {stable_mosaic.version = 11 : i64} {
  func.func @_resnet_kernel(%arg0: memref<32x48xf32, #tpu.memory_space<vmem>>, %arg1: memref<3x32x32xf32, #tpu.memory_space<vmem>>, %arg2: memref<3x48x256xf32, #tpu.memory_space<vmem>>, %arg3: memref<1x256xf32, #tpu.memory_space<vmem>>, %arg4: memref<16x32xf32, #tpu.memory_space<vmem>>, %arg5: memref<16x32xf32, #tpu.memory_space<vmem>>, %arg6: memref<256x128xf32, #tpu.memory_space<vmem>>, %arg7: memref<256x128xf32, #tpu.memory_space<vmem>>, %arg8: memref<3x16x16xf32, #tpu.memory_space<vmem>>, %arg9: memref<3x128x128xf32, #tpu.memory_space<vmem>>, %arg10: memref<1x128xf32, #tpu.memory_space<vmem>>, %arg11: memref<3x16x16xf32, #tpu.memory_space<vmem>>, %arg12: memref<3x128x128xf32, #tpu.memory_space<vmem>>, %arg13: memref<1x128xf32, #tpu.memory_space<vmem>>, %arg14: memref<1x8x16xf32, #tpu.memory_space<vmem>>, %arg15: memref<1x128x128xf32, #tpu.memory_space<vmem>>, %arg16: memref<1x128xf32, #tpu.memory_space<vmem>>, %arg17: memref<3x8x16xf32, #tpu.memory_space<vmem>>, %arg18: memref<3x128x128xf32, #tpu.memory_space<vmem>>, %arg19: memref<1x128xf32, #tpu.memory_space<vmem>>, %arg20: memref<3x8x8xf32, #tpu.memory_space<vmem>>, %arg21: memref<3x128x128xf32, #tpu.memory_space<vmem>>, %arg22: memref<1x128xf32, #tpu.memory_space<vmem>>, %arg23: memref<2x8xf32, #tpu.memory_space<vmem>>, %arg24: memref<128x5xf32, #tpu.memory_space<vmem>>, %arg25: memref<1x5xf32, #tpu.memory_space<vmem>>, %arg26: memref<2x5xf32, #tpu.memory_space<vmem>>) attributes {dimension_semantics = [], scalar_prefetch = 0 : i64, scratch_operands = 0 : i64, tpu.core_type = #tpu.core_type<tc>} {
    %c0 = arith.constant 0 : index
    %c0_0 = arith.constant 0 : index
    %0 = vector.load %arg0[%c0, %c0_0] : memref<32x48xf32, #tpu.memory_space<vmem>>, vector<32x48xf32>
    %c0_1 = arith.constant 0 : index
    %c0_2 = arith.constant 0 : index
    %c0_3 = arith.constant 0 : index
    %1 = vector.load %arg1[%c0_1, %c0_2, %c0_3] : memref<3x32x32xf32, #tpu.memory_space<vmem>>, vector<1x32x32xf32>
    %2 = vector.shape_cast %1 : vector<1x32x32xf32> to vector<32x32xf32>
    %cst = arith.constant dense<0.000000e+00> : vector<32x48xf32>
    %3 = tpu.matmul %2, %0, %cst {dimension_numbers = #tpu.dot_dimension_numbers<[1], [0], [0], [1], [0, 0, 1, 1], [], []>} : vector<32x32xf32>, vector<32x48xf32>, vector<32x48xf32> -> vector<32x48xf32>
    %c0_4 = arith.constant 0 : index
    %c0_5 = arith.constant 0 : index
    %c0_6 = arith.constant 0 : index
    %4 = vector.load %arg2[%c0_4, %c0_5, %c0_6] : memref<3x48x256xf32, #tpu.memory_space<vmem>>, vector<1x48x256xf32>
    %5 = vector.shape_cast %4 : vector<1x48x256xf32> to vector<48x256xf32>
    %cst_7 = arith.constant dense<0.000000e+00> : vector<32x256xf32>
    %6 = tpu.matmul %3, %5, %cst_7 {dimension_numbers = #tpu.dot_dimension_numbers<[1], [0], [0], [1], [0, 0, 1, 1], [], []>} : vector<32x48xf32>, vector<48x256xf32>, vector<32x256xf32> -> vector<32x256xf32>
    %c1 = arith.constant 1 : index
    %c0_8 = arith.constant 0 : index
    %c0_9 = arith.constant 0 : index
    %7 = vector.load %arg1[%c1, %c0_8, %c0_9] : memref<3x32x32xf32, #tpu.memory_space<vmem>>, vector<1x32x32xf32>
    %8 = vector.shape_cast %7 : vector<1x32x32xf32> to vector<32x32xf32>
    %cst_10 = arith.constant dense<0.000000e+00> : vector<32x48xf32>
    %9 = tpu.matmul %8, %0, %cst_10 {dimension_numbers = #tpu.dot_dimension_numbers<[1], [0], [0], [1], [0, 0, 1, 1], [], []>} : vector<32x32xf32>, vector<32x48xf32>, vector<32x48xf32> -> vector<32x48xf32>
    %c1_11 = arith.constant 1 : index
    %c0_12 = arith.constant 0 : index
    %c0_13 = arith.constant 0 : index
    %10 = vector.load %arg2[%c1_11, %c0_12, %c0_13] : memref<3x48x256xf32, #tpu.memory_space<vmem>>, vector<1x48x256xf32>
    %11 = vector.shape_cast %10 : vector<1x48x256xf32> to vector<48x256xf32>
    %cst_14 = arith.constant dense<0.000000e+00> : vector<32x256xf32>
    %12 = tpu.matmul %9, %11, %cst_14 {dimension_numbers = #tpu.dot_dimension_numbers<[1], [0], [0], [1], [0, 0, 1, 1], [], []>} : vector<32x48xf32>, vector<48x256xf32>, vector<32x256xf32> -> vector<32x256xf32>
    %13 = arith.addf %6, %12 : vector<32x256xf32>
    %c2 = arith.constant 2 : index
    %c0_15 = arith.constant 0 : index
    %c0_16 = arith.constant 0 : index
    %14 = vector.load %arg1[%c2, %c0_15, %c0_16] : memref<3x32x32xf32, #tpu.memory_space<vmem>>, vector<1x32x32xf32>
    %15 = vector.shape_cast %14 : vector<1x32x32xf32> to vector<32x32xf32>
    %cst_17 = arith.constant dense<0.000000e+00> : vector<32x48xf32>
    %16 = tpu.matmul %15, %0, %cst_17 {dimension_numbers = #tpu.dot_dimension_numbers<[1], [0], [0], [1], [0, 0, 1, 1], [], []>} : vector<32x32xf32>, vector<32x48xf32>, vector<32x48xf32> -> vector<32x48xf32>
    %c2_18 = arith.constant 2 : index
    %c0_19 = arith.constant 0 : index
    %c0_20 = arith.constant 0 : index
    %17 = vector.load %arg2[%c2_18, %c0_19, %c0_20] : memref<3x48x256xf32, #tpu.memory_space<vmem>>, vector<1x48x256xf32>
    %18 = vector.shape_cast %17 : vector<1x48x256xf32> to vector<48x256xf32>
    %cst_21 = arith.constant dense<0.000000e+00> : vector<32x256xf32>
    %19 = tpu.matmul %16, %18, %cst_21 {dimension_numbers = #tpu.dot_dimension_numbers<[1], [0], [0], [1], [0, 0, 1, 1], [], []>} : vector<32x48xf32>, vector<48x256xf32>, vector<32x256xf32> -> vector<32x256xf32>
    %20 = arith.addf %13, %19 : vector<32x256xf32>
    %c0_22 = arith.constant 0 : index
    %c0_23 = arith.constant 0 : index
    %21 = vector.load %arg3[%c0_22, %c0_23] : memref<1x256xf32, #tpu.memory_space<vmem>>, vector<1x256xf32>
    %22 = vector.broadcast %21 : vector<1x256xf32> to vector<32x256xf32>
    %23 = arith.addf %20, %22 : vector<32x256xf32>
    %cst_24 = arith.constant 0.000000e+00 : f32
    %24 = vector.broadcast %cst_24 : f32 to vector<32x256xf32>
    %25 = arith.maximumf %23, %24 : vector<32x256xf32>
    %c0_25 = arith.constant 0 : index
    %c0_26 = arith.constant 0 : index
    %26 = vector.load %arg4[%c0_25, %c0_26] : memref<16x32xf32, #tpu.memory_space<vmem>>, vector<16x32xf32>
    %cst_27 = arith.constant dense<0.000000e+00> : vector<16x256xf32>
    %27 = tpu.matmul %26, %25, %cst_27 {dimension_numbers = #tpu.dot_dimension_numbers<[1], [0], [0], [1], [0, 0, 1, 1], [], []>} : vector<16x32xf32>, vector<32x256xf32>, vector<16x256xf32> -> vector<16x256xf32>
    %c0_28 = arith.constant 0 : index
    %c0_29 = arith.constant 0 : index
    %28 = vector.load %arg5[%c0_28, %c0_29] : memref<16x32xf32, #tpu.memory_space<vmem>>, vector<16x32xf32>
    %cst_30 = arith.constant dense<0.000000e+00> : vector<16x256xf32>
    %29 = tpu.matmul %28, %25, %cst_30 {dimension_numbers = #tpu.dot_dimension_numbers<[1], [0], [0], [1], [0, 0, 1, 1], [], []>} : vector<16x32xf32>, vector<32x256xf32>, vector<16x256xf32> -> vector<16x256xf32>
    %c0_31 = arith.constant 0 : index
    %c0_32 = arith.constant 0 : index
    %30 = vector.load %arg6[%c0_31, %c0_32] : memref<256x128xf32, #tpu.memory_space<vmem>>, vector<256x128xf32>
    %cst_33 = arith.constant dense<0.000000e+00> : vector<16x128xf32>
    %31 = tpu.matmul %27, %30, %cst_33 {dimension_numbers = #tpu.dot_dimension_numbers<[1], [0], [0], [1], [0, 0, 1, 1], [], []>} : vector<16x256xf32>, vector<256x128xf32>, vector<16x128xf32> -> vector<16x128xf32>
    %c0_34 = arith.constant 0 : index
    %c0_35 = arith.constant 0 : index
    %32 = vector.load %arg7[%c0_34, %c0_35] : memref<256x128xf32, #tpu.memory_space<vmem>>, vector<256x128xf32>
    %cst_36 = arith.constant dense<0.000000e+00> : vector<16x128xf32>
    %33 = tpu.matmul %27, %32, %cst_36 {dimension_numbers = #tpu.dot_dimension_numbers<[1], [0], [0], [1], [0, 0, 1, 1], [], []>} : vector<16x256xf32>, vector<256x128xf32>, vector<16x128xf32> -> vector<16x128xf32>
    %34 = arith.maximumf %31, %33 : vector<16x128xf32>
    %c0_37 = arith.constant 0 : index
    %c0_38 = arith.constant 0 : index
    %35 = vector.load %arg6[%c0_37, %c0_38] : memref<256x128xf32, #tpu.memory_space<vmem>>, vector<256x128xf32>
    %cst_39 = arith.constant dense<0.000000e+00> : vector<16x128xf32>
    %36 = tpu.matmul %29, %35, %cst_39 {dimension_numbers = #tpu.dot_dimension_numbers<[1], [0], [0], [1], [0, 0, 1, 1], [], []>} : vector<16x256xf32>, vector<256x128xf32>, vector<16x128xf32> -> vector<16x128xf32>
    %c0_40 = arith.constant 0 : index
    %c0_41 = arith.constant 0 : index
    %37 = vector.load %arg7[%c0_40, %c0_41] : memref<256x128xf32, #tpu.memory_space<vmem>>, vector<256x128xf32>
    %cst_42 = arith.constant dense<0.000000e+00> : vector<16x128xf32>
    %38 = tpu.matmul %29, %37, %cst_42 {dimension_numbers = #tpu.dot_dimension_numbers<[1], [0], [0], [1], [0, 0, 1, 1], [], []>} : vector<16x256xf32>, vector<256x128xf32>, vector<16x128xf32> -> vector<16x128xf32>
    %39 = arith.maximumf %36, %38 : vector<16x128xf32>
    %40 = arith.maximumf %34, %39 : vector<16x128xf32>
    %c0_43 = arith.constant 0 : index
    %c0_44 = arith.constant 0 : index
    %c0_45 = arith.constant 0 : index
    %41 = vector.load %arg8[%c0_43, %c0_44, %c0_45] : memref<3x16x16xf32, #tpu.memory_space<vmem>>, vector<1x16x16xf32>
    %42 = vector.shape_cast %41 : vector<1x16x16xf32> to vector<16x16xf32>
    %cst_46 = arith.constant dense<0.000000e+00> : vector<16x128xf32>
    %43 = tpu.matmul %42, %40, %cst_46 {dimension_numbers = #tpu.dot_dimension_numbers<[1], [0], [0], [1], [0, 0, 1, 1], [], []>} : vector<16x16xf32>, vector<16x128xf32>, vector<16x128xf32> -> vector<16x128xf32>
    %c0_47 = arith.constant 0 : index
    %c0_48 = arith.constant 0 : index
    %c0_49 = arith.constant 0 : index
    %44 = vector.load %arg9[%c0_47, %c0_48, %c0_49] : memref<3x128x128xf32, #tpu.memory_space<vmem>>, vector<1x128x128xf32>
    %45 = vector.shape_cast %44 : vector<1x128x128xf32> to vector<128x128xf32>
    %cst_50 = arith.constant dense<0.000000e+00> : vector<16x128xf32>
    %46 = tpu.matmul %43, %45, %cst_50 {dimension_numbers = #tpu.dot_dimension_numbers<[1], [0], [0], [1], [0, 0, 1, 1], [], []>} : vector<16x128xf32>, vector<128x128xf32>, vector<16x128xf32> -> vector<16x128xf32>
    %c1_51 = arith.constant 1 : index
    %c0_52 = arith.constant 0 : index
    %c0_53 = arith.constant 0 : index
    %47 = vector.load %arg8[%c1_51, %c0_52, %c0_53] : memref<3x16x16xf32, #tpu.memory_space<vmem>>, vector<1x16x16xf32>
    %48 = vector.shape_cast %47 : vector<1x16x16xf32> to vector<16x16xf32>
    %cst_54 = arith.constant dense<0.000000e+00> : vector<16x128xf32>
    %49 = tpu.matmul %48, %40, %cst_54 {dimension_numbers = #tpu.dot_dimension_numbers<[1], [0], [0], [1], [0, 0, 1, 1], [], []>} : vector<16x16xf32>, vector<16x128xf32>, vector<16x128xf32> -> vector<16x128xf32>
    %c1_55 = arith.constant 1 : index
    %c0_56 = arith.constant 0 : index
    %c0_57 = arith.constant 0 : index
    %50 = vector.load %arg9[%c1_55, %c0_56, %c0_57] : memref<3x128x128xf32, #tpu.memory_space<vmem>>, vector<1x128x128xf32>
    %51 = vector.shape_cast %50 : vector<1x128x128xf32> to vector<128x128xf32>
    %cst_58 = arith.constant dense<0.000000e+00> : vector<16x128xf32>
    %52 = tpu.matmul %49, %51, %cst_58 {dimension_numbers = #tpu.dot_dimension_numbers<[1], [0], [0], [1], [0, 0, 1, 1], [], []>} : vector<16x128xf32>, vector<128x128xf32>, vector<16x128xf32> -> vector<16x128xf32>
    %53 = arith.addf %46, %52 : vector<16x128xf32>
    %c2_59 = arith.constant 2 : index
    %c0_60 = arith.constant 0 : index
    %c0_61 = arith.constant 0 : index
    %54 = vector.load %arg8[%c2_59, %c0_60, %c0_61] : memref<3x16x16xf32, #tpu.memory_space<vmem>>, vector<1x16x16xf32>
    %55 = vector.shape_cast %54 : vector<1x16x16xf32> to vector<16x16xf32>
    %cst_62 = arith.constant dense<0.000000e+00> : vector<16x128xf32>
    %56 = tpu.matmul %55, %40, %cst_62 {dimension_numbers = #tpu.dot_dimension_numbers<[1], [0], [0], [1], [0, 0, 1, 1], [], []>} : vector<16x16xf32>, vector<16x128xf32>, vector<16x128xf32> -> vector<16x128xf32>
    %c2_63 = arith.constant 2 : index
    %c0_64 = arith.constant 0 : index
    %c0_65 = arith.constant 0 : index
    %57 = vector.load %arg9[%c2_63, %c0_64, %c0_65] : memref<3x128x128xf32, #tpu.memory_space<vmem>>, vector<1x128x128xf32>
    %58 = vector.shape_cast %57 : vector<1x128x128xf32> to vector<128x128xf32>
    %cst_66 = arith.constant dense<0.000000e+00> : vector<16x128xf32>
    %59 = tpu.matmul %56, %58, %cst_66 {dimension_numbers = #tpu.dot_dimension_numbers<[1], [0], [0], [1], [0, 0, 1, 1], [], []>} : vector<16x128xf32>, vector<128x128xf32>, vector<16x128xf32> -> vector<16x128xf32>
    %60 = arith.addf %53, %59 : vector<16x128xf32>
    %c0_67 = arith.constant 0 : index
    %c0_68 = arith.constant 0 : index
    %61 = vector.load %arg10[%c0_67, %c0_68] : memref<1x128xf32, #tpu.memory_space<vmem>>, vector<1x128xf32>
    %62 = vector.broadcast %61 : vector<1x128xf32> to vector<16x128xf32>
    %63 = arith.addf %60, %62 : vector<16x128xf32>
    %cst_69 = arith.constant 0.000000e+00 : f32
    %64 = vector.broadcast %cst_69 : f32 to vector<16x128xf32>
    %65 = arith.maximumf %63, %64 : vector<16x128xf32>
    %c0_70 = arith.constant 0 : index
    %c0_71 = arith.constant 0 : index
    %c0_72 = arith.constant 0 : index
    %66 = vector.load %arg11[%c0_70, %c0_71, %c0_72] : memref<3x16x16xf32, #tpu.memory_space<vmem>>, vector<1x16x16xf32>
    %67 = vector.shape_cast %66 : vector<1x16x16xf32> to vector<16x16xf32>
    %cst_73 = arith.constant dense<0.000000e+00> : vector<16x128xf32>
    %68 = tpu.matmul %67, %65, %cst_73 {dimension_numbers = #tpu.dot_dimension_numbers<[1], [0], [0], [1], [0, 0, 1, 1], [], []>} : vector<16x16xf32>, vector<16x128xf32>, vector<16x128xf32> -> vector<16x128xf32>
    %c0_74 = arith.constant 0 : index
    %c0_75 = arith.constant 0 : index
    %c0_76 = arith.constant 0 : index
    %69 = vector.load %arg12[%c0_74, %c0_75, %c0_76] : memref<3x128x128xf32, #tpu.memory_space<vmem>>, vector<1x128x128xf32>
    %70 = vector.shape_cast %69 : vector<1x128x128xf32> to vector<128x128xf32>
    %cst_77 = arith.constant dense<0.000000e+00> : vector<16x128xf32>
    %71 = tpu.matmul %68, %70, %cst_77 {dimension_numbers = #tpu.dot_dimension_numbers<[1], [0], [0], [1], [0, 0, 1, 1], [], []>} : vector<16x128xf32>, vector<128x128xf32>, vector<16x128xf32> -> vector<16x128xf32>
    %c1_78 = arith.constant 1 : index
    %c0_79 = arith.constant 0 : index
    %c0_80 = arith.constant 0 : index
    %72 = vector.load %arg11[%c1_78, %c0_79, %c0_80] : memref<3x16x16xf32, #tpu.memory_space<vmem>>, vector<1x16x16xf32>
    %73 = vector.shape_cast %72 : vector<1x16x16xf32> to vector<16x16xf32>
    %cst_81 = arith.constant dense<0.000000e+00> : vector<16x128xf32>
    %74 = tpu.matmul %73, %65, %cst_81 {dimension_numbers = #tpu.dot_dimension_numbers<[1], [0], [0], [1], [0, 0, 1, 1], [], []>} : vector<16x16xf32>, vector<16x128xf32>, vector<16x128xf32> -> vector<16x128xf32>
    %c1_82 = arith.constant 1 : index
    %c0_83 = arith.constant 0 : index
    %c0_84 = arith.constant 0 : index
    %75 = vector.load %arg12[%c1_82, %c0_83, %c0_84] : memref<3x128x128xf32, #tpu.memory_space<vmem>>, vector<1x128x128xf32>
    %76 = vector.shape_cast %75 : vector<1x128x128xf32> to vector<128x128xf32>
    %cst_85 = arith.constant dense<0.000000e+00> : vector<16x128xf32>
    %77 = tpu.matmul %74, %76, %cst_85 {dimension_numbers = #tpu.dot_dimension_numbers<[1], [0], [0], [1], [0, 0, 1, 1], [], []>} : vector<16x128xf32>, vector<128x128xf32>, vector<16x128xf32> -> vector<16x128xf32>
    %78 = arith.addf %71, %77 : vector<16x128xf32>
    %c2_86 = arith.constant 2 : index
    %c0_87 = arith.constant 0 : index
    %c0_88 = arith.constant 0 : index
    %79 = vector.load %arg11[%c2_86, %c0_87, %c0_88] : memref<3x16x16xf32, #tpu.memory_space<vmem>>, vector<1x16x16xf32>
    %80 = vector.shape_cast %79 : vector<1x16x16xf32> to vector<16x16xf32>
    %cst_89 = arith.constant dense<0.000000e+00> : vector<16x128xf32>
    %81 = tpu.matmul %80, %65, %cst_89 {dimension_numbers = #tpu.dot_dimension_numbers<[1], [0], [0], [1], [0, 0, 1, 1], [], []>} : vector<16x16xf32>, vector<16x128xf32>, vector<16x128xf32> -> vector<16x128xf32>
    %c2_90 = arith.constant 2 : index
    %c0_91 = arith.constant 0 : index
    %c0_92 = arith.constant 0 : index
    %82 = vector.load %arg12[%c2_90, %c0_91, %c0_92] : memref<3x128x128xf32, #tpu.memory_space<vmem>>, vector<1x128x128xf32>
    %83 = vector.shape_cast %82 : vector<1x128x128xf32> to vector<128x128xf32>
    %cst_93 = arith.constant dense<0.000000e+00> : vector<16x128xf32>
    %84 = tpu.matmul %81, %83, %cst_93 {dimension_numbers = #tpu.dot_dimension_numbers<[1], [0], [0], [1], [0, 0, 1, 1], [], []>} : vector<16x128xf32>, vector<128x128xf32>, vector<16x128xf32> -> vector<16x128xf32>
    %85 = arith.addf %78, %84 : vector<16x128xf32>
    %c0_94 = arith.constant 0 : index
    %c0_95 = arith.constant 0 : index
    %86 = vector.load %arg13[%c0_94, %c0_95] : memref<1x128xf32, #tpu.memory_space<vmem>>, vector<1x128xf32>
    %87 = vector.broadcast %86 : vector<1x128xf32> to vector<16x128xf32>
    %88 = arith.addf %85, %87 : vector<16x128xf32>
    %89 = arith.addf %88, %40 : vector<16x128xf32>
    %cst_96 = arith.constant 0.000000e+00 : f32
    %90 = vector.broadcast %cst_96 : f32 to vector<16x128xf32>
    %91 = arith.maximumf %89, %90 : vector<16x128xf32>
    %c0_97 = arith.constant 0 : index
    %c0_98 = arith.constant 0 : index
    %c0_99 = arith.constant 0 : index
    %92 = vector.load %arg14[%c0_97, %c0_98, %c0_99] : memref<1x8x16xf32, #tpu.memory_space<vmem>>, vector<1x8x16xf32>
    %93 = vector.shape_cast %92 : vector<1x8x16xf32> to vector<8x16xf32>
    %cst_100 = arith.constant dense<0.000000e+00> : vector<8x128xf32>
    %94 = tpu.matmul %93, %91, %cst_100 {dimension_numbers = #tpu.dot_dimension_numbers<[1], [0], [0], [1], [0, 0, 1, 1], [], []>} : vector<8x16xf32>, vector<16x128xf32>, vector<8x128xf32> -> vector<8x128xf32>
    %c0_101 = arith.constant 0 : index
    %c0_102 = arith.constant 0 : index
    %c0_103 = arith.constant 0 : index
    %95 = vector.load %arg15[%c0_101, %c0_102, %c0_103] : memref<1x128x128xf32, #tpu.memory_space<vmem>>, vector<1x128x128xf32>
    %96 = vector.shape_cast %95 : vector<1x128x128xf32> to vector<128x128xf32>
    %cst_104 = arith.constant dense<0.000000e+00> : vector<8x128xf32>
    %97 = tpu.matmul %94, %96, %cst_104 {dimension_numbers = #tpu.dot_dimension_numbers<[1], [0], [0], [1], [0, 0, 1, 1], [], []>} : vector<8x128xf32>, vector<128x128xf32>, vector<8x128xf32> -> vector<8x128xf32>
    %c0_105 = arith.constant 0 : index
    %c0_106 = arith.constant 0 : index
    %98 = vector.load %arg16[%c0_105, %c0_106] : memref<1x128xf32, #tpu.memory_space<vmem>>, vector<1x128xf32>
    %99 = vector.broadcast %98 : vector<1x128xf32> to vector<8x128xf32>
    %100 = arith.addf %97, %99 : vector<8x128xf32>
    %c0_107 = arith.constant 0 : index
    %c0_108 = arith.constant 0 : index
    %c0_109 = arith.constant 0 : index
    %101 = vector.load %arg17[%c0_107, %c0_108, %c0_109] : memref<3x8x16xf32, #tpu.memory_space<vmem>>, vector<1x8x16xf32>
    %102 = vector.shape_cast %101 : vector<1x8x16xf32> to vector<8x16xf32>
    %cst_110 = arith.constant dense<0.000000e+00> : vector<8x128xf32>
    %103 = tpu.matmul %102, %91, %cst_110 {dimension_numbers = #tpu.dot_dimension_numbers<[1], [0], [0], [1], [0, 0, 1, 1], [], []>} : vector<8x16xf32>, vector<16x128xf32>, vector<8x128xf32> -> vector<8x128xf32>
    %c0_111 = arith.constant 0 : index
    %c0_112 = arith.constant 0 : index
    %c0_113 = arith.constant 0 : index
    %104 = vector.load %arg18[%c0_111, %c0_112, %c0_113] : memref<3x128x128xf32, #tpu.memory_space<vmem>>, vector<1x128x128xf32>
    %105 = vector.shape_cast %104 : vector<1x128x128xf32> to vector<128x128xf32>
    %cst_114 = arith.constant dense<0.000000e+00> : vector<8x128xf32>
    %106 = tpu.matmul %103, %105, %cst_114 {dimension_numbers = #tpu.dot_dimension_numbers<[1], [0], [0], [1], [0, 0, 1, 1], [], []>} : vector<8x128xf32>, vector<128x128xf32>, vector<8x128xf32> -> vector<8x128xf32>
    %c1_115 = arith.constant 1 : index
    %c0_116 = arith.constant 0 : index
    %c0_117 = arith.constant 0 : index
    %107 = vector.load %arg17[%c1_115, %c0_116, %c0_117] : memref<3x8x16xf32, #tpu.memory_space<vmem>>, vector<1x8x16xf32>
    %108 = vector.shape_cast %107 : vector<1x8x16xf32> to vector<8x16xf32>
    %cst_118 = arith.constant dense<0.000000e+00> : vector<8x128xf32>
    %109 = tpu.matmul %108, %91, %cst_118 {dimension_numbers = #tpu.dot_dimension_numbers<[1], [0], [0], [1], [0, 0, 1, 1], [], []>} : vector<8x16xf32>, vector<16x128xf32>, vector<8x128xf32> -> vector<8x128xf32>
    %c1_119 = arith.constant 1 : index
    %c0_120 = arith.constant 0 : index
    %c0_121 = arith.constant 0 : index
    %110 = vector.load %arg18[%c1_119, %c0_120, %c0_121] : memref<3x128x128xf32, #tpu.memory_space<vmem>>, vector<1x128x128xf32>
    %111 = vector.shape_cast %110 : vector<1x128x128xf32> to vector<128x128xf32>
    %cst_122 = arith.constant dense<0.000000e+00> : vector<8x128xf32>
    %112 = tpu.matmul %109, %111, %cst_122 {dimension_numbers = #tpu.dot_dimension_numbers<[1], [0], [0], [1], [0, 0, 1, 1], [], []>} : vector<8x128xf32>, vector<128x128xf32>, vector<8x128xf32> -> vector<8x128xf32>
    %113 = arith.addf %106, %112 : vector<8x128xf32>
    %c2_123 = arith.constant 2 : index
    %c0_124 = arith.constant 0 : index
    %c0_125 = arith.constant 0 : index
    %114 = vector.load %arg17[%c2_123, %c0_124, %c0_125] : memref<3x8x16xf32, #tpu.memory_space<vmem>>, vector<1x8x16xf32>
    %115 = vector.shape_cast %114 : vector<1x8x16xf32> to vector<8x16xf32>
    %cst_126 = arith.constant dense<0.000000e+00> : vector<8x128xf32>
    %116 = tpu.matmul %115, %91, %cst_126 {dimension_numbers = #tpu.dot_dimension_numbers<[1], [0], [0], [1], [0, 0, 1, 1], [], []>} : vector<8x16xf32>, vector<16x128xf32>, vector<8x128xf32> -> vector<8x128xf32>
    %c2_127 = arith.constant 2 : index
    %c0_128 = arith.constant 0 : index
    %c0_129 = arith.constant 0 : index
    %117 = vector.load %arg18[%c2_127, %c0_128, %c0_129] : memref<3x128x128xf32, #tpu.memory_space<vmem>>, vector<1x128x128xf32>
    %118 = vector.shape_cast %117 : vector<1x128x128xf32> to vector<128x128xf32>
    %cst_130 = arith.constant dense<0.000000e+00> : vector<8x128xf32>
    %119 = tpu.matmul %116, %118, %cst_130 {dimension_numbers = #tpu.dot_dimension_numbers<[1], [0], [0], [1], [0, 0, 1, 1], [], []>} : vector<8x128xf32>, vector<128x128xf32>, vector<8x128xf32> -> vector<8x128xf32>
    %120 = arith.addf %113, %119 : vector<8x128xf32>
    %c0_131 = arith.constant 0 : index
    %c0_132 = arith.constant 0 : index
    %121 = vector.load %arg19[%c0_131, %c0_132] : memref<1x128xf32, #tpu.memory_space<vmem>>, vector<1x128xf32>
    %122 = vector.broadcast %121 : vector<1x128xf32> to vector<8x128xf32>
    %123 = arith.addf %120, %122 : vector<8x128xf32>
    %cst_133 = arith.constant 0.000000e+00 : f32
    %124 = vector.broadcast %cst_133 : f32 to vector<8x128xf32>
    %125 = arith.maximumf %123, %124 : vector<8x128xf32>
    %c0_134 = arith.constant 0 : index
    %c0_135 = arith.constant 0 : index
    %c0_136 = arith.constant 0 : index
    %126 = vector.load %arg20[%c0_134, %c0_135, %c0_136] : memref<3x8x8xf32, #tpu.memory_space<vmem>>, vector<1x8x8xf32>
    %127 = vector.shape_cast %126 : vector<1x8x8xf32> to vector<8x8xf32>
    %cst_137 = arith.constant dense<0.000000e+00> : vector<8x128xf32>
    %128 = tpu.matmul %127, %125, %cst_137 {dimension_numbers = #tpu.dot_dimension_numbers<[1], [0], [0], [1], [0, 0, 1, 1], [], []>} : vector<8x8xf32>, vector<8x128xf32>, vector<8x128xf32> -> vector<8x128xf32>
    %c0_138 = arith.constant 0 : index
    %c0_139 = arith.constant 0 : index
    %c0_140 = arith.constant 0 : index
    %129 = vector.load %arg21[%c0_138, %c0_139, %c0_140] : memref<3x128x128xf32, #tpu.memory_space<vmem>>, vector<1x128x128xf32>
    %130 = vector.shape_cast %129 : vector<1x128x128xf32> to vector<128x128xf32>
    %cst_141 = arith.constant dense<0.000000e+00> : vector<8x128xf32>
    %131 = tpu.matmul %128, %130, %cst_141 {dimension_numbers = #tpu.dot_dimension_numbers<[1], [0], [0], [1], [0, 0, 1, 1], [], []>} : vector<8x128xf32>, vector<128x128xf32>, vector<8x128xf32> -> vector<8x128xf32>
    %c1_142 = arith.constant 1 : index
    %c0_143 = arith.constant 0 : index
    %c0_144 = arith.constant 0 : index
    %132 = vector.load %arg20[%c1_142, %c0_143, %c0_144] : memref<3x8x8xf32, #tpu.memory_space<vmem>>, vector<1x8x8xf32>
    %133 = vector.shape_cast %132 : vector<1x8x8xf32> to vector<8x8xf32>
    %cst_145 = arith.constant dense<0.000000e+00> : vector<8x128xf32>
    %134 = tpu.matmul %133, %125, %cst_145 {dimension_numbers = #tpu.dot_dimension_numbers<[1], [0], [0], [1], [0, 0, 1, 1], [], []>} : vector<8x8xf32>, vector<8x128xf32>, vector<8x128xf32> -> vector<8x128xf32>
    %c1_146 = arith.constant 1 : index
    %c0_147 = arith.constant 0 : index
    %c0_148 = arith.constant 0 : index
    %135 = vector.load %arg21[%c1_146, %c0_147, %c0_148] : memref<3x128x128xf32, #tpu.memory_space<vmem>>, vector<1x128x128xf32>
    %136 = vector.shape_cast %135 : vector<1x128x128xf32> to vector<128x128xf32>
    %cst_149 = arith.constant dense<0.000000e+00> : vector<8x128xf32>
    %137 = tpu.matmul %134, %136, %cst_149 {dimension_numbers = #tpu.dot_dimension_numbers<[1], [0], [0], [1], [0, 0, 1, 1], [], []>} : vector<8x128xf32>, vector<128x128xf32>, vector<8x128xf32> -> vector<8x128xf32>
    %138 = arith.addf %131, %137 : vector<8x128xf32>
    %c2_150 = arith.constant 2 : index
    %c0_151 = arith.constant 0 : index
    %c0_152 = arith.constant 0 : index
    %139 = vector.load %arg20[%c2_150, %c0_151, %c0_152] : memref<3x8x8xf32, #tpu.memory_space<vmem>>, vector<1x8x8xf32>
    %140 = vector.shape_cast %139 : vector<1x8x8xf32> to vector<8x8xf32>
    %cst_153 = arith.constant dense<0.000000e+00> : vector<8x128xf32>
    %141 = tpu.matmul %140, %125, %cst_153 {dimension_numbers = #tpu.dot_dimension_numbers<[1], [0], [0], [1], [0, 0, 1, 1], [], []>} : vector<8x8xf32>, vector<8x128xf32>, vector<8x128xf32> -> vector<8x128xf32>
    %c2_154 = arith.constant 2 : index
    %c0_155 = arith.constant 0 : index
    %c0_156 = arith.constant 0 : index
    %142 = vector.load %arg21[%c2_154, %c0_155, %c0_156] : memref<3x128x128xf32, #tpu.memory_space<vmem>>, vector<1x128x128xf32>
    %143 = vector.shape_cast %142 : vector<1x128x128xf32> to vector<128x128xf32>
    %cst_157 = arith.constant dense<0.000000e+00> : vector<8x128xf32>
    %144 = tpu.matmul %141, %143, %cst_157 {dimension_numbers = #tpu.dot_dimension_numbers<[1], [0], [0], [1], [0, 0, 1, 1], [], []>} : vector<8x128xf32>, vector<128x128xf32>, vector<8x128xf32> -> vector<8x128xf32>
    %145 = arith.addf %138, %144 : vector<8x128xf32>
    %c0_158 = arith.constant 0 : index
    %c0_159 = arith.constant 0 : index
    %146 = vector.load %arg22[%c0_158, %c0_159] : memref<1x128xf32, #tpu.memory_space<vmem>>, vector<1x128xf32>
    %147 = vector.broadcast %146 : vector<1x128xf32> to vector<8x128xf32>
    %148 = arith.addf %145, %147 : vector<8x128xf32>
    %149 = arith.addf %148, %100 : vector<8x128xf32>
    %cst_160 = arith.constant 0.000000e+00 : f32
    %150 = vector.broadcast %cst_160 : f32 to vector<8x128xf32>
    %151 = arith.maximumf %149, %150 : vector<8x128xf32>
    %c0_161 = arith.constant 0 : index
    %c0_162 = arith.constant 0 : index
    %152 = vector.load %arg23[%c0_161, %c0_162] : memref<2x8xf32, #tpu.memory_space<vmem>>, vector<2x8xf32>
    %cst_163 = arith.constant dense<0.000000e+00> : vector<2x128xf32>
    %153 = tpu.matmul %152, %151, %cst_163 {dimension_numbers = #tpu.dot_dimension_numbers<[1], [0], [0], [1], [0, 0, 1, 1], [], []>} : vector<2x8xf32>, vector<8x128xf32>, vector<2x128xf32> -> vector<2x128xf32>
    %c0_164 = arith.constant 0 : index
    %c0_165 = arith.constant 0 : index
    %154 = vector.load %arg24[%c0_164, %c0_165] : memref<128x5xf32, #tpu.memory_space<vmem>>, vector<128x5xf32>
    %cst_166 = arith.constant dense<0.000000e+00> : vector<2x5xf32>
    %155 = tpu.matmul %153, %154, %cst_166 {dimension_numbers = #tpu.dot_dimension_numbers<[1], [0], [0], [1], [0, 0, 1, 1], [], []>} : vector<2x128xf32>, vector<128x5xf32>, vector<2x5xf32> -> vector<2x5xf32>
    %c0_167 = arith.constant 0 : index
    %c0_168 = arith.constant 0 : index
    %156 = vector.load %arg25[%c0_167, %c0_168] : memref<1x5xf32, #tpu.memory_space<vmem>>, vector<1x5xf32>
    %157 = vector.broadcast %156 : vector<1x5xf32> to vector<2x5xf32>
    %158 = arith.addf %155, %157 : vector<2x5xf32>
    %c0_169 = arith.constant 0 : index
    %c0_170 = arith.constant 0 : index
    %159 = vector.load %arg26[%c0_169, %c0_170] : memref<2x5xf32, #tpu.memory_space<vmem>>, vector<2x5xf32>
    tpu.vector_store %arg26[%c0_169, %c0_170], %158 {strides = array<i32>} : memref<2x5xf32, #tpu.memory_space<vmem>>, vector<2x5xf32>,
    return
  }
}

</mosaic_0001>

<llo_original>
// kernel: tpu_custom_call.1
$region0: #{tpu_custom_call.1}
  #allocation0 [shape = 'u32[]', space=smem, size = 0x4, offset = 0x4, fixed_abs, tag = 'smem constant byte address 0x4 - core index']
  #allocation1 [shape = 'u32[144,128]{1,0:T(1,128)}', space=vmem, size = 0x12000, scoped, tag = 'internal scratch']
  %s0 = inlined_call_operand.hbm [shape: f32[32,48], index: 0, kind: input, shape index: {}]
  %s1 = inlined_call_operand.hbm [shape: f32[3,32,32], index: 1, kind: input, shape index: {}]
  %s2 = inlined_call_operand.hbm [shape: f32[3,48,256], index: 2, kind: input, shape index: {}]
  %s3 = inlined_call_operand.hbm [shape: f32[1,256], index: 3, kind: input, shape index: {}]
  %s4 = inlined_call_operand.hbm [shape: f32[16,32], index: 4, kind: input, shape index: {}]
  %s5 = inlined_call_operand.hbm [shape: f32[16,32], index: 5, kind: input, shape index: {}]
  %s6 = inlined_call_operand.hbm [shape: f32[256,128], index: 6, kind: input, shape index: {}]
  %s7 = inlined_call_operand.hbm [shape: f32[256,128], index: 7, kind: input, shape index: {}]
  %s8 = inlined_call_operand.vmem [shape: f32[3,16,16], index: 8, kind: input, shape index: {}]
  %s9 = inlined_call_operand.hbm [shape: f32[3,128,128], index: 9, kind: input, shape index: {}]
  %s10 = inlined_call_operand.hbm [shape: f32[1,128], index: 10, kind: input, shape index: {}]
  %s11 = inlined_call_operand.hbm [shape: f32[3,16,16], index: 11, kind: input, shape index: {}]
  %s12 = inlined_call_operand.hbm [shape: f32[3,128,128], index: 12, kind: input, shape index: {}]
  %s13 = inlined_call_operand.hbm [shape: f32[1,128], index: 13, kind: input, shape index: {}]
  %s14 = inlined_call_operand.hbm [shape: f32[1,8,16], index: 14, kind: input, shape index: {}]
  %s15 = inlined_call_operand.vmem [shape: f32[1,128,128], index: 15, kind: input, shape index: {}]
  %s16 = inlined_call_operand.hbm [shape: f32[1,128], index: 16, kind: input, shape index: {}]
  %s17 = inlined_call_operand.vmem [shape: f32[3,8,16], index: 17, kind: input, shape index: {}]
  %s18 = inlined_call_operand.hbm [shape: f32[3,128,128], index: 18, kind: input, shape index: {}]
  %s19 = inlined_call_operand.vmem [shape: f32[1,128], index: 19, kind: input, shape index: {}]
  %s20 = inlined_call_operand.hbm [shape: f32[3,8,8], index: 20, kind: input, shape index: {}]
  %s21 = inlined_call_operand.hbm [shape: f32[3,128,128], index: 21, kind: input, shape index: {}]
  %s22 = inlined_call_operand.vmem [shape: f32[1,128], index: 22, kind: input, shape index: {}]
  %s23 = inlined_call_operand.vmem [shape: f32[2,8], index: 23, kind: input, shape index: {}]
  %s24 = inlined_call_operand.vmem [shape: f32[128,5], index: 24, kind: input, shape index: {}]
  %s25 = inlined_call_operand.vmem [shape: f32[1,5], index: 25, kind: input, shape index: {}]
  %s26 = inlined_call_operand.hbm [shape: f32[2,5], index: 26, kind: output, shape index: {}]
  %s27 = sld [smem:[#allocation0]]
  $region186: #{tpu_custom_call.1} parent=0
    _
  %s29 = ssub.s32 1, %s27
  %s30 = scalar_select 0, %s29, %s27
  $region1: #{tpu_custom_call.1} parent=0
    #allocation2 [shape = 'u8[16384]{0}', space=vmem, size = 0x4000, scoped, tag = 'input window, operand 0, single buffered']
    #allocation3 [shape = 's32[1]{0}', space=sflag, size = 0x4, scoped, tag = 'scoped memory for tpu_custom_call.1']
    #allocation4 [shape = 's32[1]{0}', space=sflag, size = 0x4, scoped, tag = 'scoped memory for tpu_custom_call.1']
    #allocation5 [shape = 'u8[49152]{0}', space=vmem, size = 0xc000, scoped, tag = 'input window, operand 1, single buffered']
    #allocation6 [shape = 's32[1]{0}', space=sflag, size = 0x4, scoped, tag = 'scoped memory for tpu_custom_call.1']
    #allocation7 [shape = 'u8[147456]{0}', space=vmem, size = 0x24000, scoped, tag = 'input window, operand 2, single buffered']
    #allocation8 [shape = 'u8[1024]{0}', space=vmem, size = 0x400, scoped, tag = 'input window, operand 3, single buffered']
    #allocation9 [shape = 's32[1]{0}', space=sflag, size = 0x4, scoped, tag = 'scoped memory for tpu_custom_call.1']
    #allocation10 [shape = 'u8[8192]{0}', space=vmem, size = 0x2000, scoped, tag = 'input window, operand 4, single buffered']
    #allocation11 [shape = 'u8[8192]{0}', space=vmem, size = 0x2000, scoped, tag = 'input window, operand 5, single buffered']
    #allocation12 [shape = 's32[1]{0}', space=sflag, size = 0x4, scoped, tag = 'scoped memory for tpu_custom_call.1']
    #allocation13 [shape = 'u8[131072]{0}', space=vmem, size = 0x20000, scoped, tag = 'input window, operand 6, single buffered']
    #allocation14 [shape = 'u8[131072]{0}', space=vmem, size = 0x20000, scoped, tag = 'input window, operand 7, single buffered']
    #allocation15 [shape = 's32[1]{0}', space=sflag, size = 0x4, scoped, tag = 'scoped memory for tpu_custom_call.1']
    #allocation16 [shape = 'u8[196608]{0}', space=vmem, size = 0x30000, scoped, tag = 'input window, operand 9, single buffered']
    #allocation17 [shape = 'u8[512]{0}', space=vmem, size = 0x400, scoped, tag = 'input window, operand 10, single buffered']
    #allocation18 [shape = 's32[1]{0}', space=sflag, size = 0x4, scoped, tag = 'scoped memory for tpu_custom_call.1']
    #allocation19 [shape = 'u8[24576]{0}', space=vmem, size = 0x6000, scoped, tag = 'input window, operand 11, single buffered']
    #allocation20 [shape = 'u8[196608]{0}', space=vmem, size = 0x30000, scoped, tag = 'input window, operand 12, single buffered']
    #allocation21 [shape = 's32[1]{0}', space=sflag, size = 0x4, scoped, tag = 'scoped memory for tpu_custom_call.1']
    #allocation22 [shape = 'u8[512]{0}', space=vmem, size = 0x400, scoped, tag = 'input window, operand 13, single buffered']
    #allocation23 [shape = 'u8[4096]{0}', space=vmem, size = 0x1000, scoped, tag = 'input window, operand 14, single buffered']
    #allocation24 [shape = 's32[1]{0}', space=sflag, size = 0x4, scoped, tag = 'scoped memory for tpu_custom_call.1']
    #allocation25 [shape = 'u8[512]{0}', space=vmem, size = 0x400, scoped, tag = 'input window, operand 16, single buffered']
    #allocation26 [shape = 'u8[196608]{0}', space=vmem, size = 0x30000, scoped, tag = 'input window, operand 18, single buffered']
    #allocation27 [shape = 's32[1]{0}', space=sflag, size = 0x4, scoped, tag = 'scoped memory for tpu_custom_call.1']
    #allocation28 [shape = 'u8[12288]{0}', space=vmem, size = 0x3000, scoped, tag = 'input window, operand 20, single buffered']
    #allocation29 [shape = 'u8[196608]{0}', space=vmem, size = 0x30000, scoped, tag = 'input window, operand 21, single buffered']
    #allocation30 [shape = 's32[1]{0}', space=sflag, size = 0x4, scoped, tag = 'scoped memory for tpu_custom_call.1']
    #allocation31 [shape = 'u8[1024]{0}', space=vmem, size = 0x400, scoped, tag = 'output window, operand 0, single buffered']
    %31 = vsyncpa [#allocation3], 0
    %32 = vsyncpa [#allocation6], 0
    %33 = vsyncpa [#allocation9], 0
    %34 = vsyncpa [#allocation12], 0
    %35 = vsyncpa [#allocation15], 0
    %36 = vsyncpa [#allocation18], 0
    %37 = vsyncpa [#allocation21], 0
    %38 = vsyncpa [#allocation24], 0
    %39 = vsyncpa [#allocation27], 0
    %40 = vsyncpa [#allocation30], 0
    %41 = vsyncpa [#allocation4], 0
    // Predicated region
    $region2: #{tpu_custom_call.1} parent=1 // pred_check
      _
    $region3: #{tpu_custom_call.1} parent=1 // pred_check_branch
      %43 = sbr.rel (0) target = $region5
    $region4: #{tpu_custom_call.1} parent=1 // pred_region
      %s45 = ssub.s32 512, 512
      %46 = vsyncadd [#allocation3], %s45
      %s47 = sshll.u32 [#allocation2], 4
      %s48 = int_to_ptr.vmem [resolvable:$true] %s47
      %53 = dma.hbm_to_vmem [thread:$0]  %s0, 512, %s48, [#allocation3], 128, 128, 8
    $region5: #{tpu_custom_call.1} parent=1 // pred_fallthru
      _
    // Predicated region
    $region6: #{tpu_custom_call.1} parent=1 // pred_check
      _
    $region7: #{tpu_custom_call.1} parent=1 // pred_check_branch
      %55 = sbr.rel (0) target = $region9
    $region8: #{tpu_custom_call.1} parent=1 // pred_region
      %s57 = ssub.s32 1536, 1536
      %58 = vsyncadd [#allocation6], %s57
      %s59 = sshll.u32 [#allocation5], 4
      %s60 = int_to_ptr.vmem [resolvable:$true] %s59
      %65 = dma.hbm_to_vmem [thread:$0]  %s1, 1536, %s60, [#allocation6], 128, 128, 8
    $region9: #{tpu_custom_call.1} parent=1 // pred_fallthru
      _
    // Predicated region
    $region10: #{tpu_custom_call.1} parent=1 // pred_check
      _
    $region11: #{tpu_custom_call.1} parent=1 // pred_check_branch
      %67 = sbr.rel (0) target = $region13
    $region12: #{tpu_custom_call.1} parent=1 // pred_region
      %s69 = ssub.s32 4608, 4608
      %70 = vsyncadd [#allocation6], %s69
      %s71 = sshll.u32 [#allocation7], 4
      %s72 = int_to_ptr.vmem [resolvable:$true] %s71
      %77 = dma.hbm_to_vmem [thread:$0]  %s2, 4608, %s72, [#allocation6], 256, 256, 16
    $region13: #{tpu_custom_call.1} parent=1 // pred_fallthru
      _
    // Predicated region
    $region14: #{tpu_custom_call.1} parent=1 // pred_check
      _
    $region15: #{tpu_custom_call.1} parent=1 // pred_check_branch
      %79 = sbr.rel (0) target = $region17
    $region16: #{tpu_custom_call.1} parent=1 // pred_region
      %s81 = ssub.s32 32, 32
      %82 = vsyncadd [#allocation9], %s81
      %s84 = sshll.u32 [#allocation8], 4
      %s85 = int_to_ptr.vmem [resolvable:$true] %s84
      %87 = dma.hbm_to_vmem [thread:$0]  %s3, 32, %s85, [#allocation9]
    $region17: #{tpu_custom_call.1} parent=1 // pred_fallthru
      _
    // Predicated region
    $region18: #{tpu_custom_call.1} parent=1 // pred_check
      _
    $region19: #{tpu_custom_call.1} parent=1 // pred_check_branch
      %89 = sbr.rel (0) target = $region21
    $region20: #{tpu_custom_call.1} parent=1 // pred_region
      %s91 = ssub.s32 256, 256
      %92 = vsyncadd [#allocation9], %s91
      %s93 = sshll.u32 [#allocation10], 4
      %s94 = int_to_ptr.vmem [resolvable:$true] %s93
      %99 = dma.hbm_to_vmem [thread:$0]  %s4, 256, %s94, [#allocation9], 128, 128, 8
    $region21: #{tpu_custom_call.1} parent=1 // pred_fallthru
      _
    // Predicated region
    $region22: #{tpu_custom_call.1} parent=1 // pred_check
      _
    $region23: #{tpu_custom_call.1} parent=1 // pred_check_branch
      %101 = sbr.rel (0) target = $region25
    $region24: #{tpu_custom_call.1} parent=1 // pred_region
      %s103 = ssub.s32 256, 256
      %104 = vsyncadd [#allocation12], %s103
      %s105 = sshll.u32 [#allocation11], 4
      %s106 = int_to_ptr.vmem [resolvable:$true] %s105
      %111 = dma.hbm_to_vmem [thread:$0]  %s5, 256, %s106, [#allocation12], 128, 128, 8
    $region25: #{tpu_custom_call.1} parent=1 // pred_fallthru
      _
    // Predicated region
    $region26: #{tpu_custom_call.1} parent=1 // pred_check
      _
    $region27: #{tpu_custom_call.1} parent=1 // pred_check_branch
      %113 = sbr.rel (0) target = $region29
    $region28: #{tpu_custom_call.1} parent=1 // pred_region
      %s115 = ssub.s32 4096, 4096
      %116 = vsyncadd [#allocation12], %s115
      %s117 = sshll.u32 [#allocation13], 4
      %s118 = int_to_ptr.vmem [resolvable:$true] %s117
      %123 = dma.hbm_to_vmem [thread:$0]  %s6, 4096, %s118, [#allocation12], 128, 128, 8
    $region29: #{tpu_custom_call.1} parent=1 // pred_fallthru
      _
    // Predicated region
    $region30: #{tpu_custom_call.1} parent=1 // pred_check
      _
    $region31: #{tpu_custom_call.1} parent=1 // pred_check_branch
      %125 = sbr.rel (0) target = $region33
    $region32: #{tpu_custom_call.1} parent=1 // pred_region
      %s127 = ssub.s32 4096, 4096
      %128 = vsyncadd [#allocation15], %s127
      %s129 = sshll.u32 [#allocation14], 4
      %s130 = int_to_ptr.vmem [resolvable:$true] %s129
      %135 = dma.hbm_to_vmem [thread:$0]  %s7, 4096, %s130, [#allocation15], 128, 128, 8
    $region33: #{tpu_custom_call.1} parent=1 // pred_fallthru
      _
    // Predicated region
    $region34: #{tpu_custom_call.1} parent=1 // pred_check
      _
    $region35: #{tpu_custom_call.1} parent=1 // pred_check_branch
      %137 = sbr.rel (0) target = $region37
    $region36: #{tpu_custom_call.1} parent=1 // pred_region
      _
    $region37: #{tpu_custom_call.1} parent=1 // pred_fallthru
      _
    // Predicated region
    $region38: #{tpu_custom_call.1} parent=1 // pred_check
      _
    $region39: #{tpu_custom_call.1} parent=1 // pred_check_branch
      %139 = sbr.rel (0) target = $region41
    $region40: #{tpu_custom_call.1} parent=1 // pred_region
      %s141 = ssub.s32 6144, 6144
      %142 = vsyncadd [#allocation15], %s141
      %s143 = sshll.u32 [#allocation16], 4
      %s144 = int_to_ptr.vmem [resolvable:$true] %s143
      %149 = dma.hbm_to_vmem [thread:$0]  %s9, 6144, %s144, [#allocation15], 128, 128, 8
    $region41: #{tpu_custom_call.1} parent=1 // pred_fallthru
      _
    // Predicated region
    $region42: #{tpu_custom_call.1} parent=1 // pred_check
      _
    $region43: #{tpu_custom_call.1} parent=1 // pred_check_branch
      %151 = sbr.rel (0) target = $region45
    $region44: #{tpu_custom_call.1} parent=1 // pred_region
      %s153 = ssub.s32 16, 16
      %154 = vsyncadd [#allocation18], %s153
      %s156 = sshll.u32 [#allocation17], 4
      %s157 = int_to_ptr.vmem [resolvable:$true] %s156
      %159 = dma.hbm_to_vmem [thread:$0]  %s10, 16, %s157, [#allocation18]
    $region45: #{tpu_custom_call.1} parent=1 // pred_fallthru
      _
    // Predicated region
    $region46: #{tpu_custom_call.1} parent=1 // pred_check
      _
    $region47: #{tpu_custom_call.1} parent=1 // pred_check_branch
      %161 = sbr.rel (0) target = $region49
    $region48: #{tpu_custom_call.1} parent=1 // pred_region
      %s163 = ssub.s32 768, 768
      %164 = vsyncadd [#allocation18], %s163
      %s165 = sshll.u32 [#allocation19], 4
      %s166 = int_to_ptr.vmem [resolvable:$true] %s165
      %171 = dma.hbm_to_vmem [thread:$0]  %s11, 768, %s166, [#allocation18], 128, 128, 8
    $region49: #{tpu_custom_call.1} parent=1 // pred_fallthru
      _
    // Predicated region
    $region50: #{tpu_custom_call.1} parent=1 // pred_check
      _
    $region51: #{tpu_custom_call.1} parent=1 // pred_check_branch
      %173 = sbr.rel (0) target = $region53
    $region52: #{tpu_custom_call.1} parent=1 // pred_region
      %s175 = ssub.s32 6144, 6144
      %176 = vsyncadd [#allocation21], %s175
      %s177 = sshll.u32 [#allocation20], 4
      %s178 = int_to_ptr.vmem [resolvable:$true] %s177
      %183 = dma.hbm_to_vmem [thread:$0]  %s12, 6144, %s178, [#allocation21], 128, 128, 8
    $region53: #{tpu_custom_call.1} parent=1 // pred_fallthru
      _
    // Predicated region
    $region54: #{tpu_custom_call.1} parent=1 // pred_check
      _
    $region55: #{tpu_custom_call.1} parent=1 // pred_check_branch
      %185 = sbr.rel (0) target = $region57
    $region56: #{tpu_custom_call.1} parent=1 // pred_region
      %s187 = ssub.s32 16, 16
      %188 = vsyncadd [#allocation21], %s187
      %s190 = sshll.u32 [#allocation22], 4
      %s191 = int_to_ptr.vmem [resolvable:$true] %s190
      %193 = dma.hbm_to_vmem [thread:$0]  %s13, 16, %s191, [#allocation21]
    $region57: #{tpu_custom_call.1} parent=1 // pred_fallthru
      _
    // Predicated region
    $region58: #{tpu_custom_call.1} parent=1 // pred_check
      _
    $region59: #{tpu_custom_call.1} parent=1 // pred_check_branch
      %195 = sbr.rel (0) target = $region61
    $region60: #{tpu_custom_call.1} parent=1 // pred_region
      %s197 = ssub.s32 128, 128
      %198 = vsyncadd [#allocation24], %s197
      %s200 = sshll.u32 [#allocation23], 4
      %s201 = int_to_ptr.vmem [resolvable:$true] %s200
      %203 = dma.hbm_to_vmem [thread:$0]  %s14, 128, %s201, [#allocation24]
    $region61: #{tpu_custom_call.1} parent=1 // pred_fallthru
      _
    // Predicated region
    $region62: #{tpu_custom_call.1} parent=1 // pred_check
      _
    $region63: #{tpu_custom_call.1} parent=1 // pred_check_branch
      %205 = sbr.rel (0) target = $region65
    $region64: #{tpu_custom_call.1} parent=1 // pred_region
      _
    $region65: #{tpu_custom_call.1} parent=1 // pred_fallthru
      _
    // Predicated region
    $region66: #{tpu_custom_call.1} parent=1 // pred_check
      _
    $region67: #{tpu_custom_call.1} parent=1 // pred_check_branch
      %207 = sbr.rel (0) target = $region69
    $region68: #{tpu_custom_call.1} parent=1 // pred_region
      %s209 = ssub.s32 16, 16
      %210 = vsyncadd [#allocation24], %s209
      %s212 = sshll.u32 [#allocation25], 4
      %s213 = int_to_ptr.vmem [resolvable:$true] %s212
      %215 = dma.hbm_to_vmem [thread:$0]  %s16, 16, %s213, [#allocation24]
    $region69: #{tpu_custom_call.1} parent=1 // pred_fallthru
      _
    // Predicated region
    $region70: #{tpu_custom_call.1} parent=1 // pred_check
      _
    $region71: #{tpu_custom_call.1} parent=1 // pred_check_branch
      %217 = sbr.rel (0) target = $region73
    $region72: #{tpu_custom_call.1} parent=1 // pred_region
      _
    $region73: #{tpu_custom_call.1} parent=1 // pred_fallthru
      _
    // Predicated region
    $region74: #{tpu_custom_call.1} parent=1 // pred_check
      _
    $region75: #{tpu_custom_call.1} parent=1 // pred_check_branch
      %219 = sbr.rel (0) target = $region77
    $region76: #{tpu_custom_call.1} parent=1 // pred_region
      %s221 = ssub.s32 6144, 6144
      %222 = vsyncadd [#allocation27], %s221
      %s223 = sshll.u32 [#allocation26], 4
      %s224 = int_to_ptr.vmem [resolvable:$true] %s223
      %229 = dma.hbm_to_vmem [thread:$0]  %s18, 6144, %s224, [#allocation27], 128, 128, 8
    $region77: #{tpu_custom_call.1} parent=1 // pred_fallthru
      _
    // Predicated region
    $region78: #{tpu_custom_call.1} parent=1 // pred_check
      _
    $region79: #{tpu_custom_call.1} parent=1 // pred_check_branch
      %231 = sbr.rel (0) target = $region81
    $region80: #{tpu_custom_call.1} parent=1 // pred_region
      _
    $region81: #{tpu_custom_call.1} parent=1 // pred_fallthru
      _
    // Predicated region
    $region82: #{tpu_custom_call.1} parent=1 // pred_check
      _
    $region83: #{tpu_custom_call.1} parent=1 // pred_check_branch
      %233 = sbr.rel (0) target = $region85
    $region84: #{tpu_custom_call.1} parent=1 // pred_region
      %s235 = ssub.s32 384, 384
      %236 = vsyncadd [#allocation27], %s235
      %s237 = sshll.u32 [#allocation28], 4
      %s238 = int_to_ptr.vmem [resolvable:$true] %s237
      %243 = dma.hbm_to_vmem [thread:$0]  %s20, 384, %s238, [#allocation27], 128, 128, 8
    $region85: #{tpu_custom_call.1} parent=1 // pred_fallthru
      _
    // Predicated region
    $region86: #{tpu_custom_call.1} parent=1 // pred_check
      _
    $region87: #{tpu_custom_call.1} parent=1 // pred_check_branch
      %245 = sbr.rel (0) target = $region89
    $region88: #{tpu_custom_call.1} parent=1 // pred_region
      %s247 = ssub.s32 6144, 6144
      %248 = vsyncadd [#allocation30], %s247
      %s249 = sshll.u32 [#allocation29], 4
      %s250 = int_to_ptr.vmem [resolvable:$true] %s249
      %255 = dma.hbm_to_vmem [thread:$0]  %s21, 6144, %s250, [#allocation30], 128, 128, 8
    $region89: #{tpu_custom_call.1} parent=1 // pred_fallthru
      _
    // Predicated region
    $region90: #{tpu_custom_call.1} parent=1 // pred_check
      _
    $region91: #{tpu_custom_call.1} parent=1 // pred_check_branch
      %257 = sbr.rel (0) target = $region93
    $region92: #{tpu_custom_call.1} parent=1 // pred_region
      _
    $region93: #{tpu_custom_call.1} parent=1 // pred_fallthru
      _
    // Predicated region
    $region94: #{tpu_custom_call.1} parent=1 // pred_check
      _
    $region95: #{tpu_custom_call.1} parent=1 // pred_check_branch
      %259 = sbr.rel (0) target = $region97
    $region96: #{tpu_custom_call.1} parent=1 // pred_region
      _
    $region97: #{tpu_custom_call.1} parent=1 // pred_fallthru
      _
    // Predicated region
    $region98: #{tpu_custom_call.1} parent=1 // pred_check
      _
    $region99: #{tpu_custom_call.1} parent=1 // pred_check_branch
      %261 = sbr.rel (0) target = $region101
    $region100: #{tpu_custom_call.1} parent=1 // pred_region
      _
    $region101: #{tpu_custom_call.1} parent=1 // pred_fallthru
      _
    // Predicated region
    $region102: #{tpu_custom_call.1} parent=1 // pred_check
      _
    $region103: #{tpu_custom_call.1} parent=1 // pred_check_branch
      %263 = sbr.rel (0) target = $region105
    $region104: #{tpu_custom_call.1} parent=1 // pred_region
      _
    $region105: #{tpu_custom_call.1} parent=1 // pred_fallthru
      _
    // Predicated region
    $region106: #{tpu_custom_call.1} parent=1 // pred_check
      _
    $region107: #{tpu_custom_call.1} parent=1 // pred_check_branch
      %265 = sbr.rel (0) target = $region109
    $region108: #{tpu_custom_call.1} parent=1 // pred_region
      %266 = dma.done [#allocation3], 512
    $region109: #{tpu_custom_call.1} parent=1 // pred_fallthru
      _
    // Predicated region
    $region110: #{tpu_custom_call.1} parent=1 // pred_check
      _
    $region111: #{tpu_custom_call.1} parent=1 // pred_check_branch
      %268 = sbr.rel (0) target = $region113
    $region112: #{tpu_custom_call.1} parent=1 // pred_region
      %269 = dma.done [#allocation6], 1536
    $region113: #{tpu_custom_call.1} parent=1 // pred_fallthru
      _
    // Predicated region
    $region114: #{tpu_custom_call.1} parent=1 // pred_check
      _
    $region115: #{tpu_custom_call.1} parent=1 // pred_check_branch
      %271 = sbr.rel (0) target = $region117
    $region116: #{tpu_custom_call.1} parent=1 // pred_region
      %272 = dma.done [#allocation6], 4608
    $region117: #{tpu_custom_call.1} parent=1 // pred_fallthru
      _
    // Predicated region
    $region118: #{tpu_custom_call.1} parent=1 // pred_check
      _
    $region119: #{tpu_custom_call.1} parent=1 // pred_check_branch
      %274 = sbr.rel (0) target = $region121
    $region120: #{tpu_custom_call.1} parent=1 // pred_region
      %275 = dma.done [#allocation9], 32
    $region121: #{tpu_custom_call.1} parent=1 // pred_fallthru
      _
    // Predicated region
    $region122: #{tpu_custom_call.1} parent=1 // pred_check
      _
    $region123: #{tpu_custom_call.1} parent=1 // pred_check_branch
      %277 = sbr.rel (0) target = $region125
    $region124: #{tpu_custom_call.1} parent=1 // pred_region
      %278 = dma.done [#allocation9], 256
    $region125: #{tpu_custom_call.1} parent=1 // pred_fallthru
      _
    // Predicated region
    $region126: #{tpu_custom_call.1} parent=1 // pred_check
      _
    $region127: #{tpu_custom_call.1} parent=1 // pred_check_branch
      %280 = sbr.rel (0) target = $region129
    $region128: #{tpu_custom_call.1} parent=1 // pred_region
      %281 = dma.done [#allocation12], 256
    $region129: #{tpu_custom_call.1} parent=1 // pred_fallthru
      _
    // Predicated region
    $region130: #{tpu_custom_call.1} parent=1 // pred_check
      _
    $region131: #{tpu_custom_call.1} parent=1 // pred_check_branch
      %283 = sbr.rel (0) target = $region133
    $region132: #{tpu_custom_call.1} parent=1 // pred_region
      %284 = dma.done [#allocation12], 4096
    $region133: #{tpu_custom_call.1} parent=1 // pred_fallthru
      _
    // Predicated region
    $region134: #{tpu_custom_call.1} parent=1 // pred_check
      _
    $region135: #{tpu_custom_call.1} parent=1 // pred_check_branch
      %286 = sbr.rel (0) target = $region137
    $region136: #{tpu_custom_call.1} parent=1 // pred_region
      %287 = dma.done [#allocation15], 4096
    $region137: #{tpu_custom_call.1} parent=1 // pred_fallthru
      _
    // Predicated region
    $region138: #{tpu_custom_call.1} parent=1 // pred_check
      _
    $region139: #{tpu_custom_call.1} parent=1 // pred_check_branch
      %289 = sbr.rel (0) target = $region141
    $region140: #{tpu_custom_call.1} parent=1 // pred_region
      %290 = dma.done [#allocation15], 6144
    $region141: #{tpu_custom_call.1} parent=1 // pred_fallthru
      _
    // Predicated region
    $region142: #{tpu_custom_call.1} parent=1 // pred_check
      _
    $region143: #{tpu_custom_call.1} parent=1 // pred_check_branch
      %292 = sbr.rel (0) target = $region145
    $region144: #{tpu_custom_call.1} parent=1 // pred_region
      %293 = dma.done [#allocation18], 16
    $region145: #{tpu_custom_call.1} parent=1 // pred_fallthru
      _
    // Predicated region
    $region146: #{tpu_custom_call.1} parent=1 // pred_check
      _
    $region147: #{tpu_custom_call.1} parent=1 // pred_check_branch
      %295 = sbr.rel (0) target = $region149
    $region148: #{tpu_custom_call.1} parent=1 // pred_region
      %296 = dma.done [#allocation18], 768
    $region149: #{tpu_custom_call.1} parent=1 // pred_fallthru
      _
    // Predicated region
    $region150: #{tpu_custom_call.1} parent=1 // pred_check
      _
    $region151: #{tpu_custom_call.1} parent=1 // pred_check_branch
      %298 = sbr.rel (0) target = $region153
    $region152: #{tpu_custom_call.1} parent=1 // pred_region
      %299 = dma.done [#allocation21], 6144
    $region153: #{tpu_custom_call.1} parent=1 // pred_fallthru
      _
    // Predicated region
    $region154: #{tpu_custom_call.1} parent=1 // pred_check
      _
    $region155: #{tpu_custom_call.1} parent=1 // pred_check_branch
      %301 = sbr.rel (0) target = $region157
    $region156: #{tpu_custom_call.1} parent=1 // pred_region
      %302 = dma.done [#allocation21], 16
    $region157: #{tpu_custom_call.1} parent=1 // pred_fallthru
      _
    // Predicated region
    $region158: #{tpu_custom_call.1} parent=1 // pred_check
      _
    $region159: #{tpu_custom_call.1} parent=1 // pred_check_branch
      %304 = sbr.rel (0) target = $region161
    $region160: #{tpu_custom_call.1} parent=1 // pred_region
      %305 = dma.done [#allocation24], 128
    $region161: #{tpu_custom_call.1} parent=1 // pred_fallthru
      _
    // Predicated region
    $region162: #{tpu_custom_call.1} parent=1 // pred_check
      _
    $region163: #{tpu_custom_call.1} parent=1 // pred_check_branch
      %307 = sbr.rel (0) target = $region165
    $region164: #{tpu_custom_call.1} parent=1 // pred_region
      %308 = dma.done [#allocation24], 16
    $region165: #{tpu_custom_call.1} parent=1 // pred_fallthru
      _
    // Predicated region
    $region166: #{tpu_custom_call.1} parent=1 // pred_check
      _
    $region167: #{tpu_custom_call.1} parent=1 // pred_check_branch
      %310 = sbr.rel (0) target = $region169
    $region168: #{tpu_custom_call.1} parent=1 // pred_region
      %311 = dma.done [#allocation27], 6144
    $region169: #{tpu_custom_call.1} parent=1 // pred_fallthru
      _
    // Predicated region
    $region170: #{tpu_custom_call.1} parent=1 // pred_check
      _
    $region171: #{tpu_custom_call.1} parent=1 // pred_check_branch
      %313 = sbr.rel (0) target = $region173
    $region172: #{tpu_custom_call.1} parent=1 // pred_region
      %314 = dma.done [#allocation27], 384
    $region173: #{tpu_custom_call.1} parent=1 // pred_fallthru
      _
    // Predicated region
    $region174: #{tpu_custom_call.1} parent=1 // pred_check
      _
    $region175: #{tpu_custom_call.1} parent=1 // pred_check_branch
      %316 = sbr.rel (0) target = $region177
    $region176: #{tpu_custom_call.1} parent=1 // pred_region
      %317 = dma.done [#allocation30], 6144
    $region177: #{tpu_custom_call.1} parent=1 // pred_fallthru
      _
    %v318 = vld [vmem:[#allocation2] sm:$0xff]
    %v319 = vld [vmem:[#allocation2 + $0x8] sm:$0xff]
    %v320 = vld [vmem:[#allocation2 + $0x10] sm:$0xff]
    %v321 = vld [vmem:[#allocation2 + $0x18] sm:$0xff]
    %v322 = vld [vmem:[#allocation5] sm:$0xff]
    %v323 = vld [vmem:[#allocation5 + $0x8] sm:$0xff]
    %v324 = vld [vmem:[#allocation5 + $0x10] sm:$0xff]
    %v325 = vld [vmem:[#allocation5 + $0x18] sm:$0xff]
    %vm326 = vcmask 261120
    %v328 = vsel %vm326, %v322, 0
    %v331 = vsel %vm326, %v323, 0
    %v334 = vsel %vm326, %v324, 0
    %v337 = vsel %vm326, %v325, 0
    %339 = vmatprep.subr.mxu0 0.0
    %340 = vmatpush1.msra.mxu0 %v318
    %341 = vmatprep.subr.mxu0 0.0
    %342 = vmatpush1.msra.mxu0 %v319
    %343 = vmatprep.subr.mxu0 0.0
    %344 = vmatpush1.msra.mxu0 %v320
    %345 = vmatprep.subr.mxu0 0.0
    %346 = vmatpush1.msra.mxu0 %v321
    %347 = vmatprep.subr.mxu0 0.0
    %348 = vmatpush1.msra.mxu0 0.0
    %349 = vmatprep.subr.mxu0 0.0
    %350 = vmatpush1.msra.mxu0 0.0
    %351 = vmatprep.subr.mxu0 0.0
    %352 = vmatpush1.msra.mxu0 0.0
    %353 = vmatprep.subr.mxu0 0.0
    %354 = vmatpush1.msra.mxu0 0.0
    %355 = vmatprep.subr.mxu0 0.0
    %356 = vmatpush1.msra.mxu0 0.0
    %357 = vmatprep.subr.mxu0 0.0
    %358 = vmatpush1.msra.mxu0 0.0
    %359 = vmatprep.subr.mxu0 0.0
    %360 = vmatpush1.msra.mxu0 0.0
    %361 = vmatprep.subr.mxu0 0.0
    %362 = vmatpush1.msra.mxu0 0.0
    %363 = vmatprep.subr.mxu0 0.0
    %364 = vmatpush1.msra.mxu0 0.0
    %365 = vmatprep.subr.mxu0 0.0
    %366 = vmatpush1.msra.mxu0 0.0
    %367 = vmatprep.subr.mxu0 0.0
    %368 = vmatpush1.msra.mxu0 0.0
    %369 = vmatprep.subr.mxu0 0.0
    %370 = vmatpush1.msra.mxu0 0.0
    %371 = vmatprep.subr.mxu0 0.0
    %372 = vmatpush1.msra.mxu0 0.0
    %373 = vmatprep.subr.mxu0 0.0
    %374 = vmatpush1.msra.mxu0 0.0
    %375 = vmatprep.subr.mxu0 0.0
    %376 = vmatpush1.msra.mxu0 0.0
    %377 = vmatprep.subr.mxu0 0.0
    %378 = vmatpush1.msra.mxu0 0.0
    %379 = vmatprep.subr.mxu0 0.0
    %380 = vmatpush1.msra.mxu0 0.0
    %381 = vmatprep.subr.mxu0 0.0
    %382 = vmatpush1.msra.mxu0 0.0
    %383 = vmatprep.subr.mxu0 0.0
    %384 = vmatpush1.msra.mxu0 0.0
    %385 = vmatprep.subr.mxu0 0.0
    %386 = vmatpush1.msra.mxu0 0.0
    %387 = vmatprep.subr.mxu0 0.0
    %388 = vmatpush1.msra.mxu0 0.0
    %389 = vmatprep.subr.mxu0 0.0
    %390 = vmatpush1.msra.mxu0 0.0
    %391 = vmatprep.subr.mxu0 0.0
    %392 = vmatpush1.msra.mxu0 0.0
    %393 = vmatprep.subr.mxu0 0.0
    %394 = vmatpush1.msra.mxu0 0.0
    %395 = vmatprep.subr.mxu0 0.0
    %396 = vmatpush1.msra.mxu0 0.0
    %397 = vmatprep.subr.mxu0 0.0
    %398 = vmatpush1.msra.mxu0 0.0
    %399 = vmatprep.subr.mxu0 0.0
    %400 = vmatpush1.msra.mxu0 0.0
    %401 = vmatprep.subr.mxu0 0.0
    %402 = vmatpush1.msra.mxu0 0.0
    %403 = vmatprep.mubr.f32.mxu0 0.0
    %404 = vmatmul.mubr.f32.gmra.mrb[0].mxu0 %v328
    %v405 = vpop.f32.mrb[0].mxu0
    %v406 = vadd.f32 0.0, %v405
    %v407 = vpop.f32.mrb[0].mxu0
    %408 = vmatprep.mubr.f32.mxu0 0.0
    %409 = vmatmul.mubr.f32.gmra.mrb[0].mxu0 %v331
    %v410 = vpop.f32.mrb[0].mxu0
    %v411 = vadd.f32 0.0, %v410
    %v412 = vpop.f32.mrb[0].mxu0
    %413 = vmatprep.mubr.f32.mxu0 0.0
    %414 = vmatmul.mubr.f32.gmra.mrb[0].mxu0 %v334
    %v415 = vpop.f32.mrb[0].mxu0
    %v416 = vadd.f32 0.0, %v415
    %v417 = vpop.f32.mrb[0].mxu0
    %418 = vmatprep.mubr.f32.mxu0 0.0
    %419 = vmatmul.mubr.f32.gmra.mrb[0].mxu0 %v337
    %v420 = vpop.f32.mrb[0].mxu0
    %v421 = vadd.f32 0.0, %v420
    %v422 = vpop.f32.mrb[0].mxu0
    %423 = vdwg.mxu0
    %v424 = vld [vmem:[#allocation7] sm:$0xff]
    %v425 = vld [vmem:[#allocation7 + $0x8] sm:$0xff]
    %v426 = vld [vmem:[#allocation7 + $0x10] sm:$0xff]
    %v427 = vld [vmem:[#allocation7 + $0x18] sm:$0xff]
    %v428 = vld [vmem:[#allocation7 + $0x20] sm:$0xff]
    %v429 = vld [vmem:[#allocation7 + $0x28] sm:$0xff]
    %v430 = vld [vmem:[#allocation7 + $0x30] sm:$0xff]
    %v431 = vld [vmem:[#allocation7 + $0x38] sm:$0xff]
    %v432 = vld [vmem:[#allocation7 + $0x40] sm:$0xff]
    %v433 = vld [vmem:[#allocation7 + $0x48] sm:$0xff]
    %v434 = vld [vmem:[#allocation7 + $0x50] sm:$0xff]
    %v435 = vld [vmem:[#allocation7 + $0x58] sm:$0xff]
    %s436 = scalar_lea.vmem [#allocation5], 32
    %v437 = vld [vmem:[%s436] sm:$0xff]
    %v438 = vld [vmem:[%s436 + $0x8] sm:$0xff]
    %v439 = vld [vmem:[%s436 + $0x10] sm:$0xff]
    %v440 = vld [vmem:[%s436 + $0x18] sm:$0xff]
    %v442 = vsel %vm326, %v437, 0
    %v445 = vsel %vm326, %v438, 0
    %v448 = vsel %vm326, %v439, 0
    %v451 = vsel %vm326, %v440, 0
    %453 = vmatprep.subr.mxu0 0.0
    %454 = vmatpush1.msra.mxu0 %v318
    %455 = vmatprep.subr.mxu0 0.0
    %456 = vmatpush1.msra.mxu0 %v319
    %457 = vmatprep.subr.mxu0 0.0
    %458 = vmatpush1.msra.mxu0 %v320
    %459 = vmatprep.subr.mxu0 0.0
    %460 = vmatpush1.msra.mxu0 %v321
    %461 = vmatprep.subr.mxu0 0.0
    %462 = vmatpush1.msra.mxu0 0.0
    %463 = vmatprep.subr.mxu0 0.0
    %464 = vmatpush1.msra.mxu0 0.0
    %465 = vmatprep.subr.mxu0 0.0
    %466 = vmatpush1.msra.mxu0 0.0
    %467 = vmatprep.subr.mxu0 0.0
    %468 = vmatpush1.msra.mxu0 0.0
    %469 = vmatprep.subr.mxu0 0.0
    %470 = vmatpush1.msra.mxu0 0.0
    %471 = vmatprep.subr.mxu0 0.0
    %472 = vmatpush1.msra.mxu0 0.0
    %473 = vmatprep.subr.mxu0 0.0
    %474 = vmatpush1.msra.mxu0 0.0
    %475 = vmatprep.subr.mxu0 0.0
    %476 = vmatpush1.msra.mxu0 0.0
    %477 = vmatprep.subr.mxu0 0.0
    %478 = vmatpush1.msra.mxu0 0.0
    %479 = vmatprep.subr.mxu0 0.0
    %480 = vmatpush1.msra.mxu0 0.0
    %481 = vmatprep.subr.mxu0 0.0
    %482 = vmatpush1.msra.mxu0 0.0
    %483 = vmatprep.subr.mxu0 0.0
    %484 = vmatpush1.msra.mxu0 0.0
    %485 = vmatprep.subr.mxu0 0.0
    %486 = vmatpush1.msra.mxu0 0.0
    %487 = vmatprep.subr.mxu0 0.0
    %488 = vmatpush1.msra.mxu0 0.0
    %489 = vmatprep.subr.mxu0 0.0
    %490 = vmatpush1.msra.mxu0 0.0
    %491 = vmatprep.subr.mxu0 0.0
    %492 = vmatpush1.msra.mxu0 0.0
    %493 = vmatprep.subr.mxu0 0.0
    %494 = vmatpush1.msra.mxu0 0.0
    %495 = vmatprep.subr.mxu0 0.0
    %496 = vmatpush1.msra.mxu0 0.0
    %497 = vmatprep.subr.mxu0 0.0
    %498 = vmatpush1.msra.mxu0 0.0
    %499 = vmatprep.subr.mxu0 0.0
    %500 = vmatpush1.msra.mxu0 0.0
    %501 = vmatprep.subr.mxu0 0.0
    %502 = vmatpush1.msra.mxu0 0.0
    %503 = vmatprep.subr.mxu0 0.0
    %504 = vmatpush1.msra.mxu0 0.0
    %505 = vmatprep.subr.mxu0 0.0
    %506 = vmatpush1.msra.mxu0 0.0
    %507 = vmatprep.subr.mxu0 0.0
    %508 = vmatpush1.msra.mxu0 0.0
    %509 = vmatprep.subr.mxu0 0.0
    %510 = vmatpush1.msra.mxu0 0.0
    %511 = vmatprep.subr.mxu0 0.0
    %512 = vmatpush1.msra.mxu0 0.0
    %513 = vmatprep.subr.mxu0 0.0
    %514 = vmatpush1.msra.mxu0 0.0
    %515 = vmatprep.subr.mxu0 0.0
    %516 = vmatpush1.msra.mxu0 0.0
    %517 = vmatprep.mubr.f32.mxu0 0.0
    %518 = vmatmul.mubr.f32.gmra.mrb[0].mxu0 %v442
    %v519 = vpop.f32.mrb[0].mxu0
    %v520 = vadd.f32 0.0, %v519
    %v521 = vpop.f32.mrb[0].mxu0
    %522 = vmatprep.mubr.f32.mxu0 0.0
    %523 = vmatmul.mubr.f32.gmra.mrb[0].mxu0 %v445
    %v524 = vpop.f32.mrb[0].mxu0
    %v525 = vadd.f32 0.0, %v524
    %v526 = vpop.f32.mrb[0].mxu0
    %527 = vmatprep.mubr.f32.mxu0 0.0
    %528 = vmatmul.mubr.f32.gmra.mrb[0].mxu0 %v448
    %v529 = vpop.f32.mrb[0].mxu0
    %v530 = vadd.f32 0.0, %v529
    %v531 = vpop.f32.mrb[0].mxu0
    %532 = vmatprep.mubr.f32.mxu0 0.0
    %533 = vmatmul.mubr.f32.gmra.mrb[0].mxu0 %v451
    %v534 = vpop.f32.mrb[0].mxu0
    %v535 = vadd.f32 0.0, %v534
    %v536 = vpop.f32.mrb[0].mxu0
    %537 = vdwg.mxu0
    %s538 = scalar_lea.vmem [#allocation7], 96
    %v539 = vld [vmem:[%s538] sm:$0xff]
    %v540 = vld [vmem:[%s538 + $0x8] sm:$0xff]
    %v541 = vld [vmem:[%s538 + $0x10] sm:$0xff]
    %v542 = vld [vmem:[%s538 + $0x18] sm:$0xff]
    %v543 = vld [vmem:[%s538 + $0x20] sm:$0xff]
    %v544 = vld [vmem:[%s538 + $0x28] sm:$0xff]
    %v545 = vld [vmem:[%s538 + $0x30] sm:$0xff]
    %v546 = vld [vmem:[%s538 + $0x38] sm:$0xff]
    %v547 = vld [vmem:[%s538 + $0x40] sm:$0xff]
    %v548 = vld [vmem:[%s538 + $0x48] sm:$0xff]
    %v549 = vld [vmem:[%s538 + $0x50] sm:$0xff]
    %v550 = vld [vmem:[%s538 + $0x58] sm:$0xff]
    %vm551 = vcmask 392192
    %v553 = vsel %vm551, %v520, 0
    %v556 = vsel %vm551, %v525, 0
    %v559 = vsel %vm551, %v530, 0
    %v562 = vsel %vm551, %v535, 0
    %564 = vmatprep.subr.mxu0 %v540
    %565 = vmatpush1.msra.mxu0 %v539
    %566 = vmatprep.subr.mxu0 %v542
    %567 = vmatpush1.msra.mxu0 %v541
    %568 = vmatprep.subr.mxu0 %v544
    %569 = vmatpush1.msra.mxu0 %v543
    %570 = vmatprep.subr.mxu0 %v546
    %571 = vmatpush1.msra.mxu0 %v545
    %572 = vmatprep.subr.mxu0 %v548
    %573 = vmatpush1.msra.mxu0 %v547
    %574 = vmatprep.subr.mxu0 %v550
    %575 = vmatpush1.msra.mxu0 %v549
    %576 = vmatprep.subr.mxu0 0.0
    %577 = vmatpush1.msra.mxu0 0.0
    %578 = vmatprep.subr.mxu0 0.0
    %579 = vmatpush1.msra.mxu0 0.0
    %580 = vmatprep.subr.mxu0 0.0
    %581 = vmatpush1.msra.mxu0 0.0
    %582 = vmatprep.subr.mxu0 0.0
    %583 = vmatpush1.msra.mxu0 0.0
    %584 = vmatprep.subr.mxu0 0.0
    %585 = vmatpush1.msra.mxu0 0.0
    %586 = vmatprep.subr.mxu0 0.0
    %587 = vmatpush1.msra.mxu0 0.0
    %588 = vmatprep.subr.mxu0 0.0
    %589 = vmatpush1.msra.mxu0 0.0
    %590 = vmatprep.subr.mxu0 0.0
    %591 = vmatpush1.msra.mxu0 0.0
    %592 = vmatprep.subr.mxu0 0.0
    %593 = vmatpush1.msra.mxu0 0.0
    %594 = vmatprep.subr.mxu0 0.0
    %595 = vmatpush1.msra.mxu0 0.0
    %596 = vmatprep.subr.mxu0 0.0
    %597 = vmatpush1.msra.mxu0 0.0
    %598 = vmatprep.subr.mxu0 0.0
    %599 = vmatpush1.msra.mxu0 0.0
    %600 = vmatprep.subr.mxu0 0.0
    %601 = vmatpush1.msra.mxu0 0.0
    %602 = vmatprep.subr.mxu0 0.0
    %603 = vmatpush1.msra.mxu0 0.0
    %604 = vmatprep.subr.mxu0 0.0
    %605 = vmatpush1.msra.mxu0 0.0
    %606 = vmatprep.subr.mxu0 0.0
    %607 = vmatpush1.msra.mxu0 0.0
    %608 = vmatprep.subr.mxu0 0.0
    %609 = vmatpush1.msra.mxu0 0.0
    %610 = vmatprep.subr.mxu0 0.0
    %611 = vmatpush1.msra.mxu0 0.0
    %612 = vmatprep.subr.mxu0 0.0
    %613 = vmatpush1.msra.mxu0 0.0
    %614 = vmatprep.subr.mxu0 0.0
    %615 = vmatpush1.msra.mxu0 0.0
    %616 = vmatprep.subr.mxu0 0.0
    %617 = vmatpush1.msra.mxu0 0.0
    %618 = vmatprep.subr.mxu0 0.0
    %619 = vmatpush1.msra.mxu0 0.0
    %620 = vmatprep.subr.mxu0 0.0
    %621 = vmatpush1.msra.mxu0 0.0
    %622 = vmatprep.subr.mxu0 0.0
    %623 = vmatpush1.msra.mxu0 0.0
    %624 = vmatprep.subr.mxu0 0.0
    %625 = vmatpush1.msra.mxu0 0.0
    %626 = vmatprep.subr.mxu0 0.0
    %627 = vmatpush1.msra.mxu0 0.0
    %628 = vmatprep.mubr.f32.mxu0 0.0
    %629 = vmatmul.mubr.f32.gmra.mrb[0].mxu0 %v553
    %v630 = vpop.f32.mrb[0].mxu0
    %v631 = vadd.f32 0.0, %v630
    %v632 = vpop.f32.mrb[0].mxu0
    %v633 = vadd.f32 0.0, %v632
    %634 = vmatprep.mubr.f32.mxu0 0.0
    %635 = vmatmul.mubr.f32.gmra.mrb[0].mxu0 %v556
    %v636 = vpop.f32.mrb[0].mxu0
    %v637 = vadd.f32 0.0, %v636
    %v638 = vpop.f32.mrb[0].mxu0
    %v639 = vadd.f32 0.0, %v638
    %640 = vmatprep.mubr.f32.mxu0 0.0
    %641 = vmatmul.mubr.f32.gmra.mrb[0].mxu0 %v559
    %v642 = vpop.f32.mrb[0].mxu0
    %v643 = vadd.f32 0.0, %v642
    %v644 = vpop.f32.mrb[0].mxu0
    %v645 = vadd.f32 0.0, %v644
    %646 = vmatprep.mubr.f32.mxu0 0.0
    %647 = vmatmul.mubr.f32.gmra.mrb[0].mxu0 %v562
    %v648 = vpop.f32.mrb[0].mxu0
    %v649 = vadd.f32 0.0, %v648
    %v650 = vpop.f32.mrb[0].mxu0
    %v651 = vadd.f32 0.0, %v650
    %652 = vdwg.mxu0
    %v654 = vsel %vm551, %v406, 0
    %v657 = vsel %vm551, %v411, 0
    %v660 = vsel %vm551, %v416, 0
    %v663 = vsel %vm551, %v421, 0
    %665 = vmatprep.subr.mxu0 %v425
    %666 = vmatpush1.msra.mxu0 %v424
    %667 = vmatprep.subr.mxu0 %v427
    %668 = vmatpush1.msra.mxu0 %v426
    %669 = vmatprep.subr.mxu0 %v429
    %670 = vmatpush1.msra.mxu0 %v428
    %671 = vmatprep.subr.mxu0 %v431
    %672 = vmatpush1.msra.mxu0 %v430
    %673 = vmatprep.subr.mxu0 %v433
    %674 = vmatpush1.msra.mxu0 %v432
    %675 = vmatprep.subr.mxu0 %v435
    %676 = vmatpush1.msra.mxu0 %v434
    %677 = vmatprep.subr.mxu0 0.0
    %678 = vmatpush1.msra.mxu0 0.0
    %679 = vmatprep.subr.mxu0 0.0
    %680 = vmatpush1.msra.mxu0 0.0
    %681 = vmatprep.subr.mxu0 0.0
    %682 = vmatpush1.msra.mxu0 0.0
    %683 = vmatprep.subr.mxu0 0.0
    %684 = vmatpush1.msra.mxu0 0.0
    %685 = vmatprep.subr.mxu0 0.0
    %686 = vmatpush1.msra.mxu0 0.0
    %687 = vmatprep.subr.mxu0 0.0
    %688 = vmatpush1.msra.mxu0 0.0
    %689 = vmatprep.subr.mxu0 0.0
    %690 = vmatpush1.msra.mxu0 0.0
    %691 = vmatprep.subr.mxu0 0.0
    %692 = vmatpush1.msra.mxu0 0.0
    %693 = vmatprep.subr.mxu0 0.0
    %694 = vmatpush1.msra.mxu0 0.0
    %695 = vmatprep.subr.mxu0 0.0
    %696 = vmatpush1.msra.mxu0 0.0
    %697 = vmatprep.subr.mxu0 0.0
    %698 = vmatpush1.msra.mxu0 0.0
    %699 = vmatprep.subr.mxu0 0.0
    %700 = vmatpush1.msra.mxu0 0.0
    %701 = vmatprep.subr.mxu0 0.0
    %702 = vmatpush1.msra.mxu0 0.0
    %703 = vmatprep.subr.mxu0 0.0
    %704 = vmatpush1.msra.mxu0 0.0
    %705 = vmatprep.subr.mxu0 0.0
    %706 = vmatpush1.msra.mxu0 0.0
    %707 = vmatprep.subr.mxu0 0.0
    %708 = vmatpush1.msra.mxu0 0.0
    %709 = vmatprep.subr.mxu0 0.0
    %710 = vmatpush1.msra.mxu0 0.0
    %711 = vmatprep.subr.mxu0 0.0
    %712 = vmatpush1.msra.mxu0 0.0
    %713 = vmatprep.subr.mxu0 0.0
    %714 = vmatpush1.msra.mxu0 0.0
    %715 = vmatprep.subr.mxu0 0.0
    %716 = vmatpush1.msra.mxu0 0.0
    %717 = vmatprep.subr.mxu0 0.0
    %718 = vmatpush1.msra.mxu0 0.0
    %719 = vmatprep.subr.mxu0 0.0
    %720 = vmatpush1.msra.mxu0 0.0
    %721 = vmatprep.subr.mxu0 0.0
    %722 = vmatpush1.msra.mxu0 0.0
    %723 = vmatprep.subr.mxu0 0.0
    %724 = vmatpush1.msra.mxu0 0.0
    %725 = vmatprep.subr.mxu0 0.0
    %726 = vmatpush1.msra.mxu0 0.0
    %727 = vmatprep.subr.mxu0 0.0
    %728 = vmatpush1.msra.mxu0 0.0
    %729 = vmatprep.mubr.f32.mxu0 0.0
    %730 = vmatmul.mubr.f32.gmra.mrb[0].mxu0 %v654
    %v731 = vpop.f32.mrb[0].mxu0
    %v732 = vadd.f32 %v631, %v731
    %v733 = vpop.f32.mrb[0].mxu0
    %v734 = vadd.f32 %v633, %v733
    %735 = vmatprep.mubr.f32.mxu0 0.0
    %736 = vmatmul.mubr.f32.gmra.mrb[0].mxu0 %v657
    %v737 = vpop.f32.mrb[0].mxu0
    %v738 = vadd.f32 %v637, %v737
    %v739 = vpop.f32.mrb[0].mxu0
    %v740 = vadd.f32 %v639, %v739
    %741 = vmatprep.mubr.f32.mxu0 0.0
    %742 = vmatmul.mubr.f32.gmra.mrb[0].mxu0 %v660
    %v743 = vpop.f32.mrb[0].mxu0
    %v744 = vadd.f32 %v643, %v743
    %v745 = vpop.f32.mrb[0].mxu0
    %v746 = vadd.f32 %v645, %v745
    %747 = vmatprep.mubr.f32.mxu0 0.0
    %748 = vmatmul.mubr.f32.gmra.mrb[0].mxu0 %v663
    %v749 = vpop.f32.mrb[0].mxu0
    %v750 = vadd.f32 %v649, %v749
    %v751 = vpop.f32.mrb[0].mxu0
    %v752 = vadd.f32 %v651, %v751
    %753 = vdwg.mxu0
    %s754 = scalar_lea.vmem [#allocation5], 64
    %v755 = vld [vmem:[%s754] sm:$0xff]
    %v756 = vld [vmem:[%s754 + $0x8] sm:$0xff]
    %v757 = vld [vmem:[%s754 + $0x10] sm:$0xff]
    %v758 = vld [vmem:[%s754 + $0x18] sm:$0xff]
    %v760 = vsel %vm326, %v755, 0
    %v763 = vsel %vm326, %v756, 0
    %v766 = vsel %vm326, %v757, 0
    %v769 = vsel %vm326, %v758, 0
    %771 = vmatprep.subr.mxu0 0.0
    %772 = vmatpush1.msra.mxu0 %v318
    %773 = vmatprep.subr.mxu0 0.0
    %774 = vmatpush1.msra.mxu0 %v319
    %775 = vmatprep.subr.mxu0 0.0
    %776 = vmatpush1.msra.mxu0 %v320
    %777 = vmatprep.subr.mxu0 0.0
    %778 = vmatpush1.msra.mxu0 %v321
    %779 = vmatprep.subr.mxu0 0.0
    %780 = vmatpush1.msra.mxu0 0.0
    %781 = vmatprep.subr.mxu0 0.0
    %782 = vmatpush1.msra.mxu0 0.0
    %783 = vmatprep.subr.mxu0 0.0
    %784 = vmatpush1.msra.mxu0 0.0
    %785 = vmatprep.subr.mxu0 0.0
    %786 = vmatpush1.msra.mxu0 0.0
    %787 = vmatprep.subr.mxu0 0.0
    %788 = vmatpush1.msra.mxu0 0.0
    %789 = vmatprep.subr.mxu0 0.0
    %790 = vmatpush1.msra.mxu0 0.0
    %791 = vmatprep.subr.mxu0 0.0
    %792 = vmatpush1.msra.mxu0 0.0
    %793 = vmatprep.subr.mxu0 0.0
    %794 = vmatpush1.msra.mxu0 0.0
    %795 = vmatprep.subr.mxu0 0.0
    %796 = vmatpush1.msra.mxu0 0.0
    %797 = vmatprep.subr.mxu0 0.0
    %798 = vmatpush1.msra.mxu0 0.0
    %799 = vmatprep.subr.mxu0 0.0
    %800 = vmatpush1.msra.mxu0 0.0
    %801 = vmatprep.subr.mxu0 0.0
    %802 = vmatpush1.msra.mxu0 0.0
    %803 = vmatprep.subr.mxu0 0.0
    %804 = vmatpush1.msra.mxu0 0.0
    %805 = vmatprep.subr.mxu0 0.0
    %806 = vmatpush1.msra.mxu0 0.0
    %807 = vmatprep.subr.mxu0 0.0
    %808 = vmatpush1.msra.mxu0 0.0
    %809 = vmatprep.subr.mxu0 0.0
    %810 = vmatpush1.msra.mxu0 0.0
    %811 = vmatprep.subr.mxu0 0.0
    %812 = vmatpush1.msra.mxu0 0.0
    %813 = vmatprep.subr.mxu0 0.0
    %814 = vmatpush1.msra.mxu0 0.0
    %815 = vmatprep.subr.mxu0 0.0
    %816 = vmatpush1.msra.mxu0 0.0
    %817 = vmatprep.subr.mxu0 0.0
    %818 = vmatpush1.msra.mxu0 0.0
    %819 = vmatprep.subr.mxu0 0.0
    %820 = vmatpush1.msra.mxu0 0.0
    %821 = vmatprep.subr.mxu0 0.0
    %822 = vmatpush1.msra.mxu0 0.0
    %823 = vmatprep.subr.mxu0 0.0
    %824 = vmatpush1.msra.mxu0 0.0
    %825 = vmatprep.subr.mxu0 0.0
    %826 = vmatpush1.msra.mxu0 0.0
    %827 = vmatprep.subr.mxu0 0.0
    %828 = vmatpush1.msra.mxu0 0.0
    %829 = vmatprep.subr.mxu0 0.0
    %830 = vmatpush1.msra.mxu0 0.0
    %831 = vmatprep.subr.mxu0 0.0
    %832 = vmatpush1.msra.mxu0 0.0
    %833 = vmatprep.subr.mxu0 0.0
    %834 = vmatpush1.msra.mxu0 0.0
    %835 = vmatprep.mubr.f32.mxu0 0.0
    %836 = vmatmul.mubr.f32.gmra.mrb[0].mxu0 %v760
    %v837 = vpop.f32.mrb[0].mxu0
    %v838 = vadd.f32 0.0, %v837
    %v839 = vpop.f32.mrb[0].mxu0
    %840 = vmatprep.mubr.f32.mxu0 0.0
    %841 = vmatmul.mubr.f32.gmra.mrb[0].mxu0 %v763
    %v842 = vpop.f32.mrb[0].mxu0
    %v843 = vadd.f32 0.0, %v842
    %v844 = vpop.f32.mrb[0].mxu0
    %845 = vmatprep.mubr.f32.mxu0 0.0
    %846 = vmatmul.mubr.f32.gmra.mrb[0].mxu0 %v766
    %v847 = vpop.f32.mrb[0].mxu0
    %v848 = vadd.f32 0.0, %v847
    %v849 = vpop.f32.mrb[0].mxu0
    %850 = vmatprep.mubr.f32.mxu0 0.0
    %851 = vmatmul.mubr.f32.gmra.mrb[0].mxu0 %v769
    %v852 = vpop.f32.mrb[0].mxu0
    %v853 = vadd.f32 0.0, %v852
    %v854 = vpop.f32.mrb[0].mxu0
    %855 = vdwg.mxu0
    %s856 = scalar_lea.vmem [#allocation7], 192
    %v857 = vld [vmem:[%s856] sm:$0xff]
    %v858 = vld [vmem:[%s856 + $0x8] sm:$0xff]
    %v859 = vld [vmem:[%s856 + $0x10] sm:$0xff]
    %v860 = vld [vmem:[%s856 + $0x18] sm:$0xff]
    %v861 = vld [vmem:[%s856 + $0x20] sm:$0xff]
    %v862 = vld [vmem:[%s856 + $0x28] sm:$0xff]
    %v863 = vld [vmem:[%s856 + $0x30] sm:$0xff]
    %v864 = vld [vmem:[%s856 + $0x38] sm:$0xff]
    %v865 = vld [vmem:[%s856 + $0x40] sm:$0xff]
    %v866 = vld [vmem:[%s856 + $0x48] sm:$0xff]
    %v867 = vld [vmem:[%s856 + $0x50] sm:$0xff]
    %v868 = vld [vmem:[%s856 + $0x58] sm:$0xff]
    %v870 = vsel %vm551, %v838, 0
    %v873 = vsel %vm551, %v843, 0
    %v876 = vsel %vm551, %v848, 0
    %v879 = vsel %vm551, %v853, 0
    %881 = vmatprep.subr.mxu0 %v858
    %882 = vmatpush1.msra.mxu0 %v857
    %883 = vmatprep.subr.mxu0 %v860
    %884 = vmatpush1.msra.mxu0 %v859
    %885 = vmatprep.subr.mxu0 %v862
    %886 = vmatpush1.msra.mxu0 %v861
    %887 = vmatprep.subr.mxu0 %v864
    %888 = vmatpush1.msra.mxu0 %v863
    %889 = vmatprep.subr.mxu0 %v866
    %890 = vmatpush1.msra.mxu0 %v865
    %891 = vmatprep.subr.mxu0 %v868
    %892 = vmatpush1.msra.mxu0 %v867
    %893 = vmatprep.subr.mxu0 0.0
    %894 = vmatpush1.msra.mxu0 0.0
    %895 = vmatprep.subr.mxu0 0.0
    %896 = vmatpush1.msra.mxu0 0.0
    %897 = vmatprep.subr.mxu0 0.0
    %898 = vmatpush1.msra.mxu0 0.0
    %899 = vmatprep.subr.mxu0 0.0
    %900 = vmatpush1.msra.mxu0 0.0
    %901 = vmatprep.subr.mxu0 0.0
    %902 = vmatpush1.msra.mxu0 0.0
    %903 = vmatprep.subr.mxu0 0.0
    %904 = vmatpush1.msra.mxu0 0.0
    %905 = vmatprep.subr.mxu0 0.0
    %906 = vmatpush1.msra.mxu0 0.0
    %907 = vmatprep.subr.mxu0 0.0
    %908 = vmatpush1.msra.mxu0 0.0
    %909 = vmatprep.subr.mxu0 0.0
    %910 = vmatpush1.msra.mxu0 0.0
    %911 = vmatprep.subr.mxu0 0.0
    %912 = vmatpush1.msra.mxu0 0.0
    %913 = vmatprep.subr.mxu0 0.0
    %914 = vmatpush1.msra.mxu0 0.0
    %915 = vmatprep.subr.mxu0 0.0
    %916 = vmatpush1.msra.mxu0 0.0
    %917 = vmatprep.subr.mxu0 0.0
    %918 = vmatpush1.msra.mxu0 0.0
    %919 = vmatprep.subr.mxu0 0.0
    %920 = vmatpush1.msra.mxu0 0.0
    %921 = vmatprep.subr.mxu0 0.0
    %922 = vmatpush1.msra.mxu0 0.0
    %923 = vmatprep.subr.mxu0 0.0
    %924 = vmatpush1.msra.mxu0 0.0
    %925 = vmatprep.subr.mxu0 0.0
    %926 = vmatpush1.msra.mxu0 0.0
    %927 = vmatprep.subr.mxu0 0.0
    %928 = vmatpush1.msra.mxu0 0.0
    %929 = vmatprep.subr.mxu0 0.0
    %930 = vmatpush1.msra.mxu0 0.0
    %931 = vmatprep.subr.mxu0 0.0
    %932 = vmatpush1.msra.mxu0 0.0
    %933 = vmatprep.subr.mxu0 0.0
    %934 = vmatpush1.msra.mxu0 0.0
    %935 = vmatprep.subr.mxu0 0.0
    %936 = vmatpush1.msra.mxu0 0.0
    %937 = vmatprep.subr.mxu0 0.0
    %938 = vmatpush1.msra.mxu0 0.0
    %939 = vmatprep.subr.mxu0 0.0
    %940 = vmatpush1.msra.mxu0 0.0
    %941 = vmatprep.subr.mxu0 0.0
    %942 = vmatpush1.msra.mxu0 0.0
    %943 = vmatprep.subr.mxu0 0.0
    %944 = vmatpush1.msra.mxu0 0.0
    %945 = vmatprep.mubr.f32.mxu0 0.0
    %946 = vmatmul.mubr.f32.gmra.mrb[0].mxu0 %v870
    %v947 = vpop.f32.mrb[0].mxu0
    %v948 = vadd.f32 0.0, %v947
    %v949 = vpop.f32.mrb[0].mxu0
    %v950 = vadd.f32 0.0, %v949
    %951 = vmatprep.mubr.f32.mxu0 0.0
    %952 = vmatmul.mubr.f32.gmra.mrb[0].mxu0 %v873
    %v953 = vpop.f32.mrb[0].mxu0
    %v954 = vadd.f32 0.0, %v953
    %v955 = vpop.f32.mrb[0].mxu0
    %v956 = vadd.f32 0.0, %v955
    %957 = vmatprep.mubr.f32.mxu0 0.0
    %958 = vmatmul.mubr.f32.gmra.mrb[0].mxu0 %v876
    %v959 = vpop.f32.mrb[0].mxu0
    %v960 = vadd.f32 0.0, %v959
    %v961 = vpop.f32.mrb[0].mxu0
    %v962 = vadd.f32 0.0, %v961
    %963 = vmatprep.mubr.f32.mxu0 0.0
    %964 = vmatmul.mubr.f32.gmra.mrb[0].mxu0 %v879
    %v965 = vpop.f32.mrb[0].mxu0
    %v966 = vadd.f32 0.0, %v965
    %v967 = vpop.f32.mrb[0].mxu0
    %v968 = vadd.f32 0.0, %v967
    %969 = vdwg.mxu0
    %v970 = vadd.f32 %v732, %v948
    %v971 = vadd.f32 %v734, %v950
    %v972 = vadd.f32 %v738, %v954
    %v973 = vadd.f32 %v740, %v956
    %v974 = vadd.f32 %v744, %v960
    %v975 = vadd.f32 %v746, %v962
    %v976 = vadd.f32 %v750, %v966
    %v977 = vadd.f32 %v752, %v968
    %v978 = vld [vmem:[#allocation8] sm:$0x3]
    %v980 = vlaneseq
    %v981 = vshrl.u32 %v980, 7
    %v982 = vsub.s32 0, %v981
    %v983 = vrot.slane %v978, %v982
    %v984 = vlaneseq
    %v985 = vshrl.u32 %v984, 7
    %v986 = vsub.s32 1, %v985
    %v987 = vrot.slane %v978, %v986
    %v990 = vadd.f32 %v970, %v983
    %v991 = vadd.f32 %v971, %v987
    %v992 = vadd.f32 %v972, %v983
    %v993 = vadd.f32 %v973, %v987
    %v994 = vadd.f32 %v974, %v983
    %v995 = vadd.f32 %v975, %v987
    %v996 = vadd.f32 %v976, %v983
    %v997 = vadd.f32 %v977, %v987
    %v998 = vmax.f32 %v990, 0.0
    %v999 = vmax.f32 %v991, 0.0
    %v1000 = vmax.f32 %v992, 0.0
    %v1001 = vmax.f32 %v993, 0.0
    %v1002 = vmax.f32 %v994, 0.0
    %v1003 = vmax.f32 %v995, 0.0
    %v1004 = vmax.f32 %v996, 0.0
    %v1005 = vmax.f32 %v997, 0.0
    %v1006 = vld [vmem:[#allocation10] sm:$0xff]
    %v1007 = vld [vmem:[#allocation10 + $0x8] sm:$0xff]
    %v1009 = vsel %vm326, %v1006, 0
    %v1012 = vsel %vm326, %v1007, 0
    %1014 = vmatprep.subr.mxu0 %v999
    %1015 = vmatpush1.msra.mxu0 %v998
    %1016 = vmatprep.subr.mxu0 %v1001
    %1017 = vmatpush1.msra.mxu0 %v1000
    %1018 = vmatprep.subr.mxu0 %v1003
    %1019 = vmatpush1.msra.mxu0 %v1002
    %1020 = vmatprep.subr.mxu0 %v1005
    %1021 = vmatpush1.msra.mxu0 %v1004
    %1022 = vmatprep.subr.mxu0 0.0
    %1023 = vmatpush1.msra.mxu0 0.0
    %1024 = vmatprep.subr.mxu0 0.0
    %1025 = vmatpush1.msra.mxu0 0.0
    %1026 = vmatprep.subr.mxu0 0.0
    %1027 = vmatpush1.msra.mxu0 0.0
    %1028 = vmatprep.subr.mxu0 0.0
    %1029 = vmatpush1.msra.mxu0 0.0
    %1030 = vmatprep.subr.mxu0 0.0
    %1031 = vmatpush1.msra.mxu0 0.0
    %1032 = vmatprep.subr.mxu0 0.0
    %1033 = vmatpush1.msra.mxu0 0.0
    %1034 = vmatprep.subr.mxu0 0.0
    %1035 = vmatpush1.msra.mxu0 0.0
    %1036 = vmatprep.subr.mxu0 0.0
    %1037 = vmatpush1.msra.mxu0 0.0
    %1038 = vmatprep.subr.mxu0 0.0
    %1039 = vmatpush1.msra.mxu0 0.0
    %1040 = vmatprep.subr.mxu0 0.0
    %1041 = vmatpush1.msra.mxu0 0.0
    %1042 = vmatprep.subr.mxu0 0.0
    %1043 = vmatpush1.msra.mxu0 0.0
    %1044 = vmatprep.subr.mxu0 0.0
    %1045 = vmatpush1.msra.mxu0 0.0
    %1046 = vmatprep.subr.mxu0 0.0
    %1047 = vmatpush1.msra.mxu0 0.0
    %1048 = vmatprep.subr.mxu0 0.0
    %1049 = vmatpush1.msra.mxu0 0.0
    %1050 = vmatprep.subr.mxu0 0.0
    %1051 = vmatpush1.msra.mxu0 0.0
    %1052 = vmatprep.subr.mxu0 0.0
    %1053 = vmatpush1.msra.mxu0 0.0
    %1054 = vmatprep.subr.mxu0 0.0
    %1055 = vmatpush1.msra.mxu0 0.0
    %1056 = vmatprep.subr.mxu0 0.0
    %1057 = vmatpush1.msra.mxu0 0.0
    %1058 = vmatprep.subr.mxu0 0.0
    %1059 = vmatpush1.msra.mxu0 0.0
    %1060 = vmatprep.subr.mxu0 0.0
    %1061 = vmatpush1.msra.mxu0 0.0
    %1062 = vmatprep.subr.mxu0 0.0
    %1063 = vmatpush1.msra.mxu0 0.0
    %1064 = vmatprep.subr.mxu0 0.0
    %1065 = vmatpush1.msra.mxu0 0.0
    %1066 = vmatprep.subr.mxu0 0.0
    %1067 = vmatpush1.msra.mxu0 0.0
    %1068 = vmatprep.subr.mxu0 0.0
    %1069 = vmatpush1.msra.mxu0 0.0
    %1070 = vmatprep.subr.mxu0 0.0
    %1071 = vmatpush1.msra.mxu0 0.0
    %1072 = vmatprep.subr.mxu0 0.0
    %1073 = vmatpush1.msra.mxu0 0.0
    %1074 = vmatprep.subr.mxu0 0.0
    %1075 = vmatpush1.msra.mxu0 0.0
    %1076 = vmatprep.subr.mxu0 0.0
    %1077 = vmatpush1.msra.mxu0 0.0
    %1078 = vmatprep.mubr.f32.mxu0 0.0
    %1079 = vmatmul.mubr.f32.gmra.mrb[0].mxu0 %v1009
    %v1080 = vpop.f32.mrb[0].mxu0
    %v1081 = vadd.f32 0.0, %v1080
    %v1082 = vpop.f32.mrb[0].mxu0
    %v1083 = vadd.f32 0.0, %v1082
    %1084 = vmatprep.mubr.f32.mxu0 0.0
    %1085 = vmatmul.mubr.f32.gmra.mrb[0].mxu0 %v1012
    %v1086 = vpop.f32.mrb[0].mxu0
    %v1087 = vadd.f32 0.0, %v1086
    %v1088 = vpop.f32.mrb[0].mxu0
    %v1089 = vadd.f32 0.0, %v1088
    %1090 = vdwg.mxu0
    %v1091 = vld [vmem:[#allocation11] sm:$0xff]
    %v1092 = vld [vmem:[#allocation11 + $0x8] sm:$0xff]
    %v1094 = vsel %vm326, %v1091, 0
    %v1097 = vsel %vm326, %v1092, 0
    %1099 = vmatprep.subr.mxu0 %v999
    %1100 = vmatpush1.msra.mxu0 %v998
    %1101 = vmatprep.subr.mxu0 %v1001
    %1102 = vmatpush1.msra.mxu0 %v1000
    %1103 = vmatprep.subr.mxu0 %v1003
    %1104 = vmatpush1.msra.mxu0 %v1002
    %1105 = vmatprep.subr.mxu0 %v1005
    %1106 = vmatpush1.msra.mxu0 %v1004
    %1107 = vmatprep.subr.mxu0 0.0
    %1108 = vmatpush1.msra.mxu0 0.0
    %1109 = vmatprep.subr.mxu0 0.0
    %1110 = vmatpush1.msra.mxu0 0.0
    %1111 = vmatprep.subr.mxu0 0.0
    %1112 = vmatpush1.msra.mxu0 0.0
    %1113 = vmatprep.subr.mxu0 0.0
    %1114 = vmatpush1.msra.mxu0 0.0
    %1115 = vmatprep.subr.mxu0 0.0
    %1116 = vmatpush1.msra.mxu0 0.0
    %1117 = vmatprep.subr.mxu0 0.0
    %1118 = vmatpush1.msra.mxu0 0.0
    %1119 = vmatprep.subr.mxu0 0.0
    %1120 = vmatpush1.msra.mxu0 0.0
    %1121 = vmatprep.subr.mxu0 0.0
    %1122 = vmatpush1.msra.mxu0 0.0
    %1123 = vmatprep.subr.mxu0 0.0
    %1124 = vmatpush1.msra.mxu0 0.0
    %1125 = vmatprep.subr.mxu0 0.0
    %1126 = vmatpush1.msra.mxu0 0.0
    %1127 = vmatprep.subr.mxu0 0.0
    %1128 = vmatpush1.msra.mxu0 0.0
    %1129 = vmatprep.subr.mxu0 0.0
    %1130 = vmatpush1.msra.mxu0 0.0
    %1131 = vmatprep.subr.mxu0 0.0
    %1132 = vmatpush1.msra.mxu0 0.0
    %1133 = vmatprep.subr.mxu0 0.0
    %1134 = vmatpush1.msra.mxu0 0.0
    %1135 = vmatprep.subr.mxu0 0.0
    %1136 = vmatpush1.msra.mxu0 0.0
    %1137 = vmatprep.subr.mxu0 0.0
    %1138 = vmatpush1.msra.mxu0 0.0
    %1139 = vmatprep.subr.mxu0 0.0
    %1140 = vmatpush1.msra.mxu0 0.0
    %1141 = vmatprep.subr.mxu0 0.0
    %1142 = vmatpush1.msra.mxu0 0.0
    %1143 = vmatprep.subr.mxu0 0.0
    %1144 = vmatpush1.msra.mxu0 0.0
    %1145 = vmatprep.subr.mxu0 0.0
    %1146 = vmatpush1.msra.mxu0 0.0
    %1147 = vmatprep.subr.mxu0 0.0
    %1148 = vmatpush1.msra.mxu0 0.0
    %1149 = vmatprep.subr.mxu0 0.0
    %1150 = vmatpush1.msra.mxu0 0.0
    %1151 = vmatprep.subr.mxu0 0.0
    %1152 = vmatpush1.msra.mxu0 0.0
    %1153 = vmatprep.subr.mxu0 0.0
    %1154 = vmatpush1.msra.mxu0 0.0
    %1155 = vmatprep.subr.mxu0 0.0
    %1156 = vmatpush1.msra.mxu0 0.0
    %1157 = vmatprep.subr.mxu0 0.0
    %1158 = vmatpush1.msra.mxu0 0.0
    %1159 = vmatprep.subr.mxu0 0.0
    %1160 = vmatpush1.msra.mxu0 0.0
    %1161 = vmatprep.subr.mxu0 0.0
    %1162 = vmatpush1.msra.mxu0 0.0
    %1163 = vmatprep.mubr.f32.mxu0 0.0
    %1164 = vmatmul.mubr.f32.gmra.mrb[0].mxu0 %v1094
    %v1165 = vpop.f32.mrb[0].mxu0
    %v1166 = vadd.f32 0.0, %v1165
    %v1167 = vpop.f32.mrb[0].mxu0
    %v1168 = vadd.f32 0.0, %v1167
    %1169 = vmatprep.mubr.f32.mxu0 0.0
    %1170 = vmatmul.mubr.f32.gmra.mrb[0].mxu0 %v1097
    %v1171 = vpop.f32.mrb[0].mxu0
    %v1172 = vadd.f32 0.0, %v1171
    %v1173 = vpop.f32.mrb[0].mxu0
    %v1174 = vadd.f32 0.0, %v1173
    %1175 = vdwg.mxu0
    %v1176 = vld [vmem:[#allocation13] sm:$0xff]
    %v1177 = vld [vmem:[#allocation13 + $0x8] sm:$0xff]
    %v1178 = vld [vmem:[#allocation13 + $0x10] sm:$0xff]
    %v1179 = vld [vmem:[#allocation13 + $0x18] sm:$0xff]
    %v1180 = vld [vmem:[#allocation13 + $0x20] sm:$0xff]
    %v1181 = vld [vmem:[#allocation13 + $0x28] sm:$0xff]
    %v1182 = vld [vmem:[#allocation13 + $0x30] sm:$0xff]
    %v1183 = vld [vmem:[#allocation13 + $0x38] sm:$0xff]
    %v1184 = vld [vmem:[#allocation13 + $0x40] sm:$0xff]
    %v1185 = vld [vmem:[#allocation13 + $0x48] sm:$0xff]
    %v1186 = vld [vmem:[#allocation13 + $0x50] sm:$0xff]
    %v1187 = vld [vmem:[#allocation13 + $0x58] sm:$0xff]
    %v1188 = vld [vmem:[#allocation13 + $0x60] sm:$0xff]
    %v1189 = vld [vmem:[#allocation13 + $0x68] sm:$0xff]
    %v1190 = vld [vmem:[#allocation13 + $0x70] sm:$0xff]
    %v1191 = vld [vmem:[#allocation13 + $0x78] sm:$0xff]
    %v1192 = vld [vmem:[#allocation13 + $0x80] sm:$0xff]
    %v1193 = vld [vmem:[#allocation13 + $0x88] sm:$0xff]
    %v1194 = vld [vmem:[#allocation13 + $0x90] sm:$0xff]
    %v1195 = vld [vmem:[#allocation13 + $0x98] sm:$0xff]
    %v1196 = vld [vmem:[#allocation13 + $0xa0] sm:$0xff]
    %v1197 = vld [vmem:[#allocation13 + $0xa8] sm:$0xff]
    %v1198 = vld [vmem:[#allocation13 + $0xb0] sm:$0xff]
    %v1199 = vld [vmem:[#allocation13 + $0xb8] sm:$0xff]
    %v1200 = vld [vmem:[#allocation13 + $0xc0] sm:$0xff]
    %v1201 = vld [vmem:[#allocation13 + $0xc8] sm:$0xff]
    %v1202 = vld [vmem:[#allocation13 + $0xd0] sm:$0xff]
    %v1203 = vld [vmem:[#allocation13 + $0xd8] sm:$0xff]
    %v1204 = vld [vmem:[#allocation13 + $0xe0] sm:$0xff]
    %v1205 = vld [vmem:[#allocation13 + $0xe8] sm:$0xff]
    %v1206 = vld [vmem:[#allocation13 + $0xf0] sm:$0xff]
    %v1207 = vld [vmem:[#allocation13 + $0xf8] sm:$0xff]
    %1208 = vmatprep.subr.mxu0 0.0
    %1209 = vmatpush1.msra.mxu0 %v1176
    %1210 = vmatprep.subr.mxu0 0.0
    %1211 = vmatpush1.msra.mxu0 %v1177
    %1212 = vmatprep.subr.mxu0 0.0
    %1213 = vmatpush1.msra.mxu0 %v1178
    %1214 = vmatprep.subr.mxu0 0.0
    %1215 = vmatpush1.msra.mxu0 %v1179
    %1216 = vmatprep.subr.mxu0 0.0
    %1217 = vmatpush1.msra.mxu0 %v1180
    %1218 = vmatprep.subr.mxu0 0.0
    %1219 = vmatpush1.msra.mxu0 %v1181
    %1220 = vmatprep.subr.mxu0 0.0
    %1221 = vmatpush1.msra.mxu0 %v1182
    %1222 = vmatprep.subr.mxu0 0.0
    %1223 = vmatpush1.msra.mxu0 %v1183
    %1224 = vmatprep.subr.mxu0 0.0
    %1225 = vmatpush1.msra.mxu0 %v1184
    %1226 = vmatprep.subr.mxu0 0.0
    %1227 = vmatpush1.msra.mxu0 %v1185
    %1228 = vmatprep.subr.mxu0 0.0
    %1229 = vmatpush1.msra.mxu0 %v1186
    %1230 = vmatprep.subr.mxu0 0.0
    %1231 = vmatpush1.msra.mxu0 %v1187
    %1232 = vmatprep.subr.mxu0 0.0
    %1233 = vmatpush1.msra.mxu0 %v1188
    %1234 = vmatprep.subr.mxu0 0.0
    %1235 = vmatpush1.msra.mxu0 %v1189
    %1236 = vmatprep.subr.mxu0 0.0
    %1237 = vmatpush1.msra.mxu0 %v1190
    %1238 = vmatprep.subr.mxu0 0.0
    %1239 = vmatpush1.msra.mxu0 %v1191
    %1240 = vmatprep.subr.mxu0 0.0
    %1241 = vmatpush1.msra.mxu0 %v1192
    %1242 = vmatprep.subr.mxu0 0.0
    %1243 = vmatpush1.msra.mxu0 %v1193
    %1244 = vmatprep.subr.mxu0 0.0
    %1245 = vmatpush1.msra.mxu0 %v1194
    %1246 = vmatprep.subr.mxu0 0.0
    %1247 = vmatpush1.msra.mxu0 %v1195
    %1248 = vmatprep.subr.mxu0 0.0
    %1249 = vmatpush1.msra.mxu0 %v1196
    %1250 = vmatprep.subr.mxu0 0.0
    %1251 = vmatpush1.msra.mxu0 %v1197
    %1252 = vmatprep.subr.mxu0 0.0
    %1253 = vmatpush1.msra.mxu0 %v1198
    %1254 = vmatprep.subr.mxu0 0.0
    %1255 = vmatpush1.msra.mxu0 %v1199
    %1256 = vmatprep.subr.mxu0 0.0
    %1257 = vmatpush1.msra.mxu0 %v1200
    %1258 = vmatprep.subr.mxu0 0.0
    %1259 = vmatpush1.msra.mxu0 %v1201
    %1260 = vmatprep.subr.mxu0 0.0
    %1261 = vmatpush1.msra.mxu0 %v1202
    %1262 = vmatprep.subr.mxu0 0.0
    %1263 = vmatpush1.msra.mxu0 %v1203
    %1264 = vmatprep.subr.mxu0 0.0
    %1265 = vmatpush1.msra.mxu0 %v1204
    %1266 = vmatprep.subr.mxu0 0.0
    %1267 = vmatpush1.msra.mxu0 %v1205
    %1268 = vmatprep.subr.mxu0 0.0
    %1269 = vmatpush1.msra.mxu0 %v1206
    %1270 = vmatprep.subr.mxu0 0.0
    %1271 = vmatpush1.msra.mxu0 %v1207
    %1272 = vmatprep.mubr.f32.mxu0 %v1083
    %1273 = vmatmul.mubr.f32.gmra.mrb[0].mxu0 %v1081
    %v1274 = vpop.f32.mrb[0].mxu0
    %v1275 = vadd.f32 0.0, %v1274
    %v1276 = vpop.f32.mrb[0].mxu0
    %1277 = vmatprep.mubr.f32.mxu0 %v1089
    %1278 = vmatmul.mubr.f32.gmra.mrb[0].mxu0 %v1087
    %v1279 = vpop.f32.mrb[0].mxu0
    %v1280 = vadd.f32 0.0, %v1279
    %v1281 = vpop.f32.mrb[0].mxu0
    %1282 = vdwg.mxu0
    %v1283 = vld [vmem:[#allocation14] sm:$0xff]
    %v1284 = vld [vmem:[#allocation14 + $0x8] sm:$0xff]
    %v1285 = vld [vmem:[#allocation14 + $0x10] sm:$0xff]
    %v1286 = vld [vmem:[#allocation14 + $0x18] sm:$0xff]
    %v1287 = vld [vmem:[#allocation14 + $0x20] sm:$0xff]
    %v1288 = vld [vmem:[#allocation14 + $0x28] sm:$0xff]
    %v1289 = vld [vmem:[#allocation14 + $0x30] sm:$0xff]
    %v1290 = vld [vmem:[#allocation14 + $0x38] sm:$0xff]
    %v1291 = vld [vmem:[#allocation14 + $0x40] sm:$0xff]
    %v1292 = vld [vmem:[#allocation14 + $0x48] sm:$0xff]
    %v1293 = vld [vmem:[#allocation14 + $0x50] sm:$0xff]
    %v1294 = vld [vmem:[#allocation14 + $0x58] sm:$0xff]
    %v1295 = vld [vmem:[#allocation14 + $0x60] sm:$0xff]
    %v1296 = vld [vmem:[#allocation14 + $0x68] sm:$0xff]
    %v1297 = vld [vmem:[#allocation14 + $0x70] sm:$0xff]
    %v1298 = vld [vmem:[#allocation14 + $0x78] sm:$0xff]
    %v1299 = vld [vmem:[#allocation14 + $0x80] sm:$0xff]
    %v1300 = vld [vmem:[#allocation14 + $0x88] sm:$0xff]
    %v1301 = vld [vmem:[#allocation14 + $0x90] sm:$0xff]
    %v1302 = vld [vmem:[#allocation14 + $0x98] sm:$0xff]
    %v1303 = vld [vmem:[#allocation14 + $0xa0] sm:$0xff]
    %v1304 = vld [vmem:[#allocation14 + $0xa8] sm:$0xff]
    %v1305 = vld [vmem:[#allocation14 + $0xb0] sm:$0xff]
    %v1306 = vld [vmem:[#allocation14 + $0xb8] sm:$0xff]
    %v1307 = vld [vmem:[#allocation14 + $0xc0] sm:$0xff]
    %v1308 = vld [vmem:[#allocation14 + $0xc8] sm:$0xff]
    %v1309 = vld [vmem:[#allocation14 + $0xd0] sm:$0xff]
    %v1310 = vld [vmem:[#allocation14 + $0xd8] sm:$0xff]
    %v1311 = vld [vmem:[#allocation14 + $0xe0] sm:$0xff]
    %v1312 = vld [vmem:[#allocation14 + $0xe8] sm:$0xff]
    %v1313 = vld [vmem:[#allocation14 + $0xf0] sm:$0xff]
    %v1314 = vld [vmem:[#allocation14 + $0xf8] sm:$0xff]
    %1315 = vmatprep.subr.mxu0 0.0
    %1316 = vmatpush1.msra.mxu0 %v1283
    %1317 = vmatprep.subr.mxu0 0.0
    %1318 = vmatpush1.msra.mxu0 %v1284
    %1319 = vmatprep.subr.mxu0 0.0
    %1320 = vmatpush1.msra.mxu0 %v1285
    %1321 = vmatprep.subr.mxu0 0.0
    %1322 = vmatpush1.msra.mxu0 %v1286
    %1323 = vmatprep.subr.mxu0 0.0
    %1324 = vmatpush1.msra.mxu0 %v1287
    %1325 = vmatprep.subr.mxu0 0.0
    %1326 = vmatpush1.msra.mxu0 %v1288
    %1327 = vmatprep.subr.mxu0 0.0
    %1328 = vmatpush1.msra.mxu0 %v1289
    %1329 = vmatprep.subr.mxu0 0.0
    %1330 = vmatpush1.msra.mxu0 %v1290
    %1331 = vmatprep.subr.mxu0 0.0
    %1332 = vmatpush1.msra.mxu0 %v1291
    %1333 = vmatprep.subr.mxu0 0.0
    %1334 = vmatpush1.msra.mxu0 %v1292
    %1335 = vmatprep.subr.mxu0 0.0
    %1336 = vmatpush1.msra.mxu0 %v1293
    %1337 = vmatprep.subr.mxu0 0.0
    %1338 = vmatpush1.msra.mxu0 %v1294
    %1339 = vmatprep.subr.mxu0 0.0
    %1340 = vmatpush1.msra.mxu0 %v1295
    %1341 = vmatprep.subr.mxu0 0.0
    %1342 = vmatpush1.msra.mxu0 %v1296
    %1343 = vmatprep.subr.mxu0 0.0
    %1344 = vmatpush1.msra.mxu0 %v1297
    %1345 = vmatprep.subr.mxu0 0.0
    %1346 = vmatpush1.msra.mxu0 %v1298
    %1347 = vmatprep.subr.mxu0 0.0
    %1348 = vmatpush1.msra.mxu0 %v1299
    %1349 = vmatprep.subr.mxu0 0.0
    %1350 = vmatpush1.msra.mxu0 %v1300
    %1351 = vmatprep.subr.mxu0 0.0
    %1352 = vmatpush1.msra.mxu0 %v1301
    %1353 = vmatprep.subr.mxu0 0.0
    %1354 = vmatpush1.msra.mxu0 %v1302
    %1355 = vmatprep.subr.mxu0 0.0
    %1356 = vmatpush1.msra.mxu0 %v1303
    %1357 = vmatprep.subr.mxu0 0.0
    %1358 = vmatpush1.msra.mxu0 %v1304
    %1359 = vmatprep.subr.mxu0 0.0
    %1360 = vmatpush1.msra.mxu0 %v1305
    %1361 = vmatprep.subr.mxu0 0.0
    %1362 = vmatpush1.msra.mxu0 %v1306
    %1363 = vmatprep.subr.mxu0 0.0
    %1364 = vmatpush1.msra.mxu0 %v1307
    %1365 = vmatprep.subr.mxu0 0.0
    %1366 = vmatpush1.msra.mxu0 %v1308
    %1367 = vmatprep.subr.mxu0 0.0
    %1368 = vmatpush1.msra.mxu0 %v1309
    %1369 = vmatprep.subr.mxu0 0.0
    %1370 = vmatpush1.msra.mxu0 %v1310
    %1371 = vmatprep.subr.mxu0 0.0
    %1372 = vmatpush1.msra.mxu0 %v1311
    %1373 = vmatprep.subr.mxu0 0.0
    %1374 = vmatpush1.msra.mxu0 %v1312
    %1375 = vmatprep.subr.mxu0 0.0
    %1376 = vmatpush1.msra.mxu0 %v1313
    %1377 = vmatprep.subr.mxu0 0.0
    %1378 = vmatpush1.msra.mxu0 %v1314
    %1379 = vmatprep.mubr.f32.mxu0 %v1083
    %1380 = vmatmul.mubr.f32.gmra.mrb[0].mxu0 %v1081
    %v1381 = vpop.f32.mrb[0].mxu0
    %v1382 = vadd.f32 0.0, %v1381
    %v1383 = vpop.f32.mrb[0].mxu0
    %1384 = vmatprep.mubr.f32.mxu0 %v1089
    %1385 = vmatmul.mubr.f32.gmra.mrb[0].mxu0 %v1087
    %v1386 = vpop.f32.mrb[0].mxu0
    %v1387 = vadd.f32 0.0, %v1386
    %v1388 = vpop.f32.mrb[0].mxu0
    %1389 = vdwg.mxu0
    %v1390 = vmax.f32 %v1275, %v1382
    %v1391 = vmax.f32 %v1280, %v1387
    %1392 = vmatprep.subr.mxu0 0.0
    %1393 = vmatpush1.msra.mxu0 %v1176
    %1394 = vmatprep.subr.mxu0 0.0
    %1395 = vmatpush1.msra.mxu0 %v1177
    %1396 = vmatprep.subr.mxu0 0.0
    %1397 = vmatpush1.msra.mxu0 %v1178
    %1398 = vmatprep.subr.mxu0 0.0
    %1399 = vmatpush1.msra.mxu0 %v1179
    %1400 = vmatprep.subr.mxu0 0.0
    %1401 = vmatpush1.msra.mxu0 %v1180
    %1402 = vmatprep.subr.mxu0 0.0
    %1403 = vmatpush1.msra.mxu0 %v1181
    %1404 = vmatprep.subr.mxu0 0.0
    %1405 = vmatpush1.msra.mxu0 %v1182
    %1406 = vmatprep.subr.mxu0 0.0
    %1407 = vmatpush1.msra.mxu0 %v1183
    %1408 = vmatprep.subr.mxu0 0.0
    %1409 = vmatpush1.msra.mxu0 %v1184
    %1410 = vmatprep.subr.mxu0 0.0
    %1411 = vmatpush1.msra.mxu0 %v1185
    %1412 = vmatprep.subr.mxu0 0.0
    %1413 = vmatpush1.msra.mxu0 %v1186
    %1414 = vmatprep.subr.mxu0 0.0
    %1415 = vmatpush1.msra.mxu0 %v1187
    %1416 = vmatprep.subr.mxu0 0.0
    %1417 = vmatpush1.msra.mxu0 %v1188
    %1418 = vmatprep.subr.mxu0 0.0
    %1419 = vmatpush1.msra.mxu0 %v1189
    %1420 = vmatprep.subr.mxu0 0.0
    %1421 = vmatpush1.msra.mxu0 %v1190
    %1422 = vmatprep.subr.mxu0 0.0
    %1423 = vmatpush1.msra.mxu0 %v1191
    %1424 = vmatprep.subr.mxu0 0.0
    %1425 = vmatpush1.msra.mxu0 %v1192
    %1426 = vmatprep.subr.mxu0 0.0
    %1427 = vmatpush1.msra.mxu0 %v1193
    %1428 = vmatprep.subr.mxu0 0.0
    %1429 = vmatpush1.msra.mxu0 %v1194
    %1430 = vmatprep.subr.mxu0 0.0
    %1431 = vmatpush1.msra.mxu0 %v1195
    %1432 = vmatprep.subr.mxu0 0.0
    %1433 = vmatpush1.msra.mxu0 %v1196
    %1434 = vmatprep.subr.mxu0 0.0
    %1435 = vmatpush1.msra.mxu0 %v1197
    %1436 = vmatprep.subr.mxu0 0.0
    %1437 = vmatpush1.msra.mxu0 %v1198
    %1438 = vmatprep.subr.mxu0 0.0
    %1439 = vmatpush1.msra.mxu0 %v1199
    %1440 = vmatprep.subr.mxu0 0.0
    %1441 = vmatpush1.msra.mxu0 %v1200
    %1442 = vmatprep.subr.mxu0 0.0
    %1443 = vmatpush1.msra.mxu0 %v1201
    %1444 = vmatprep.subr.mxu0 0.0
    %1445 = vmatpush1.msra.mxu0 %v1202
    %1446 = vmatprep.subr.mxu0 0.0
    %1447 = vmatpush1.msra.mxu0 %v1203
    %1448 = vmatprep.subr.mxu0 0.0
    %1449 = vmatpush1.msra.mxu0 %v1204
    %1450 = vmatprep.subr.mxu0 0.0
    %1451 = vmatpush1.msra.mxu0 %v1205
    %1452 = vmatprep.subr.mxu0 0.0
    %1453 = vmatpush1.msra.mxu0 %v1206
    %1454 = vmatprep.subr.mxu0 0.0
    %1455 = vmatpush1.msra.mxu0 %v1207
    %1456 = vmatprep.mubr.f32.mxu0 %v1168
    %1457 = vmatmul.mubr.f32.gmra.mrb[0].mxu0 %v1166
    %v1458 = vpop.f32.mrb[0].mxu0
    %v1459 = vadd.f32 0.0, %v1458
    %v1460 = vpop.f32.mrb[0].mxu0
    %1461 = vmatprep.mubr.f32.mxu0 %v1174
    %1462 = vmatmul.mubr.f32.gmra.mrb[0].mxu0 %v1172
    %v1463 = vpop.f32.mrb[0].mxu0
    %v1464 = vadd.f32 0.0, %v1463
    %v1465 = vpop.f32.mrb[0].mxu0
    %1466 = vdwg.mxu0
    %1467 = vmatprep.subr.mxu0 0.0
    %1468 = vmatpush1.msra.mxu0 %v1283
    %1469 = vmatprep.subr.mxu0 0.0
    %1470 = vmatpush1.msra.mxu0 %v1284
    %1471 = vmatprep.subr.mxu0 0.0
    %1472 = vmatpush1.msra.mxu0 %v1285
    %1473 = vmatprep.subr.mxu0 0.0
    %1474 = vmatpush1.msra.mxu0 %v1286
    %1475 = vmatprep.subr.mxu0 0.0
    %1476 = vmatpush1.msra.mxu0 %v1287
    %1477 = vmatprep.subr.mxu0 0.0
    %1478 = vmatpush1.msra.mxu0 %v1288
    %1479 = vmatprep.subr.mxu0 0.0
    %1480 = vmatpush1.msra.mxu0 %v1289
    %1481 = vmatprep.subr.mxu0 0.0
    %1482 = vmatpush1.msra.mxu0 %v1290
    %1483 = vmatprep.subr.mxu0 0.0
    %1484 = vmatpush1.msra.mxu0 %v1291
    %1485 = vmatprep.subr.mxu0 0.0
    %1486 = vmatpush1.msra.mxu0 %v1292
    %1487 = vmatprep.subr.mxu0 0.0
    %1488 = vmatpush1.msra.mxu0 %v1293
    %1489 = vmatprep.subr.mxu0 0.0
    %1490 = vmatpush1.msra.mxu0 %v1294
    %1491 = vmatprep.subr.mxu0 0.0
    %1492 = vmatpush1.msra.mxu0 %v1295
    %1493 = vmatprep.subr.mxu0 0.0
    %1494 = vmatpush1.msra.mxu0 %v1296
    %1495 = vmatprep.subr.mxu0 0.0
    %1496 = vmatpush1.msra.mxu0 %v1297
    %1497 = vmatprep.subr.mxu0 0.0
    %1498 = vmatpush1.msra.mxu0 %v1298
    %1499 = vmatprep.subr.mxu0 0.0
    %1500 = vmatpush1.msra.mxu0 %v1299
    %1501 = vmatprep.subr.mxu0 0.0
    %1502 = vmatpush1.msra.mxu0 %v1300
    %1503 = vmatprep.subr.mxu0 0.0
    %1504 = vmatpush1.msra.mxu0 %v1301
    %1505 = vmatprep.subr.mxu0 0.0
    %1506 = vmatpush1.msra.mxu0 %v1302
    %1507 = vmatprep.subr.mxu0 0.0
    %1508 = vmatpush1.msra.mxu0 %v1303
    %1509 = vmatprep.subr.mxu0 0.0
    %1510 = vmatpush1.msra.mxu0 %v1304
    %1511 = vmatprep.subr.mxu0 0.0
    %1512 = vmatpush1.msra.mxu0 %v1305
    %1513 = vmatprep.subr.mxu0 0.0
    %1514 = vmatpush1.msra.mxu0 %v1306
    %1515 = vmatprep.subr.mxu0 0.0
    %1516 = vmatpush1.msra.mxu0 %v1307
    %1517 = vmatprep.subr.mxu0 0.0
    %1518 = vmatpush1.msra.mxu0 %v1308
    %1519 = vmatprep.subr.mxu0 0.0
    %1520 = vmatpush1.msra.mxu0 %v1309
    %1521 = vmatprep.subr.mxu0 0.0
    %1522 = vmatpush1.msra.mxu0 %v1310
    %1523 = vmatprep.subr.mxu0 0.0
    %1524 = vmatpush1.msra.mxu0 %v1311
    %1525 = vmatprep.subr.mxu0 0.0
    %1526 = vmatpush1.msra.mxu0 %v1312
    %1527 = vmatprep.subr.mxu0 0.0
    %1528 = vmatpush1.msra.mxu0 %v1313
    %1529 = vmatprep.subr.mxu0 0.0
    %1530 = vmatpush1.msra.mxu0 %v1314
    %1531 = vmatprep.mubr.f32.mxu0 %v1168
    %1532 = vmatmul.mubr.f32.gmra.mrb[0].mxu0 %v1166
    %v1533 = vpop.f32.mrb[0].mxu0
    %v1534 = vadd.f32 0.0, %v1533
    %v1535 = vpop.f32.mrb[0].mxu0
    %1536 = vmatprep.mubr.f32.mxu0 %v1174
    %1537 = vmatmul.mubr.f32.gmra.mrb[0].mxu0 %v1172
    %v1538 = vpop.f32.mrb[0].mxu0
    %v1539 = vadd.f32 0.0, %v1538
    %v1540 = vpop.f32.mrb[0].mxu0
    %1541 = vdwg.mxu0
    %v1542 = vmax.f32 %v1459, %v1534
    %v1543 = vmax.f32 %v1464, %v1539
    %v1544 = vmax.f32 %v1390, %v1542
    %v1545 = vmax.f32 %v1391, %v1543
    %v1546 = vld [vmem:[%s8] sm:$0xff]
    %v1547 = vld [vmem:[%s8 + $0x8] sm:$0xff]
    %vm1548 = vcmask 130048
    %v1550 = vsel %vm1548, %v1546, 0
    %v1553 = vsel %vm1548, %v1547, 0
    %1555 = vmatprep.subr.mxu0 0.0
    %1556 = vmatpush1.msra.mxu0 %v1544
    %1557 = vmatprep.subr.mxu0 0.0
    %1558 = vmatpush1.msra.mxu0 %v1545
    %1559 = vmatprep.subr.mxu0 0.0
    %1560 = vmatpush1.msra.mxu0 0.0
    %1561 = vmatprep.subr.mxu0 0.0
    %1562 = vmatpush1.msra.mxu0 0.0
    %1563 = vmatprep.subr.mxu0 0.0
    %1564 = vmatpush1.msra.mxu0 0.0
    %1565 = vmatprep.subr.mxu0 0.0
    %1566 = vmatpush1.msra.mxu0 0.0
    %1567 = vmatprep.subr.mxu0 0.0
    %1568 = vmatpush1.msra.mxu0 0.0
    %1569 = vmatprep.subr.mxu0 0.0
    %1570 = vmatpush1.msra.mxu0 0.0
    %1571 = vmatprep.subr.mxu0 0.0
    %1572 = vmatpush1.msra.mxu0 0.0
    %1573 = vmatprep.subr.mxu0 0.0
    %1574 = vmatpush1.msra.mxu0 0.0
    %1575 = vmatprep.subr.mxu0 0.0
    %1576 = vmatpush1.msra.mxu0 0.0
    %1577 = vmatprep.subr.mxu0 0.0
    %1578 = vmatpush1.msra.mxu0 0.0
    %1579 = vmatprep.subr.mxu0 0.0
    %1580 = vmatpush1.msra.mxu0 0.0
    %1581 = vmatprep.subr.mxu0 0.0
    %1582 = vmatpush1.msra.mxu0 0.0
    %1583 = vmatprep.subr.mxu0 0.0
    %1584 = vmatpush1.msra.mxu0 0.0
    %1585 = vmatprep.subr.mxu0 0.0
    %1586 = vmatpush1.msra.mxu0 0.0
    %1587 = vmatprep.subr.mxu0 0.0
    %1588 = vmatpush1.msra.mxu0 0.0
    %1589 = vmatprep.subr.mxu0 0.0
    %1590 = vmatpush1.msra.mxu0 0.0
    %1591 = vmatprep.subr.mxu0 0.0
    %1592 = vmatpush1.msra.mxu0 0.0
    %1593 = vmatprep.subr.mxu0 0.0
    %1594 = vmatpush1.msra.mxu0 0.0
    %1595 = vmatprep.subr.mxu0 0.0
    %1596 = vmatpush1.msra.mxu0 0.0
    %1597 = vmatprep.subr.mxu0 0.0
    %1598 = vmatpush1.msra.mxu0 0.0
    %1599 = vmatprep.subr.mxu0 0.0
    %1600 = vmatpush1.msra.mxu0 0.0
    %1601 = vmatprep.subr.mxu0 0.0
    %1602 = vmatpush1.msra.mxu0 0.0
    %1603 = vmatprep.subr.mxu0 0.0
    %1604 = vmatpush1.msra.mxu0 0.0
    %1605 = vmatprep.subr.mxu0 0.0
    %1606 = vmatpush1.msra.mxu0 0.0
    %1607 = vmatprep.subr.mxu0 0.0
    %1608 = vmatpush1.msra.mxu0 0.0
    %1609 = vmatprep.subr.mxu0 0.0
    %1610 = vmatpush1.msra.mxu0 0.0
    %1611 = vmatprep.subr.mxu0 0.0
    %1612 = vmatpush1.msra.mxu0 0.0
    %1613 = vmatprep.subr.mxu0 0.0
    %1614 = vmatpush1.msra.mxu0 0.0
    %1615 = vmatprep.subr.mxu0 0.0
    %1616 = vmatpush1.msra.mxu0 0.0
    %1617 = vmatprep.subr.mxu0 0.0
    %1618 = vmatpush1.msra.mxu0 0.0
    %1619 = vmatprep.mubr.f32.mxu0 0.0
    %1620 = vmatmul.mubr.f32.gmra.mrb[0].mxu0 %v1550
    %v1621 = vpop.f32.mrb[0].mxu0
    %v1622 = vadd.f32 0.0, %v1621
    %v1623 = vpop.f32.mrb[0].mxu0
    %1624 = vmatprep.mubr.f32.mxu0 0.0
    %1625 = vmatmul.mubr.f32.gmra.mrb[0].mxu0 %v1553
    %v1626 = vpop.f32.mrb[0].mxu0
    %v1627 = vadd.f32 0.0, %v1626
    %v1628 = vpop.f32.mrb[0].mxu0
    %1629 = vdwg.mxu0
    %v1630 = vld [vmem:[#allocation16] sm:$0xff]
    %v1631 = vld [vmem:[#allocation16 + $0x8] sm:$0xff]
    %v1632 = vld [vmem:[#allocation16 + $0x10] sm:$0xff]
    %v1633 = vld [vmem:[#allocation16 + $0x18] sm:$0xff]
    %v1634 = vld [vmem:[#allocation16 + $0x20] sm:$0xff]
    %v1635 = vld [vmem:[#allocation16 + $0x28] sm:$0xff]
    %v1636 = vld [vmem:[#allocation16 + $0x30] sm:$0xff]
    %v1637 = vld [vmem:[#allocation16 + $0x38] sm:$0xff]
    %v1638 = vld [vmem:[#allocation16 + $0x40] sm:$0xff]
    %v1639 = vld [vmem:[#allocation16 + $0x48] sm:$0xff]
    %v1640 = vld [vmem:[#allocation16 + $0x50] sm:$0xff]
    %v1641 = vld [vmem:[#allocation16 + $0x58] sm:$0xff]
    %v1642 = vld [vmem:[#allocation16 + $0x60] sm:$0xff]
    %v1643 = vld [vmem:[#allocation16 + $0x68] sm:$0xff]
    %v1644 = vld [vmem:[#allocation16 + $0x70] sm:$0xff]
    %v1645 = vld [vmem:[#allocation16 + $0x78] sm:$0xff]
    %s1646 = scalar_lea.vmem %s8, 16
    %v1647 = vld [vmem:[%s1646] sm:$0xff]
    %v1648 = vld [vmem:[%s1646 + $0x8] sm:$0xff]
    %v1650 = vsel %vm1548, %v1647, 0
    %v1653 = vsel %vm1548, %v1648, 0
    %1655 = vmatprep.subr.mxu0 0.0
    %1656 = vmatpush1.msra.mxu0 %v1544
    %1657 = vmatprep.subr.mxu0 0.0
    %1658 = vmatpush1.msra.mxu0 %v1545
    %1659 = vmatprep.subr.mxu0 0.0
    %1660 = vmatpush1.msra.mxu0 0.0
    %1661 = vmatprep.subr.mxu0 0.0
    %1662 = vmatpush1.msra.mxu0 0.0
    %1663 = vmatprep.subr.mxu0 0.0
    %1664 = vmatpush1.msra.mxu0 0.0
    %1665 = vmatprep.subr.mxu0 0.0
    %1666 = vmatpush1.msra.mxu0 0.0
    %1667 = vmatprep.subr.mxu0 0.0
    %1668 = vmatpush1.msra.mxu0 0.0
    %1669 = vmatprep.subr.mxu0 0.0
    %1670 = vmatpush1.msra.mxu0 0.0
    %1671 = vmatprep.subr.mxu0 0.0
    %1672 = vmatpush1.msra.mxu0 0.0
    %1673 = vmatprep.subr.mxu0 0.0
    %1674 = vmatpush1.msra.mxu0 0.0
    %1675 = vmatprep.subr.mxu0 0.0
    %1676 = vmatpush1.msra.mxu0 0.0
    %1677 = vmatprep.subr.mxu0 0.0
    %1678 = vmatpush1.msra.mxu0 0.0
    %1679 = vmatprep.subr.mxu0 0.0
    %1680 = vmatpush1.msra.mxu0 0.0
    %1681 = vmatprep.subr.mxu0 0.0
    %1682 = vmatpush1.msra.mxu0 0.0
    %1683 = vmatprep.subr.mxu0 0.0
    %1684 = vmatpush1.msra.mxu0 0.0
    %1685 = vmatprep.subr.mxu0 0.0
    %1686 = vmatpush1.msra.mxu0 0.0
    %1687 = vmatprep.subr.mxu0 0.0
    %1688 = vmatpush1.msra.mxu0 0.0
    %1689 = vmatprep.subr.mxu0 0.0
    %1690 = vmatpush1.msra.mxu0 0.0
    %1691 = vmatprep.subr.mxu0 0.0
    %1692 = vmatpush1.msra.mxu0 0.0
    %1693 = vmatprep.subr.mxu0 0.0
    %1694 = vmatpush1.msra.mxu0 0.0
    %1695 = vmatprep.subr.mxu0 0.0
    %1696 = vmatpush1.msra.mxu0 0.0
    %1697 = vmatprep.subr.mxu0 0.0
    %1698 = vmatpush1.msra.mxu0 0.0
    %1699 = vmatprep.subr.mxu0 0.0
    %1700 = vmatpush1.msra.mxu0 0.0
    %1701 = vmatprep.subr.mxu0 0.0
    %1702 = vmatpush1.msra.mxu0 0.0
    %1703 = vmatprep.subr.mxu0 0.0
    %1704 = vmatpush1.msra.mxu0 0.0
    %1705 = vmatprep.subr.mxu0 0.0
    %1706 = vmatpush1.msra.mxu0 0.0
    %1707 = vmatprep.subr.mxu0 0.0
    %1708 = vmatpush1.msra.mxu0 0.0
    %1709 = vmatprep.subr.mxu0 0.0
    %1710 = vmatpush1.msra.mxu0 0.0
    %1711 = vmatprep.subr.mxu0 0.0
    %1712 = vmatpush1.msra.mxu0 0.0
    %1713 = vmatprep.subr.mxu0 0.0
    %1714 = vmatpush1.msra.mxu0 0.0
    %1715 = vmatprep.subr.mxu0 0.0
    %1716 = vmatpush1.msra.mxu0 0.0
    %1717 = vmatprep.subr.mxu0 0.0
    %1718 = vmatpush1.msra.mxu0 0.0
    %1719 = vmatprep.mubr.f32.mxu0 0.0
    %1720 = vmatmul.mubr.f32.gmra.mrb[0].mxu0 %v1650
    %v1721 = vpop.f32.mrb[0].mxu0
    %v1722 = vadd.f32 0.0, %v1721
    %v1723 = vpop.f32.mrb[0].mxu0
    %1724 = vmatprep.mubr.f32.mxu0 0.0
    %1725 = vmatmul.mubr.f32.gmra.mrb[0].mxu0 %v1653
    %v1726 = vpop.f32.mrb[0].mxu0
    %v1727 = vadd.f32 0.0, %v1726
    %v1728 = vpop.f32.mrb[0].mxu0
    %1729 = vdwg.mxu0
    %s1730 = scalar_lea.vmem [#allocation16], 128
    %v1731 = vld [vmem:[%s1730] sm:$0xff]
    %v1732 = vld [vmem:[%s1730 + $0x8] sm:$0xff]
    %v1733 = vld [vmem:[%s1730 + $0x10] sm:$0xff]
    %v1734 = vld [vmem:[%s1730 + $0x18] sm:$0xff]
    %v1735 = vld [vmem:[%s1730 + $0x20] sm:$0xff]
    %v1736 = vld [vmem:[%s1730 + $0x28] sm:$0xff]
    %v1737 = vld [vmem:[%s1730 + $0x30] sm:$0xff]
    %v1738 = vld [vmem:[%s1730 + $0x38] sm:$0xff]
    %v1739 = vld [vmem:[%s1730 + $0x40] sm:$0xff]
    %v1740 = vld [vmem:[%s1730 + $0x48] sm:$0xff]
    %v1741 = vld [vmem:[%s1730 + $0x50] sm:$0xff]
    %v1742 = vld [vmem:[%s1730 + $0x58] sm:$0xff]
    %v1743 = vld [vmem:[%s1730 + $0x60] sm:$0xff]
    %v1744 = vld [vmem:[%s1730 + $0x68] sm:$0xff]
    %v1745 = vld [vmem:[%s1730 + $0x70] sm:$0xff]
    %v1746 = vld [vmem:[%s1730 + $0x78] sm:$0xff]
    %1747 = vmatprep.subr.mxu0 0.0
    %1748 = vmatpush1.msra.mxu0 %v1731
    %1749 = vmatprep.subr.mxu0 0.0
    %1750 = vmatpush1.msra.mxu0 %v1732
    %1751 = vmatprep.subr.mxu0 0.0
    %1752 = vmatpush1.msra.mxu0 %v1733
    %1753 = vmatprep.subr.mxu0 0.0
    %1754 = vmatpush1.msra.mxu0 %v1734
    %1755 = vmatprep.subr.mxu0 0.0
    %1756 = vmatpush1.msra.mxu0 %v1735
    %1757 = vmatprep.subr.mxu0 0.0
    %1758 = vmatpush1.msra.mxu0 %v1736
    %1759 = vmatprep.subr.mxu0 0.0
    %1760 = vmatpush1.msra.mxu0 %v1737
    %1761 = vmatprep.subr.mxu0 0.0
    %1762 = vmatpush1.msra.mxu0 %v1738
    %1763 = vmatprep.subr.mxu0 0.0
    %1764 = vmatpush1.msra.mxu0 %v1739
    %1765 = vmatprep.subr.mxu0 0.0
    %1766 = vmatpush1.msra.mxu0 %v1740
    %1767 = vmatprep.subr.mxu0 0.0
    %1768 = vmatpush1.msra.mxu0 %v1741
    %1769 = vmatprep.subr.mxu0 0.0
    %1770 = vmatpush1.msra.mxu0 %v1742
    %1771 = vmatprep.subr.mxu0 0.0
    %1772 = vmatpush1.msra.mxu0 %v1743
    %1773 = vmatprep.subr.mxu0 0.0
    %1774 = vmatpush1.msra.mxu0 %v1744
    %1775 = vmatprep.subr.mxu0 0.0
    %1776 = vmatpush1.msra.mxu0 %v1745
    %1777 = vmatprep.subr.mxu0 0.0
    %1778 = vmatpush1.msra.mxu0 %v1746
    %1779 = vmatprep.subr.mxu0 0.0
    %1780 = vmatpush1.msra.mxu0 0.0
    %1781 = vmatprep.subr.mxu0 0.0
    %1782 = vmatpush1.msra.mxu0 0.0
    %1783 = vmatprep.subr.mxu0 0.0
    %1784 = vmatpush1.msra.mxu0 0.0
    %1785 = vmatprep.subr.mxu0 0.0
    %1786 = vmatpush1.msra.mxu0 0.0
    %1787 = vmatprep.subr.mxu0 0.0
    %1788 = vmatpush1.msra.mxu0 0.0
    %1789 = vmatprep.subr.mxu0 0.0
    %1790 = vmatpush1.msra.mxu0 0.0
    %1791 = vmatprep.subr.mxu0 0.0
    %1792 = vmatpush1.msra.mxu0 0.0
    %1793 = vmatprep.subr.mxu0 0.0
    %1794 = vmatpush1.msra.mxu0 0.0
    %1795 = vmatprep.subr.mxu0 0.0
    %1796 = vmatpush1.msra.mxu0 0.0
    %1797 = vmatprep.subr.mxu0 0.0
    %1798 = vmatpush1.msra.mxu0 0.0
    %1799 = vmatprep.subr.mxu0 0.0
    %1800 = vmatpush1.msra.mxu0 0.0
    %1801 = vmatprep.subr.mxu0 0.0
    %1802 = vmatpush1.msra.mxu0 0.0
    %1803 = vmatprep.subr.mxu0 0.0
    %1804 = vmatpush1.msra.mxu0 0.0
    %1805 = vmatprep.subr.mxu0 0.0
    %1806 = vmatpush1.msra.mxu0 0.0
    %1807 = vmatprep.subr.mxu0 0.0
    %1808 = vmatpush1.msra.mxu0 0.0
    %1809 = vmatprep.subr.mxu0 0.0
    %1810 = vmatpush1.msra.mxu0 0.0
    %1811 = vmatprep.mubr.f32.mxu0 0.0
    %1812 = vmatmul.mubr.f32.gmra.mrb[0].mxu0 %v1722
    %v1813 = vpop.f32.mrb[0].mxu0
    %v1814 = vadd.f32 0.0, %v1813
    %v1815 = vpop.f32.mrb[0].mxu0
    %1816 = vmatprep.mubr.f32.mxu0 0.0
    %1817 = vmatmul.mubr.f32.gmra.mrb[0].mxu0 %v1727
    %v1818 = vpop.f32.mrb[0].mxu0
    %v1819 = vadd.f32 0.0, %v1818
    %v1820 = vpop.f32.mrb[0].mxu0
    %1821 = vdwg.mxu0
    %1822 = vmatprep.subr.mxu0 0.0
    %1823 = vmatpush1.msra.mxu0 %v1630
    %1824 = vmatprep.subr.mxu0 0.0
    %1825 = vmatpush1.msra.mxu0 %v1631
    %1826 = vmatprep.subr.mxu0 0.0
    %1827 = vmatpush1.msra.mxu0 %v1632
    %1828 = vmatprep.subr.mxu0 0.0
    %1829 = vmatpush1.msra.mxu0 %v1633
    %1830 = vmatprep.subr.mxu0 0.0
    %1831 = vmatpush1.msra.mxu0 %v1634
    %1832 = vmatprep.subr.mxu0 0.0
    %1833 = vmatpush1.msra.mxu0 %v1635
    %1834 = vmatprep.subr.mxu0 0.0
    %1835 = vmatpush1.msra.mxu0 %v1636
    %1836 = vmatprep.subr.mxu0 0.0
    %1837 = vmatpush1.msra.mxu0 %v1637
    %1838 = vmatprep.subr.mxu0 0.0
    %1839 = vmatpush1.msra.mxu0 %v1638
    %1840 = vmatprep.subr.mxu0 0.0
    %1841 = vmatpush1.msra.mxu0 %v1639
    %1842 = vmatprep.subr.mxu0 0.0
    %1843 = vmatpush1.msra.mxu0 %v1640
    %1844 = vmatprep.subr.mxu0 0.0
    %1845 = vmatpush1.msra.mxu0 %v1641
    %1846 = vmatprep.subr.mxu0 0.0
    %1847 = vmatpush1.msra.mxu0 %v1642
    %1848 = vmatprep.subr.mxu0 0.0
    %1849 = vmatpush1.msra.mxu0 %v1643
    %1850 = vmatprep.subr.mxu0 0.0
    %1851 = vmatpush1.msra.mxu0 %v1644
    %1852 = vmatprep.subr.mxu0 0.0
    %1853 = vmatpush1.msra.mxu0 %v1645
    %1854 = vmatprep.subr.mxu0 0.0
    %1855 = vmatpush1.msra.mxu0 0.0
    %1856 = vmatprep.subr.mxu0 0.0
    %1857 = vmatpush1.msra.mxu0 0.0
    %1858 = vmatprep.subr.mxu0 0.0
    %1859 = vmatpush1.msra.mxu0 0.0
    %1860 = vmatprep.subr.mxu0 0.0
    %1861 = vmatpush1.msra.mxu0 0.0
    %1862 = vmatprep.subr.mxu0 0.0
    %1863 = vmatpush1.msra.mxu0 0.0
    %1864 = vmatprep.subr.mxu0 0.0
    %1865 = vmatpush1.msra.mxu0 0.0
    %1866 = vmatprep.subr.mxu0 0.0
    %1867 = vmatpush1.msra.mxu0 0.0
    %1868 = vmatprep.subr.mxu0 0.0
    %1869 = vmatpush1.msra.mxu0 0.0
    %1870 = vmatprep.subr.mxu0 0.0
    %1871 = vmatpush1.msra.mxu0 0.0
    %1872 = vmatprep.subr.mxu0 0.0
    %1873 = vmatpush1.msra.mxu0 0.0
    %1874 = vmatprep.subr.mxu0 0.0
    %1875 = vmatpush1.msra.mxu0 0.0
    %1876 = vmatprep.subr.mxu0 0.0
    %1877 = vmatpush1.msra.mxu0 0.0
    %1878 = vmatprep.subr.mxu0 0.0
    %1879 = vmatpush1.msra.mxu0 0.0
    %1880 = vmatprep.subr.mxu0 0.0
    %1881 = vmatpush1.msra.mxu0 0.0
    %1882 = vmatprep.subr.mxu0 0.0
    %1883 = vmatpush1.msra.mxu0 0.0
    %1884 = vmatprep.subr.mxu0 0.0
    %1885 = vmatpush1.msra.mxu0 0.0
    %1886 = vmatprep.mubr.f32.mxu0 0.0
    %1887 = vmatmul.mubr.f32.gmra.mrb[0].mxu0 %v1622
    %v1888 = vpop.f32.mrb[0].mxu0
    %v1889 = vadd.f32 %v1814, %v1888
    %v1890 = vpop.f32.mrb[0].mxu0
    %1891 = vmatprep.mubr.f32.mxu0 0.0
    %1892 = vmatmul.mubr.f32.gmra.mrb[0].mxu0 %v1627
    %v1893 = vpop.f32.mrb[0].mxu0
    %v1894 = vadd.f32 %v1819, %v1893
    %v1895 = vpop.f32.mrb[0].mxu0
    %1896 = vdwg.mxu0
    %s1897 = scalar_lea.vmem %s8, 32
    %v1898 = vld [vmem:[%s1897] sm:$0xff]
    %v1899 = vld [vmem:[%s1897 + $0x8] sm:$0xff]
    %v1901 = vsel %vm1548, %v1898, 0
    %v1904 = vsel %vm1548, %v1899, 0
    %1906 = vmatprep.subr.mxu0 0.0
    %1907 = vmatpush1.msra.mxu0 %v1544
    %1908 = vmatprep.subr.mxu0 0.0
    %1909 = vmatpush1.msra.mxu0 %v1545
    %1910 = vmatprep.subr.mxu0 0.0
    %1911 = vmatpush1.msra.mxu0 0.0
    %1912 = vmatprep.subr.mxu0 0.0
    %1913 = vmatpush1.msra.mxu0 0.0
    %1914 = vmatprep.subr.mxu0 0.0
    %1915 = vmatpush1.msra.mxu0 0.0
    %1916 = vmatprep.subr.mxu0 0.0
    %1917 = vmatpush1.msra.mxu0 0.0
    %1918 = vmatprep.subr.mxu0 0.0
    %1919 = vmatpush1.msra.mxu0 0.0
    %1920 = vmatprep.subr.mxu0 0.0
    %1921 = vmatpush1.msra.mxu0 0.0
    %1922 = vmatprep.subr.mxu0 0.0
    %1923 = vmatpush1.msra.mxu0 0.0
    %1924 = vmatprep.subr.mxu0 0.0
    %1925 = vmatpush1.msra.mxu0 0.0
    %1926 = vmatprep.subr.mxu0 0.0
    %1927 = vmatpush1.msra.mxu0 0.0
    %1928 = vmatprep.subr.mxu0 0.0
    %1929 = vmatpush1.msra.mxu0 0.0
    %1930 = vmatprep.subr.mxu0 0.0
    %1931 = vmatpush1.msra.mxu0 0.0
    %1932 = vmatprep.subr.mxu0 0.0
    %1933 = vmatpush1.msra.mxu0 0.0
    %1934 = vmatprep.subr.mxu0 0.0
    %1935 = vmatpush1.msra.mxu0 0.0
    %1936 = vmatprep.subr.mxu0 0.0
    %1937 = vmatpush1.msra.mxu0 0.0
    %1938 = vmatprep.subr.mxu0 0.0
    %1939 = vmatpush1.msra.mxu0 0.0
    %1940 = vmatprep.subr.mxu0 0.0
    %1941 = vmatpush1.msra.mxu0 0.0
    %1942 = vmatprep.subr.mxu0 0.0
    %1943 = vmatpush1.msra.mxu0 0.0
    %1944 = vmatprep.subr.mxu0 0.0
    %1945 = vmatpush1.msra.mxu0 0.0
    %1946 = vmatprep.subr.mxu0 0.0
    %1947 = vmatpush1.msra.mxu0 0.0
    %1948 = vmatprep.subr.mxu0 0.0
    %1949 = vmatpush1.msra.mxu0 0.0
    %1950 = vmatprep.subr.mxu0 0.0
    %1951 = vmatpush1.msra.mxu0 0.0
    %1952 = vmatprep.subr.mxu0 0.0
    %1953 = vmatpush1.msra.mxu0 0.0
    %1954 = vmatprep.subr.mxu0 0.0
    %1955 = vmatpush1.msra.mxu0 0.0
    %1956 = vmatprep.subr.mxu0 0.0
    %1957 = vmatpush1.msra.mxu0 0.0
    %1958 = vmatprep.subr.mxu0 0.0
    %1959 = vmatpush1.msra.mxu0 0.0
    %1960 = vmatprep.subr.mxu0 0.0
    %1961 = vmatpush1.msra.mxu0 0.0
    %1962 = vmatprep.subr.mxu0 0.0
    %1963 = vmatpush1.msra.mxu0 0.0
    %1964 = vmatprep.subr.mxu0 0.0
    %1965 = vmatpush1.msra.mxu0 0.0
    %1966 = vmatprep.subr.mxu0 0.0
    %1967 = vmatpush1.msra.mxu0 0.0
    %1968 = vmatprep.subr.mxu0 0.0
    %1969 = vmatpush1.msra.mxu0 0.0
    %1970 = vmatprep.mubr.f32.mxu0 0.0
    %1971 = vmatmul.mubr.f32.gmra.mrb[0].mxu0 %v1901
    %v1972 = vpop.f32.mrb[0].mxu0
    %v1973 = vadd.f32 0.0, %v1972
    %v1974 = vpop.f32.mrb[0].mxu0
    %1975 = vmatprep.mubr.f32.mxu0 0.0
    %1976 = vmatmul.mubr.f32.gmra.mrb[0].mxu0 %v1904
    %v1977 = vpop.f32.mrb[0].mxu0
    %v1978 = vadd.f32 0.0, %v1977
    %v1979 = vpop.f32.mrb[0].mxu0
    %1980 = vdwg.mxu0
    %s1981 = scalar_lea.vmem [#allocation16], 256
    %v1982 = vld [vmem:[%s1981] sm:$0xff]
    %v1983 = vld [vmem:[%s1981 + $0x8] sm:$0xff]
    %v1984 = vld [vmem:[%s1981 + $0x10] sm:$0xff]
    %v1985 = vld [vmem:[%s1981 + $0x18] sm:$0xff]
    %v1986 = vld [vmem:[%s1981 + $0x20] sm:$0xff]
    %v1987 = vld [vmem:[%s1981 + $0x28] sm:$0xff]
    %v1988 = vld [vmem:[%s1981 + $0x30] sm:$0xff]
    %v1989 = vld [vmem:[%s1981 + $0x38] sm:$0xff]
    %v1990 = vld [vmem:[%s1981 + $0x40] sm:$0xff]
    %v1991 = vld [vmem:[%s1981 + $0x48] sm:$0xff]
    %v1992 = vld [vmem:[%s1981 + $0x50] sm:$0xff]
    %v1993 = vld [vmem:[%s1981 + $0x58] sm:$0xff]
    %v1994 = vld [vmem:[%s1981 + $0x60] sm:$0xff]
    %v1995 = vld [vmem:[%s1981 + $0x68] sm:$0xff]
    %v1996 = vld [vmem:[%s1981 + $0x70] sm:$0xff]
    %v1997 = vld [vmem:[%s1981 + $0x78] sm:$0xff]
    %1998 = vmatprep.subr.mxu0 0.0
    %1999 = vmatpush1.msra.mxu0 %v1982
    %2000 = vmatprep.subr.mxu0 0.0
    %2001 = vmatpush1.msra.mxu0 %v1983
    %2002 = vmatprep.subr.mxu0 0.0
    %2003 = vmatpush1.msra.mxu0 %v1984
    %2004 = vmatprep.subr.mxu0 0.0
    %2005 = vmatpush1.msra.mxu0 %v1985
    %2006 = vmatprep.subr.mxu0 0.0
    %2007 = vmatpush1.msra.mxu0 %v1986
    %2008 = vmatprep.subr.mxu0 0.0
    %2009 = vmatpush1.msra.mxu0 %v1987
    %2010 = vmatprep.subr.mxu0 0.0
    %2011 = vmatpush1.msra.mxu0 %v1988
    %2012 = vmatprep.subr.mxu0 0.0
    %2013 = vmatpush1.msra.mxu0 %v1989
    %2014 = vmatprep.subr.mxu0 0.0
    %2015 = vmatpush1.msra.mxu0 %v1990
    %2016 = vmatprep.subr.mxu0 0.0
    %2017 = vmatpush1.msra.mxu0 %v1991
    %2018 = vmatprep.subr.mxu0 0.0
    %2019 = vmatpush1.msra.mxu0 %v1992
    %2020 = vmatprep.subr.mxu0 0.0
    %2021 = vmatpush1.msra.mxu0 %v1993
    %2022 = vmatprep.subr.mxu0 0.0
    %2023 = vmatpush1.msra.mxu0 %v1994
    %2024 = vmatprep.subr.mxu0 0.0
    %2025 = vmatpush1.msra.mxu0 %v1995
    %2026 = vmatprep.subr.mxu0 0.0
    %2027 = vmatpush1.msra.mxu0 %v1996
    %2028 = vmatprep.subr.mxu0 0.0
    %2029 = vmatpush1.msra.mxu0 %v1997
    %2030 = vmatprep.subr.mxu0 0.0
    %2031 = vmatpush1.msra.mxu0 0.0
    %2032 = vmatprep.subr.mxu0 0.0
    %2033 = vmatpush1.msra.mxu0 0.0
    %2034 = vmatprep.subr.mxu0 0.0
    %2035 = vmatpush1.msra.mxu0 0.0
    %2036 = vmatprep.subr.mxu0 0.0
    %2037 = vmatpush1.msra.mxu0 0.0
    %2038 = vmatprep.subr.mxu0 0.0
    %2039 = vmatpush1.msra.mxu0 0.0
    %2040 = vmatprep.subr.mxu0 0.0
    %2041 = vmatpush1.msra.mxu0 0.0
    %2042 = vmatprep.subr.mxu0 0.0
    %2043 = vmatpush1.msra.mxu0 0.0
    %2044 = vmatprep.subr.mxu0 0.0
    %2045 = vmatpush1.msra.mxu0 0.0
    %2046 = vmatprep.subr.mxu0 0.0
    %2047 = vmatpush1.msra.mxu0 0.0
    %2048 = vmatprep.subr.mxu0 0.0
    %2049 = vmatpush1.msra.mxu0 0.0
    %2050 = vmatprep.subr.mxu0 0.0
    %2051 = vmatpush1.msra.mxu0 0.0
    %2052 = vmatprep.subr.mxu0 0.0
    %2053 = vmatpush1.msra.mxu0 0.0
    %2054 = vmatprep.subr.mxu0 0.0
    %2055 = vmatpush1.msra.mxu0 0.0
    %2056 = vmatprep.subr.mxu0 0.0
    %2057 = vmatpush1.msra.mxu0 0.0
    %2058 = vmatprep.subr.mxu0 0.0
    %2059 = vmatpush1.msra.mxu0 0.0
    %2060 = vmatprep.subr.mxu0 0.0
    %2061 = vmatpush1.msra.mxu0 0.0
    %2062 = vmatprep.mubr.f32.mxu0 0.0
    %2063 = vmatmul.mubr.f32.gmra.mrb[0].mxu0 %v1973
    %v2064 = vpop.f32.mrb[0].mxu0
    %v2065 = vadd.f32 0.0, %v2064
    %v2066 = vpop.f32.mrb[0].mxu0
    %2067 = vmatprep.mubr.f32.mxu0 0.0
    %2068 = vmatmul.mubr.f32.gmra.mrb[0].mxu0 %v1978
    %v2069 = vpop.f32.mrb[0].mxu0
    %v2070 = vadd.f32 0.0, %v2069
    %v2071 = vpop.f32.mrb[0].mxu0
    %2072 = vdwg.mxu0
    %v2073 = vadd.f32 %v1889, %v2065
    %v2074 = vadd.f32 %v1894, %v2070
    %v2075 = vld [vmem:[#allocation17] sm:$0x1]
    %v2077 = vlaneseq
    %v2078 = vshrl.u32 %v2077, 7
    %v2079 = vsub.s32 0, %v2078
    %v2080 = vrot.slane %v2075, %v2079
    %v2082 = vadd.f32 %v2073, %v2080
    %v2083 = vadd.f32 %v2074, %v2080
    %v2084 = vmax.f32 %v2082, 0.0
    %v2085 = vmax.f32 %v2083, 0.0
    %v2086 = vld [vmem:[#allocation19] sm:$0xff]
    %v2087 = vld [vmem:[#allocation19 + $0x8] sm:$0xff]
    %v2089 = vsel %vm1548, %v2086, 0
    %v2092 = vsel %vm1548, %v2087, 0
    %2094 = vmatprep.subr.mxu0 0.0
    %2095 = vmatpush1.msra.mxu0 %v2084
    %2096 = vmatprep.subr.mxu0 0.0
    %2097 = vmatpush1.msra.mxu0 %v2085
    %2098 = vmatprep.subr.mxu0 0.0
    %2099 = vmatpush1.msra.mxu0 0.0
    %2100 = vmatprep.subr.mxu0 0.0
    %2101 = vmatpush1.msra.mxu0 0.0
    %2102 = vmatprep.subr.mxu0 0.0
    %2103 = vmatpush1.msra.mxu0 0.0
    %2104 = vmatprep.subr.mxu0 0.0
    %2105 = vmatpush1.msra.mxu0 0.0
    %2106 = vmatprep.subr.mxu0 0.0
    %2107 = vmatpush1.msra.mxu0 0.0
    %2108 = vmatprep.subr.mxu0 0.0
    %2109 = vmatpush1.msra.mxu0 0.0
    %2110 = vmatprep.subr.mxu0 0.0
    %2111 = vmatpush1.msra.mxu0 0.0
    %2112 = vmatprep.subr.mxu0 0.0
    %2113 = vmatpush1.msra.mxu0 0.0
    %2114 = vmatprep.subr.mxu0 0.0
    %2115 = vmatpush1.msra.mxu0 0.0
    %2116 = vmatprep.subr.mxu0 0.0
    %2117 = vmatpush1.msra.mxu0 0.0
    %2118 = vmatprep.subr.mxu0 0.0
    %2119 = vmatpush1.msra.mxu0 0.0
    %2120 = vmatprep.subr.mxu0 0.0
    %2121 = vmatpush1.msra.mxu0 0.0
    %2122 = vmatprep.subr.mxu0 0.0
    %2123 = vmatpush1.msra.mxu0 0.0
    %2124 = vmatprep.subr.mxu0 0.0
    %2125 = vmatpush1.msra.mxu0 0.0
    %2126 = vmatprep.subr.mxu0 0.0
    %2127 = vmatpush1.msra.mxu0 0.0
    %2128 = vmatprep.subr.mxu0 0.0
    %2129 = vmatpush1.msra.mxu0 0.0
    %2130 = vmatprep.subr.mxu0 0.0
    %2131 = vmatpush1.msra.mxu0 0.0
    %2132 = vmatprep.subr.mxu0 0.0
    %2133 = vmatpush1.msra.mxu0 0.0
    %2134 = vmatprep.subr.mxu0 0.0
    %2135 = vmatpush1.msra.mxu0 0.0
    %2136 = vmatprep.subr.mxu0 0.0
    %2137 = vmatpush1.msra.mxu0 0.0
    %2138 = vmatprep.subr.mxu0 0.0
    %2139 = vmatpush1.msra.mxu0 0.0
    %2140 = vmatprep.subr.mxu0 0.0
    %2141 = vmatpush1.msra.mxu0 0.0
    %2142 = vmatprep.subr.mxu0 0.0
    %2143 = vmatpush1.msra.mxu0 0.0
    %2144 = vmatprep.subr.mxu0 0.0
    %2145 = vmatpush1.msra.mxu0 0.0
    %2146 = vmatprep.subr.mxu0 0.0
    %2147 = vmatpush1.msra.mxu0 0.0
    %2148 = vmatprep.subr.mxu0 0.0
    %2149 = vmatpush1.msra.mxu0 0.0
    %2150 = vmatprep.subr.mxu0 0.0
    %2151 = vmatpush1.msra.mxu0 0.0
    %2152 = vmatprep.subr.mxu0 0.0
    %2153 = vmatpush1.msra.mxu0 0.0
    %2154 = vmatprep.subr.mxu0 0.0
    %2155 = vmatpush1.msra.mxu0 0.0
    %2156 = vmatprep.subr.mxu0 0.0
    %2157 = vmatpush1.msra.mxu0 0.0
    %2158 = vmatprep.mubr.f32.mxu0 0.0
    %2159 = vmatmul.mubr.f32.gmra.mrb[0].mxu0 %v2089
    %v2160 = vpop.f32.mrb[0].mxu0
    %v2161 = vadd.f32 0.0, %v2160
    %v2162 = vpop.f32.mrb[0].mxu0
    %2163 = vmatprep.mubr.f32.mxu0 0.0
    %2164 = vmatmul.mubr.f32.gmra.mrb[0].mxu0 %v2092
    %v2165 = vpop.f32.mrb[0].mxu0
    %v2166 = vadd.f32 0.0, %v2165
    %v2167 = vpop.f32.mrb[0].mxu0
    %2168 = vdwg.mxu0
    %v2169 = vld [vmem:[#allocation20] sm:$0xff]
    %v2170 = vld [vmem:[#allocation20 + $0x8] sm:$0xff]
    %v2171 = vld [vmem:[#allocation20 + $0x10] sm:$0xff]
    %v2172 = vld [vmem:[#allocation20 + $0x18] sm:$0xff]
    %v2173 = vld [vmem:[#allocation20 + $0x20] sm:$0xff]
    %v2174 = vld [vmem:[#allocation20 + $0x28] sm:$0xff]
    %v2175 = vld [vmem:[#allocation20 + $0x30] sm:$0xff]
    %v2176 = vld [vmem:[#allocation20 + $0x38] sm:$0xff]
    %v2177 = vld [vmem:[#allocation20 + $0x40] sm:$0xff]
    %v2178 = vld [vmem:[#allocation20 + $0x48] sm:$0xff]
    %v2179 = vld [vmem:[#allocation20 + $0x50] sm:$0xff]
    %v2180 = vld [vmem:[#allocation20 + $0x58] sm:$0xff]
    %v2181 = vld [vmem:[#allocation20 + $0x60] sm:$0xff]
    %v2182 = vld [vmem:[#allocation20 + $0x68] sm:$0xff]
    %v2183 = vld [vmem:[#allocation20 + $0x70] sm:$0xff]
    %v2184 = vld [vmem:[#allocation20 + $0x78] sm:$0xff]
    %s2185 = scalar_lea.vmem [#allocation19], 16
    %v2186 = vld [vmem:[%s2185] sm:$0xff]
    %v2187 = vld [vmem:[%s2185 + $0x8] sm:$0xff]
    %v2189 = vsel %vm1548, %v2186, 0
    %v2192 = vsel %vm1548, %v2187, 0
    %2194 = vmatprep.subr.mxu0 0.0
    %2195 = vmatpush1.msra.mxu0 %v2084
    %2196 = vmatprep.subr.mxu0 0.0
    %2197 = vmatpush1.msra.mxu0 %v2085
    %2198 = vmatprep.subr.mxu0 0.0
    %2199 = vmatpush1.msra.mxu0 0.0
    %2200 = vmatprep.subr.mxu0 0.0
    %2201 = vmatpush1.msra.mxu0 0.0
    %2202 = vmatprep.subr.mxu0 0.0
    %2203 = vmatpush1.msra.mxu0 0.0
    %2204 = vmatprep.subr.mxu0 0.0
    %2205 = vmatpush1.msra.mxu0 0.0
    %2206 = vmatprep.subr.mxu0 0.0
    %2207 = vmatpush1.msra.mxu0 0.0
    %2208 = vmatprep.subr.mxu0 0.0
    %2209 = vmatpush1.msra.mxu0 0.0
    %2210 = vmatprep.subr.mxu0 0.0
    %2211 = vmatpush1.msra.mxu0 0.0
    %2212 = vmatprep.subr.mxu0 0.0
    %2213 = vmatpush1.msra.mxu0 0.0
    %2214 = vmatprep.subr.mxu0 0.0
    %2215 = vmatpush1.msra.mxu0 0.0
    %2216 = vmatprep.subr.mxu0 0.0
    %2217 = vmatpush1.msra.mxu0 0.0
    %2218 = vmatprep.subr.mxu0 0.0
    %2219 = vmatpush1.msra.mxu0 0.0
    %2220 = vmatprep.subr.mxu0 0.0
    %2221 = vmatpush1.msra.mxu0 0.0
    %2222 = vmatprep.subr.mxu0 0.0
    %2223 = vmatpush1.msra.mxu0 0.0
    %2224 = vmatprep.subr.mxu0 0.0
    %2225 = vmatpush1.msra.mxu0 0.0
    %2226 = vmatprep.subr.mxu0 0.0
    %2227 = vmatpush1.msra.mxu0 0.0
    %2228 = vmatprep.subr.mxu0 0.0
    %2229 = vmatpush1.msra.mxu0 0.0
    %2230 = vmatprep.subr.mxu0 0.0
    %2231 = vmatpush1.msra.mxu0 0.0
    %2232 = vmatprep.subr.mxu0 0.0
    %2233 = vmatpush1.msra.mxu0 0.0
    %2234 = vmatprep.subr.mxu0 0.0
    %2235 = vmatpush1.msra.mxu0 0.0
    %2236 = vmatprep.subr.mxu0 0.0
    %2237 = vmatpush1.msra.mxu0 0.0
    %2238 = vmatprep.subr.mxu0 0.0
    %2239 = vmatpush1.msra.mxu0 0.0
    %2240 = vmatprep.subr.mxu0 0.0
    %2241 = vmatpush1.msra.mxu0 0.0
    %2242 = vmatprep.subr.mxu0 0.0
    %2243 = vmatpush1.msra.mxu0 0.0
    %2244 = vmatprep.subr.mxu0 0.0
    %2245 = vmatpush1.msra.mxu0 0.0
    %2246 = vmatprep.subr.mxu0 0.0
    %2247 = vmatpush1.msra.mxu0 0.0
    %2248 = vmatprep.subr.mxu0 0.0
    %2249 = vmatpush1.msra.mxu0 0.0
    %2250 = vmatprep.subr.mxu0 0.0
    %2251 = vmatpush1.msra.mxu0 0.0
    %2252 = vmatprep.subr.mxu0 0.0
    %2253 = vmatpush1.msra.mxu0 0.0
    %2254 = vmatprep.subr.mxu0 0.0
    %2255 = vmatpush1.msra.mxu0 0.0
    %2256 = vmatprep.subr.mxu0 0.0
    %2257 = vmatpush1.msra.mxu0 0.0
    %2258 = vmatprep.mubr.f32.mxu0 0.0
    %2259 = vmatmul.mubr.f32.gmra.mrb[0].mxu0 %v2189
    %v2260 = vpop.f32.mrb[0].mxu0
    %v2261 = vadd.f32 0.0, %v2260
    %v2262 = vpop.f32.mrb[0].mxu0
    %2263 = vmatprep.mubr.f32.mxu0 0.0
    %2264 = vmatmul.mubr.f32.gmra.mrb[0].mxu0 %v2192
    %v2265 = vpop.f32.mrb[0].mxu0
    %v2266 = vadd.f32 0.0, %v2265
    %v2267 = vpop.f32.mrb[0].mxu0
    %2268 = vdwg.mxu0
    %s2269 = scalar_lea.vmem [#allocation20], 128
    %v2270 = vld [vmem:[%s2269] sm:$0xff]
    %v2271 = vld [vmem:[%s2269 + $0x8] sm:$0xff]
    %v2272 = vld [vmem:[%s2269 + $0x10] sm:$0xff]
    %v2273 = vld [vmem:[%s2269 + $0x18] sm:$0xff]
    %v2274 = vld [vmem:[%s2269 + $0x20] sm:$0xff]
    %v2275 = vld [vmem:[%s2269 + $0x28] sm:$0xff]
    %v2276 = vld [vmem:[%s2269 + $0x30] sm:$0xff]
    %v2277 = vld [vmem:[%s2269 + $0x38] sm:$0xff]
    %v2278 = vld [vmem:[%s2269 + $0x40] sm:$0xff]
    %v2279 = vld [vmem:[%s2269 + $0x48] sm:$0xff]
    %v2280 = vld [vmem:[%s2269 + $0x50] sm:$0xff]
    %v2281 = vld [vmem:[%s2269 + $0x58] sm:$0xff]
    %v2282 = vld [vmem:[%s2269 + $0x60] sm:$0xff]
    %v2283 = vld [vmem:[%s2269 + $0x68] sm:$0xff]
    %v2284 = vld [vmem:[%s2269 + $0x70] sm:$0xff]
    %v2285 = vld [vmem:[%s2269 + $0x78] sm:$0xff]
    %2286 = vmatprep.subr.mxu0 0.0
    %2287 = vmatpush1.msra.mxu0 %v2270
    %2288 = vmatprep.subr.mxu0 0.0
    %2289 = vmatpush1.msra.mxu0 %v2271
    %2290 = vmatprep.subr.mxu0 0.0
    %2291 = vmatpush1.msra.mxu0 %v2272
    %2292 = vmatprep.subr.mxu0 0.0
    %2293 = vmatpush1.msra.mxu0 %v2273
    %2294 = vmatprep.subr.mxu0 0.0
    %2295 = vmatpush1.msra.mxu0 %v2274
    %2296 = vmatprep.subr.mxu0 0.0
    %2297 = vmatpush1.msra.mxu0 %v2275
    %2298 = vmatprep.subr.mxu0 0.0
    %2299 = vmatpush1.msra.mxu0 %v2276
    %2300 = vmatprep.subr.mxu0 0.0
    %2301 = vmatpush1.msra.mxu0 %v2277
    %2302 = vmatprep.subr.mxu0 0.0
    %2303 = vmatpush1.msra.mxu0 %v2278
    %2304 = vmatprep.subr.mxu0 0.0
    %2305 = vmatpush1.msra.mxu0 %v2279
    %2306 = vmatprep.subr.mxu0 0.0
    %2307 = vmatpush1.msra.mxu0 %v2280
    %2308 = vmatprep.subr.mxu0 0.0
    %2309 = vmatpush1.msra.mxu0 %v2281
    %2310 = vmatprep.subr.mxu0 0.0
    %2311 = vmatpush1.msra.mxu0 %v2282
    %2312 = vmatprep.subr.mxu0 0.0
    %2313 = vmatpush1.msra.mxu0 %v2283
    %2314 = vmatprep.subr.mxu0 0.0
    %2315 = vmatpush1.msra.mxu0 %v2284
    %2316 = vmatprep.subr.mxu0 0.0
    %2317 = vmatpush1.msra.mxu0 %v2285
    %2318 = vmatprep.subr.mxu0 0.0
    %2319 = vmatpush1.msra.mxu0 0.0
    %2320 = vmatprep.subr.mxu0 0.0
    %2321 = vmatpush1.msra.mxu0 0.0
    %2322 = vmatprep.subr.mxu0 0.0
    %2323 = vmatpush1.msra.mxu0 0.0
    %2324 = vmatprep.subr.mxu0 0.0
    %2325 = vmatpush1.msra.mxu0 0.0
    %2326 = vmatprep.subr.mxu0 0.0
    %2327 = vmatpush1.msra.mxu0 0.0
    %2328 = vmatprep.subr.mxu0 0.0
    %2329 = vmatpush1.msra.mxu0 0.0
    %2330 = vmatprep.subr.mxu0 0.0
    %2331 = vmatpush1.msra.mxu0 0.0
    %2332 = vmatprep.subr.mxu0 0.0
    %2333 = vmatpush1.msra.mxu0 0.0
    %2334 = vmatprep.subr.mxu0 0.0
    %2335 = vmatpush1.msra.mxu0 0.0
    %2336 = vmatprep.subr.mxu0 0.0
    %2337 = vmatpush1.msra.mxu0 0.0
    %2338 = vmatprep.subr.mxu0 0.0
    %2339 = vmatpush1.msra.mxu0 0.0
    %2340 = vmatprep.subr.mxu0 0.0
    %2341 = vmatpush1.msra.mxu0 0.0
    %2342 = vmatprep.subr.mxu0 0.0
    %2343 = vmatpush1.msra.mxu0 0.0
    %2344 = vmatprep.subr.mxu0 0.0
    %2345 = vmatpush1.msra.mxu0 0.0
    %2346 = vmatprep.subr.mxu0 0.0
    %2347 = vmatpush1.msra.mxu0 0.0
    %2348 = vmatprep.subr.mxu0 0.0
    %2349 = vmatpush1.msra.mxu0 0.0
    %2350 = vmatprep.mubr.f32.mxu0 0.0
    %2351 = vmatmul.mubr.f32.gmra.mrb[0].mxu0 %v2261
    %v2352 = vpop.f32.mrb[0].mxu0
    %v2353 = vadd.f32 0.0, %v2352
    %v2354 = vpop.f32.mrb[0].mxu0
    %2355 = vmatprep.mubr.f32.mxu0 0.0
    %2356 = vmatmul.mubr.f32.gmra.mrb[0].mxu0 %v2266
    %v2357 = vpop.f32.mrb[0].mxu0
    %v2358 = vadd.f32 0.0, %v2357
    %v2359 = vpop.f32.mrb[0].mxu0
    %2360 = vdwg.mxu0
    %2361 = vmatprep.subr.mxu0 0.0
    %2362 = vmatpush1.msra.mxu0 %v2169
    %2363 = vmatprep.subr.mxu0 0.0
    %2364 = vmatpush1.msra.mxu0 %v2170
    %2365 = vmatprep.subr.mxu0 0.0
    %2366 = vmatpush1.msra.mxu0 %v2171
    %2367 = vmatprep.subr.mxu0 0.0
    %2368 = vmatpush1.msra.mxu0 %v2172
    %2369 = vmatprep.subr.mxu0 0.0
    %2370 = vmatpush1.msra.mxu0 %v2173
    %2371 = vmatprep.subr.mxu0 0.0
    %2372 = vmatpush1.msra.mxu0 %v2174
    %2373 = vmatprep.subr.mxu0 0.0
    %2374 = vmatpush1.msra.mxu0 %v2175
    %2375 = vmatprep.subr.mxu0 0.0
    %2376 = vmatpush1.msra.mxu0 %v2176
    %2377 = vmatprep.subr.mxu0 0.0
    %2378 = vmatpush1.msra.mxu0 %v2177
    %2379 = vmatprep.subr.mxu0 0.0
    %2380 = vmatpush1.msra.mxu0 %v2178
    %2381 = vmatprep.subr.mxu0 0.0
    %2382 = vmatpush1.msra.mxu0 %v2179
    %2383 = vmatprep.subr.mxu0 0.0
    %2384 = vmatpush1.msra.mxu0 %v2180
    %2385 = vmatprep.subr.mxu0 0.0
    %2386 = vmatpush1.msra.mxu0 %v2181
    %2387 = vmatprep.subr.mxu0 0.0
    %2388 = vmatpush1.msra.mxu0 %v2182
    %2389 = vmatprep.subr.mxu0 0.0
    %2390 = vmatpush1.msra.mxu0 %v2183
    %2391 = vmatprep.subr.mxu0 0.0
    %2392 = vmatpush1.msra.mxu0 %v2184
    %2393 = vmatprep.subr.mxu0 0.0
    %2394 = vmatpush1.msra.mxu0 0.0
    %2395 = vmatprep.subr.mxu0 0.0
    %2396 = vmatpush1.msra.mxu0 0.0
    %2397 = vmatprep.subr.mxu0 0.0
    %2398 = vmatpush1.msra.mxu0 0.0
    %2399 = vmatprep.subr.mxu0 0.0
    %2400 = vmatpush1.msra.mxu0 0.0
    %2401 = vmatprep.subr.mxu0 0.0
    %2402 = vmatpush1.msra.mxu0 0.0
    %2403 = vmatprep.subr.mxu0 0.0
    %2404 = vmatpush1.msra.mxu0 0.0
    %2405 = vmatprep.subr.mxu0 0.0
    %2406 = vmatpush1.msra.mxu0 0.0
    %2407 = vmatprep.subr.mxu0 0.0
    %2408 = vmatpush1.msra.mxu0 0.0
    %2409 = vmatprep.subr.mxu0 0.0
    %2410 = vmatpush1.msra.mxu0 0.0
    %2411 = vmatprep.subr.mxu0 0.0
    %2412 = vmatpush1.msra.mxu0 0.0
    %2413 = vmatprep.subr.mxu0 0.0
    %2414 = vmatpush1.msra.mxu0 0.0
    %2415 = vmatprep.subr.mxu0 0.0
    %2416 = vmatpush1.msra.mxu0 0.0
    %2417 = vmatprep.subr.mxu0 0.0
    %2418 = vmatpush1.msra.mxu0 0.0
    %2419 = vmatprep.subr.mxu0 0.0
    %2420 = vmatpush1.msra.mxu0 0.0
    %2421 = vmatprep.subr.mxu0 0.0
    %2422 = vmatpush1.msra.mxu0 0.0
    %2423 = vmatprep.subr.mxu0 0.0
    %2424 = vmatpush1.msra.mxu0 0.0
    %2425 = vmatprep.mubr.f32.mxu0 0.0
    %2426 = vmatmul.mubr.f32.gmra.mrb[0].mxu0 %v2161
    %v2427 = vpop.f32.mrb[0].mxu0
    %v2428 = vadd.f32 %v2353, %v2427
    %v2429 = vpop.f32.mrb[0].mxu0
    %2430 = vmatprep.mubr.f32.mxu0 0.0
    %2431 = vmatmul.mubr.f32.gmra.mrb[0].mxu0 %v2166
    %v2432 = vpop.f32.mrb[0].mxu0
    %v2433 = vadd.f32 %v2358, %v2432
    %v2434 = vpop.f32.mrb[0].mxu0
    %2435 = vdwg.mxu0
    %s2436 = scalar_lea.vmem [#allocation19], 32
    %v2437 = vld [vmem:[%s2436] sm:$0xff]
    %v2438 = vld [vmem:[%s2436 + $0x8] sm:$0xff]
    %v2440 = vsel %vm1548, %v2437, 0
    %v2443 = vsel %vm1548, %v2438, 0
    %2445 = vmatprep.subr.mxu0 0.0
    %2446 = vmatpush1.msra.mxu0 %v2084
    %2447 = vmatprep.subr.mxu0 0.0
    %2448 = vmatpush1.msra.mxu0 %v2085
    %2449 = vmatprep.subr.mxu0 0.0
    %2450 = vmatpush1.msra.mxu0 0.0
    %2451 = vmatprep.subr.mxu0 0.0
    %2452 = vmatpush1.msra.mxu0 0.0
    %2453 = vmatprep.subr.mxu0 0.0
    %2454 = vmatpush1.msra.mxu0 0.0
    %2455 = vmatprep.subr.mxu0 0.0
    %2456 = vmatpush1.msra.mxu0 0.0
    %2457 = vmatprep.subr.mxu0 0.0
    %2458 = vmatpush1.msra.mxu0 0.0
    %2459 = vmatprep.subr.mxu0 0.0
    %2460 = vmatpush1.msra.mxu0 0.0
    %2461 = vmatprep.subr.mxu0 0.0
    %2462 = vmatpush1.msra.mxu0 0.0
    %2463 = vmatprep.subr.mxu0 0.0
    %2464 = vmatpush1.msra.mxu0 0.0
    %2465 = vmatprep.subr.mxu0 0.0
    %2466 = vmatpush1.msra.mxu0 0.0
    %2467 = vmatprep.subr.mxu0 0.0
    %2468 = vmatpush1.msra.mxu0 0.0
    %2469 = vmatprep.subr.mxu0 0.0
    %2470 = vmatpush1.msra.mxu0 0.0
    %2471 = vmatprep.subr.mxu0 0.0
    %2472 = vmatpush1.msra.mxu0 0.0
    %2473 = vmatprep.subr.mxu0 0.0
    %2474 = vmatpush1.msra.mxu0 0.0
    %2475 = vmatprep.subr.mxu0 0.0
    %2476 = vmatpush1.msra.mxu0 0.0
    %2477 = vmatprep.subr.mxu0 0.0
    %2478 = vmatpush1.msra.mxu0 0.0
    %2479 = vmatprep.subr.mxu0 0.0
    %2480 = vmatpush1.msra.mxu0 0.0
    %2481 = vmatprep.subr.mxu0 0.0
    %2482 = vmatpush1.msra.mxu0 0.0
    %2483 = vmatprep.subr.mxu0 0.0
    %2484 = vmatpush1.msra.mxu0 0.0
    %2485 = vmatprep.subr.mxu0 0.0
    %2486 = vmatpush1.msra.mxu0 0.0
    %2487 = vmatprep.subr.mxu0 0.0
    %2488 = vmatpush1.msra.mxu0 0.0
    %2489 = vmatprep.subr.mxu0 0.0
    %2490 = vmatpush1.msra.mxu0 0.0
    %2491 = vmatprep.subr.mxu0 0.0
    %2492 = vmatpush1.msra.mxu0 0.0
    %2493 = vmatprep.subr.mxu0 0.0
    %2494 = vmatpush1.msra.mxu0 0.0
    %2495 = vmatprep.subr.mxu0 0.0
    %2496 = vmatpush1.msra.mxu0 0.0
    %2497 = vmatprep.subr.mxu0 0.0
    %2498 = vmatpush1.msra.mxu0 0.0
    %2499 = vmatprep.subr.mxu0 0.0
    %2500 = vmatpush1.msra.mxu0 0.0
    %2501 = vmatprep.subr.mxu0 0.0
    %2502 = vmatpush1.msra.mxu0 0.0
    %2503 = vmatprep.subr.mxu0 0.0
    %2504 = vmatpush1.msra.mxu0 0.0
    %2505 = vmatprep.subr.mxu0 0.0
    %2506 = vmatpush1.msra.mxu0 0.0
    %2507 = vmatprep.subr.mxu0 0.0
    %2508 = vmatpush1.msra.mxu0 0.0
    %2509 = vmatprep.mubr.f32.mxu0 0.0
    %2510 = vmatmul.mubr.f32.gmra.mrb[0].mxu0 %v2440
    %v2511 = vpop.f32.mrb[0].mxu0
    %v2512 = vadd.f32 0.0, %v2511
    %v2513 = vpop.f32.mrb[0].mxu0
    %2514 = vmatprep.mubr.f32.mxu0 0.0
    %2515 = vmatmul.mubr.f32.gmra.mrb[0].mxu0 %v2443
    %v2516 = vpop.f32.mrb[0].mxu0
    %v2517 = vadd.f32 0.0, %v2516
    %v2518 = vpop.f32.mrb[0].mxu0
    %2519 = vdwg.mxu0
    %s2520 = scalar_lea.vmem [#allocation20], 256
    %v2521 = vld [vmem:[%s2520] sm:$0xff]
    %v2522 = vld [vmem:[%s2520 + $0x8] sm:$0xff]
    %v2523 = vld [vmem:[%s2520 + $0x10] sm:$0xff]
    %v2524 = vld [vmem:[%s2520 + $0x18] sm:$0xff]
    %v2525 = vld [vmem:[%s2520 + $0x20] sm:$0xff]
    %v2526 = vld [vmem:[%s2520 + $0x28] sm:$0xff]
    %v2527 = vld [vmem:[%s2520 + $0x30] sm:$0xff]
    %v2528 = vld [vmem:[%s2520 + $0x38] sm:$0xff]
    %v2529 = vld [vmem:[%s2520 + $0x40] sm:$0xff]
    %v2530 = vld [vmem:[%s2520 + $0x48] sm:$0xff]
    %v2531 = vld [vmem:[%s2520 + $0x50] sm:$0xff]
    %v2532 = vld [vmem:[%s2520 + $0x58] sm:$0xff]
    %v2533 = vld [vmem:[%s2520 + $0x60] sm:$0xff]
    %v2534 = vld [vmem:[%s2520 + $0x68] sm:$0xff]
    %v2535 = vld [vmem:[%s2520 + $0x70] sm:$0xff]
    %v2536 = vld [vmem:[%s2520 + $0x78] sm:$0xff]
    %2537 = vmatprep.subr.mxu0 0.0
    %2538 = vmatpush1.msra.mxu0 %v2521
    %2539 = vmatprep.subr.mxu0 0.0
    %2540 = vmatpush1.msra.mxu0 %v2522
    %2541 = vmatprep.subr.mxu0 0.0
    %2542 = vmatpush1.msra.mxu0 %v2523
    %2543 = vmatprep.subr.mxu0 0.0
    %2544 = vmatpush1.msra.mxu0 %v2524
    %2545 = vmatprep.subr.mxu0 0.0
    %2546 = vmatpush1.msra.mxu0 %v2525
    %2547 = vmatprep.subr.mxu0 0.0
    %2548 = vmatpush1.msra.mxu0 %v2526
    %2549 = vmatprep.subr.mxu0 0.0
    %2550 = vmatpush1.msra.mxu0 %v2527
    %2551 = vmatprep.subr.mxu0 0.0
    %2552 = vmatpush1.msra.mxu0 %v2528
    %2553 = vmatprep.subr.mxu0 0.0
    %2554 = vmatpush1.msra.mxu0 %v2529
    %2555 = vmatprep.subr.mxu0 0.0
    %2556 = vmatpush1.msra.mxu0 %v2530
    %2557 = vmatprep.subr.mxu0 0.0
    %2558 = vmatpush1.msra.mxu0 %v2531
    %2559 = vmatprep.subr.mxu0 0.0
    %2560 = vmatpush1.msra.mxu0 %v2532
    %2561 = vmatprep.subr.mxu0 0.0
    %2562 = vmatpush1.msra.mxu0 %v2533
    %2563 = vmatprep.subr.mxu0 0.0
    %2564 = vmatpush1.msra.mxu0 %v2534
    %2565 = vmatprep.subr.mxu0 0.0
    %2566 = vmatpush1.msra.mxu0 %v2535
    %2567 = vmatprep.subr.mxu0 0.0
    %2568 = vmatpush1.msra.mxu0 %v2536
    %2569 = vmatprep.subr.mxu0 0.0
    %2570 = vmatpush1.msra.mxu0 0.0
    %2571 = vmatprep.subr.mxu0 0.0
    %2572 = vmatpush1.msra.mxu0 0.0
    %2573 = vmatprep.subr.mxu0 0.0
    %2574 = vmatpush1.msra.mxu0 0.0
    %2575 = vmatprep.subr.mxu0 0.0
    %2576 = vmatpush1.msra.mxu0 0.0
    %2577 = vmatprep.subr.mxu0 0.0
    %2578 = vmatpush1.msra.mxu0 0.0
    %2579 = vmatprep.subr.mxu0 0.0
    %2580 = vmatpush1.msra.mxu0 0.0
    %2581 = vmatprep.subr.mxu0 0.0
    %2582 = vmatpush1.msra.mxu0 0.0
    %2583 = vmatprep.subr.mxu0 0.0
    %2584 = vmatpush1.msra.mxu0 0.0
    %2585 = vmatprep.subr.mxu0 0.0
    %2586 = vmatpush1.msra.mxu0 0.0
    %2587 = vmatprep.subr.mxu0 0.0
    %2588 = vmatpush1.msra.mxu0 0.0
    %2589 = vmatprep.subr.mxu0 0.0
    %2590 = vmatpush1.msra.mxu0 0.0
    %2591 = vmatprep.subr.mxu0 0.0
    %2592 = vmatpush1.msra.mxu0 0.0
    %2593 = vmatprep.subr.mxu0 0.0
    %2594 = vmatpush1.msra.mxu0 0.0
    %2595 = vmatprep.subr.mxu0 0.0
    %2596 = vmatpush1.msra.mxu0 0.0
    %2597 = vmatprep.subr.mxu0 0.0
    %2598 = vmatpush1.msra.mxu0 0.0
    %2599 = vmatprep.subr.mxu0 0.0
    %2600 = vmatpush1.msra.mxu0 0.0
    %2601 = vmatprep.mubr.f32.mxu0 0.0
    %2602 = vmatmul.mubr.f32.gmra.mrb[0].mxu0 %v2512
    %v2603 = vpop.f32.mrb[0].mxu0
    %v2604 = vadd.f32 0.0, %v2603
    %v2605 = vpop.f32.mrb[0].mxu0
    %2606 = vmatprep.mubr.f32.mxu0 0.0
    %2607 = vmatmul.mubr.f32.gmra.mrb[0].mxu0 %v2517
    %v2608 = vpop.f32.mrb[0].mxu0
    %v2609 = vadd.f32 0.0, %v2608
    %v2610 = vpop.f32.mrb[0].mxu0
    %2611 = vdwg.mxu0
    %v2612 = vadd.f32 %v2428, %v2604
    %v2613 = vadd.f32 %v2433, %v2609
    %v2614 = vld [vmem:[#allocation22] sm:$0x1]
    %v2616 = vlaneseq
    %v2617 = vshrl.u32 %v2616, 7
    %v2618 = vsub.s32 0, %v2617
    %v2619 = vrot.slane %v2614, %v2618
    %v2621 = vadd.f32 %v2612, %v2619
    %v2622 = vadd.f32 %v2613, %v2619
    %v2623 = vadd.f32 %v2621, %v1544
    %v2624 = vadd.f32 %v2622, %v1545
    %v2625 = vmax.f32 %v2623, 0.0
    %v2626 = vmax.f32 %v2624, 0.0
    %v2627 = vld [vmem:[#allocation23] sm:$0xff]
    %v2629 = vsel %vm1548, %v2627, 0
    %2631 = vmatprep.subr.mxu0 0.0
    %2632 = vmatpush1.msra.mxu0 %v2625
    %2633 = vmatprep.subr.mxu0 0.0
    %2634 = vmatpush1.msra.mxu0 %v2626
    %2635 = vmatprep.subr.mxu0 0.0
    %2636 = vmatpush1.msra.mxu0 0.0
    %2637 = vmatprep.subr.mxu0 0.0
    %2638 = vmatpush1.msra.mxu0 0.0
    %2639 = vmatprep.subr.mxu0 0.0
    %2640 = vmatpush1.msra.mxu0 0.0
    %2641 = vmatprep.subr.mxu0 0.0
    %2642 = vmatpush1.msra.mxu0 0.0
    %2643 = vmatprep.subr.mxu0 0.0
    %2644 = vmatpush1.msra.mxu0 0.0
    %2645 = vmatprep.subr.mxu0 0.0
    %2646 = vmatpush1.msra.mxu0 0.0
    %2647 = vmatprep.subr.mxu0 0.0
    %2648 = vmatpush1.msra.mxu0 0.0
    %2649 = vmatprep.subr.mxu0 0.0
    %2650 = vmatpush1.msra.mxu0 0.0
    %2651 = vmatprep.subr.mxu0 0.0
    %2652 = vmatpush1.msra.mxu0 0.0
    %2653 = vmatprep.subr.mxu0 0.0
    %2654 = vmatpush1.msra.mxu0 0.0
    %2655 = vmatprep.subr.mxu0 0.0
    %2656 = vmatpush1.msra.mxu0 0.0
    %2657 = vmatprep.subr.mxu0 0.0
    %2658 = vmatpush1.msra.mxu0 0.0
    %2659 = vmatprep.subr.mxu0 0.0
    %2660 = vmatpush1.msra.mxu0 0.0
    %2661 = vmatprep.subr.mxu0 0.0
    %2662 = vmatpush1.msra.mxu0 0.0
    %2663 = vmatprep.subr.mxu0 0.0
    %2664 = vmatpush1.msra.mxu0 0.0
    %2665 = vmatprep.subr.mxu0 0.0
    %2666 = vmatpush1.msra.mxu0 0.0
    %2667 = vmatprep.subr.mxu0 0.0
    %2668 = vmatpush1.msra.mxu0 0.0
    %2669 = vmatprep.subr.mxu0 0.0
    %2670 = vmatpush1.msra.mxu0 0.0
    %2671 = vmatprep.subr.mxu0 0.0
    %2672 = vmatpush1.msra.mxu0 0.0
    %2673 = vmatprep.subr.mxu0 0.0
    %2674 = vmatpush1.msra.mxu0 0.0
    %2675 = vmatprep.subr.mxu0 0.0
    %2676 = vmatpush1.msra.mxu0 0.0
    %2677 = vmatprep.subr.mxu0 0.0
    %2678 = vmatpush1.msra.mxu0 0.0
    %2679 = vmatprep.subr.mxu0 0.0
    %2680 = vmatpush1.msra.mxu0 0.0
    %2681 = vmatprep.subr.mxu0 0.0
    %2682 = vmatpush1.msra.mxu0 0.0
    %2683 = vmatprep.subr.mxu0 0.0
    %2684 = vmatpush1.msra.mxu0 0.0
    %2685 = vmatprep.subr.mxu0 0.0
    %2686 = vmatpush1.msra.mxu0 0.0
    %2687 = vmatprep.subr.mxu0 0.0
    %2688 = vmatpush1.msra.mxu0 0.0
    %2689 = vmatprep.subr.mxu0 0.0
    %2690 = vmatpush1.msra.mxu0 0.0
    %2691 = vmatprep.subr.mxu0 0.0
    %2692 = vmatpush1.msra.mxu0 0.0
    %2693 = vmatprep.subr.mxu0 0.0
    %2694 = vmatpush1.msra.mxu0 0.0
    %2695 = vmatprep.mubr.f32.mxu0 0.0
    %2696 = vmatmul.mubr.f32.gmra.mrb[0].mxu0 %v2629
    %v2697 = vpop.f32.mrb[0].mxu0
    %v2698 = vadd.f32 0.0, %v2697
    %v2699 = vpop.f32.mrb[0].mxu0
    %2700 = vdwg.mxu0
    %v2701 = vld [vmem:[%s15] sm:$0xff]
    %v2702 = vld [vmem:[%s15 + $0x8] sm:$0xff]
    %v2703 = vld [vmem:[%s15 + $0x10] sm:$0xff]
    %v2704 = vld [vmem:[%s15 + $0x18] sm:$0xff]
    %v2705 = vld [vmem:[%s15 + $0x20] sm:$0xff]
    %v2706 = vld [vmem:[%s15 + $0x28] sm:$0xff]
    %v2707 = vld [vmem:[%s15 + $0x30] sm:$0xff]
    %v2708 = vld [vmem:[%s15 + $0x38] sm:$0xff]
    %v2709 = vld [vmem:[%s15 + $0x40] sm:$0xff]
    %v2710 = vld [vmem:[%s15 + $0x48] sm:$0xff]
    %v2711 = vld [vmem:[%s15 + $0x50] sm:$0xff]
    %v2712 = vld [vmem:[%s15 + $0x58] sm:$0xff]
    %v2713 = vld [vmem:[%s15 + $0x60] sm:$0xff]
    %v2714 = vld [vmem:[%s15 + $0x68] sm:$0xff]
    %v2715 = vld [vmem:[%s15 + $0x70] sm:$0xff]
    %v2716 = vld [vmem:[%s15 + $0x78] sm:$0xff]
    %v2717 = vld [vmem:[#allocation25] sm:$0x1]
    %v2719 = vlaneseq
    %v2720 = vshrl.u32 %v2719, 7
    %v2721 = vsub.s32 0, %v2720
    %v2722 = vrot.slane %v2717, %v2721
    %2724 = vmatprep.subr.mxu0 0.0
    %2725 = vmatpush1.msra.mxu0 %v2701
    %2726 = vmatprep.subr.mxu0 0.0
    %2727 = vmatpush1.msra.mxu0 %v2702
    %2728 = vmatprep.subr.mxu0 0.0
    %2729 = vmatpush1.msra.mxu0 %v2703
    %2730 = vmatprep.subr.mxu0 0.0
    %2731 = vmatpush1.msra.mxu0 %v2704
    %2732 = vmatprep.subr.mxu0 0.0
    %2733 = vmatpush1.msra.mxu0 %v2705
    %2734 = vmatprep.subr.mxu0 0.0
    %2735 = vmatpush1.msra.mxu0 %v2706
    %2736 = vmatprep.subr.mxu0 0.0
    %2737 = vmatpush1.msra.mxu0 %v2707
    %2738 = vmatprep.subr.mxu0 0.0
    %2739 = vmatpush1.msra.mxu0 %v2708
    %2740 = vmatprep.subr.mxu0 0.0
    %2741 = vmatpush1.msra.mxu0 %v2709
    %2742 = vmatprep.subr.mxu0 0.0
    %2743 = vmatpush1.msra.mxu0 %v2710
    %2744 = vmatprep.subr.mxu0 0.0
    %2745 = vmatpush1.msra.mxu0 %v2711
    %2746 = vmatprep.subr.mxu0 0.0
    %2747 = vmatpush1.msra.mxu0 %v2712
    %2748 = vmatprep.subr.mxu0 0.0
    %2749 = vmatpush1.msra.mxu0 %v2713
    %2750 = vmatprep.subr.mxu0 0.0
    %2751 = vmatpush1.msra.mxu0 %v2714
    %2752 = vmatprep.subr.mxu0 0.0
    %2753 = vmatpush1.msra.mxu0 %v2715
    %2754 = vmatprep.subr.mxu0 0.0
    %2755 = vmatpush1.msra.mxu0 %v2716
    %2756 = vmatprep.subr.mxu0 0.0
    %2757 = vmatpush1.msra.mxu0 0.0
    %2758 = vmatprep.subr.mxu0 0.0
    %2759 = vmatpush1.msra.mxu0 0.0
    %2760 = vmatprep.subr.mxu0 0.0
    %2761 = vmatpush1.msra.mxu0 0.0
    %2762 = vmatprep.subr.mxu0 0.0
    %2763 = vmatpush1.msra.mxu0 0.0
    %2764 = vmatprep.subr.mxu0 0.0
    %2765 = vmatpush1.msra.mxu0 0.0
    %2766 = vmatprep.subr.mxu0 0.0
    %2767 = vmatpush1.msra.mxu0 0.0
    %2768 = vmatprep.subr.mxu0 0.0
    %2769 = vmatpush1.msra.mxu0 0.0
    %2770 = vmatprep.subr.mxu0 0.0
    %2771 = vmatpush1.msra.mxu0 0.0
    %2772 = vmatprep.subr.mxu0 0.0
    %2773 = vmatpush1.msra.mxu0 0.0
    %2774 = vmatprep.subr.mxu0 0.0
    %2775 = vmatpush1.msra.mxu0 0.0
    %2776 = vmatprep.subr.mxu0 0.0
    %2777 = vmatpush1.msra.mxu0 0.0
    %2778 = vmatprep.subr.mxu0 0.0
    %2779 = vmatpush1.msra.mxu0 0.0
    %2780 = vmatprep.subr.mxu0 0.0
    %2781 = vmatpush1.msra.mxu0 0.0
    %2782 = vmatprep.subr.mxu0 0.0
    %2783 = vmatpush1.msra.mxu0 0.0
    %2784 = vmatprep.subr.mxu0 0.0
    %2785 = vmatpush1.msra.mxu0 0.0
    %2786 = vmatprep.subr.mxu0 0.0
    %2787 = vmatpush1.msra.mxu0 0.0
    %2788 = vmatprep.mubr.f32.mxu0 0.0
    %2789 = vmatmul.mubr.f32.gmra.mrb[0].mxu0 %v2698
    %v2790 = vpop.f32.mrb[0].mxu0
    %v2791 = vadd.f32 %v2722, %v2790
    %v2792 = vpop.f32.mrb[0].mxu0
    %2793 = vdwg.mxu0
    %v2794 = vld [vmem:[%s17] sm:$0xff]
    %v2796 = vsel %vm1548, %v2794, 0
    %2798 = vmatprep.subr.mxu0 0.0
    %2799 = vmatpush1.msra.mxu0 %v2625
    %2800 = vmatprep.subr.mxu0 0.0
    %2801 = vmatpush1.msra.mxu0 %v2626
    %2802 = vmatprep.subr.mxu0 0.0
    %2803 = vmatpush1.msra.mxu0 0.0
    %2804 = vmatprep.subr.mxu0 0.0
    %2805 = vmatpush1.msra.mxu0 0.0
    %2806 = vmatprep.subr.mxu0 0.0
    %2807 = vmatpush1.msra.mxu0 0.0
    %2808 = vmatprep.subr.mxu0 0.0
    %2809 = vmatpush1.msra.mxu0 0.0
    %2810 = vmatprep.subr.mxu0 0.0
    %2811 = vmatpush1.msra.mxu0 0.0
    %2812 = vmatprep.subr.mxu0 0.0
    %2813 = vmatpush1.msra.mxu0 0.0
    %2814 = vmatprep.subr.mxu0 0.0
    %2815 = vmatpush1.msra.mxu0 0.0
    %2816 = vmatprep.subr.mxu0 0.0
    %2817 = vmatpush1.msra.mxu0 0.0
    %2818 = vmatprep.subr.mxu0 0.0
    %2819 = vmatpush1.msra.mxu0 0.0
    %2820 = vmatprep.subr.mxu0 0.0
    %2821 = vmatpush1.msra.mxu0 0.0
    %2822 = vmatprep.subr.mxu0 0.0
    %2823 = vmatpush1.msra.mxu0 0.0
    %2824 = vmatprep.subr.mxu0 0.0
    %2825 = vmatpush1.msra.mxu0 0.0
    %2826 = vmatprep.subr.mxu0 0.0
    %2827 = vmatpush1.msra.mxu0 0.0
    %2828 = vmatprep.subr.mxu0 0.0
    %2829 = vmatpush1.msra.mxu0 0.0
    %2830 = vmatprep.subr.mxu0 0.0
    %2831 = vmatpush1.msra.mxu0 0.0
    %2832 = vmatprep.subr.mxu0 0.0
    %2833 = vmatpush1.msra.mxu0 0.0
    %2834 = vmatprep.subr.mxu0 0.0
    %2835 = vmatpush1.msra.mxu0 0.0
    %2836 = vmatprep.subr.mxu0 0.0
    %2837 = vmatpush1.msra.mxu0 0.0
    %2838 = vmatprep.subr.mxu0 0.0
    %2839 = vmatpush1.msra.mxu0 0.0
    %2840 = vmatprep.subr.mxu0 0.0
    %2841 = vmatpush1.msra.mxu0 0.0
    %2842 = vmatprep.subr.mxu0 0.0
    %2843 = vmatpush1.msra.mxu0 0.0
    %2844 = vmatprep.subr.mxu0 0.0
    %2845 = vmatpush1.msra.mxu0 0.0
    %2846 = vmatprep.subr.mxu0 0.0
    %2847 = vmatpush1.msra.mxu0 0.0
    %2848 = vmatprep.subr.mxu0 0.0
    %2849 = vmatpush1.msra.mxu0 0.0
    %2850 = vmatprep.subr.mxu0 0.0
    %2851 = vmatpush1.msra.mxu0 0.0
    %2852 = vmatprep.subr.mxu0 0.0
    %2853 = vmatpush1.msra.mxu0 0.0
    %2854 = vmatprep.subr.mxu0 0.0
    %2855 = vmatpush1.msra.mxu0 0.0
    %2856 = vmatprep.subr.mxu0 0.0
    %2857 = vmatpush1.msra.mxu0 0.0
    %2858 = vmatprep.subr.mxu0 0.0
    %2859 = vmatpush1.msra.mxu0 0.0
    %2860 = vmatprep.subr.mxu0 0.0
    %2861 = vmatpush1.msra.mxu0 0.0
    %2862 = vmatprep.mubr.f32.mxu0 0.0
    %2863 = vmatmul.mubr.f32.gmra.mrb[0].mxu0 %v2796
    %v2864 = vpop.f32.mrb[0].mxu0
    %v2865 = vadd.f32 0.0, %v2864
    %v2866 = vpop.f32.mrb[0].mxu0
    %2867 = vdwg.mxu0
    %v2868 = vld [vmem:[#allocation26] sm:$0xff]
    %v2869 = vld [vmem:[#allocation26 + $0x8] sm:$0xff]
    %v2870 = vld [vmem:[#allocation26 + $0x10] sm:$0xff]
    %v2871 = vld [vmem:[#allocation26 + $0x18] sm:$0xff]
    %v2872 = vld [vmem:[#allocation26 + $0x20] sm:$0xff]
    %v2873 = vld [vmem:[#allocation26 + $0x28] sm:$0xff]
    %v2874 = vld [vmem:[#allocation26 + $0x30] sm:$0xff]
    %v2875 = vld [vmem:[#allocation26 + $0x38] sm:$0xff]
    %v2876 = vld [vmem:[#allocation26 + $0x40] sm:$0xff]
    %v2877 = vld [vmem:[#allocation26 + $0x48] sm:$0xff]
    %v2878 = vld [vmem:[#allocation26 + $0x50] sm:$0xff]
    %v2879 = vld [vmem:[#allocation26 + $0x58] sm:$0xff]
    %v2880 = vld [vmem:[#allocation26 + $0x60] sm:$0xff]
    %v2881 = vld [vmem:[#allocation26 + $0x68] sm:$0xff]
    %v2882 = vld [vmem:[#allocation26 + $0x70] sm:$0xff]
    %v2883 = vld [vmem:[#allocation26 + $0x78] sm:$0xff]
    %s2884 = scalar_lea.vmem %s17, 8
    %v2885 = vld [vmem:[%s2884] sm:$0xff]
    %v2887 = vsel %vm1548, %v2885, 0
    %2889 = vmatprep.subr.mxu0 0.0
    %2890 = vmatpush1.msra.mxu0 %v2625
    %2891 = vmatprep.subr.mxu0 0.0
    %2892 = vmatpush1.msra.mxu0 %v2626
    %2893 = vmatprep.subr.mxu0 0.0
    %2894 = vmatpush1.msra.mxu0 0.0
    %2895 = vmatprep.subr.mxu0 0.0
    %2896 = vmatpush1.msra.mxu0 0.0
    %2897 = vmatprep.subr.mxu0 0.0
    %2898 = vmatpush1.msra.mxu0 0.0
    %2899 = vmatprep.subr.mxu0 0.0
    %2900 = vmatpush1.msra.mxu0 0.0
    %2901 = vmatprep.subr.mxu0 0.0
    %2902 = vmatpush1.msra.mxu0 0.0
    %2903 = vmatprep.subr.mxu0 0.0
    %2904 = vmatpush1.msra.mxu0 0.0
    %2905 = vmatprep.subr.mxu0 0.0
    %2906 = vmatpush1.msra.mxu0 0.0
    %2907 = vmatprep.subr.mxu0 0.0
    %2908 = vmatpush1.msra.mxu0 0.0
    %2909 = vmatprep.subr.mxu0 0.0
    %2910 = vmatpush1.msra.mxu0 0.0
    %2911 = vmatprep.subr.mxu0 0.0
    %2912 = vmatpush1.msra.mxu0 0.0
    %2913 = vmatprep.subr.mxu0 0.0
    %2914 = vmatpush1.msra.mxu0 0.0
    %2915 = vmatprep.subr.mxu0 0.0
    %2916 = vmatpush1.msra.mxu0 0.0
    %2917 = vmatprep.subr.mxu0 0.0
    %2918 = vmatpush1.msra.mxu0 0.0
    %2919 = vmatprep.subr.mxu0 0.0
    %2920 = vmatpush1.msra.mxu0 0.0
    %2921 = vmatprep.subr.mxu0 0.0
    %2922 = vmatpush1.msra.mxu0 0.0
    %2923 = vmatprep.subr.mxu0 0.0
    %2924 = vmatpush1.msra.mxu0 0.0
    %2925 = vmatprep.subr.mxu0 0.0
    %2926 = vmatpush1.msra.mxu0 0.0
    %2927 = vmatprep.subr.mxu0 0.0
    %2928 = vmatpush1.msra.mxu0 0.0
    %2929 = vmatprep.subr.mxu0 0.0
    %2930 = vmatpush1.msra.mxu0 0.0
    %2931 = vmatprep.subr.mxu0 0.0
    %2932 = vmatpush1.msra.mxu0 0.0
    %2933 = vmatprep.subr.mxu0 0.0
    %2934 = vmatpush1.msra.mxu0 0.0
    %2935 = vmatprep.subr.mxu0 0.0
    %2936 = vmatpush1.msra.mxu0 0.0
    %2937 = vmatprep.subr.mxu0 0.0
    %2938 = vmatpush1.msra.mxu0 0.0
    %2939 = vmatprep.subr.mxu0 0.0
    %2940 = vmatpush1.msra.mxu0 0.0
    %2941 = vmatprep.subr.mxu0 0.0
    %2942 = vmatpush1.msra.mxu0 0.0
    %2943 = vmatprep.subr.mxu0 0.0
    %2944 = vmatpush1.msra.mxu0 0.0
    %2945 = vmatprep.subr.mxu0 0.0
    %2946 = vmatpush1.msra.mxu0 0.0
    %2947 = vmatprep.subr.mxu0 0.0
    %2948 = vmatpush1.msra.mxu0 0.0
    %2949 = vmatprep.subr.mxu0 0.0
    %2950 = vmatpush1.msra.mxu0 0.0
    %2951 = vmatprep.subr.mxu0 0.0
    %2952 = vmatpush1.msra.mxu0 0.0
    %2953 = vmatprep.mubr.f32.mxu0 0.0
    %2954 = vmatmul.mubr.f32.gmra.mrb[0].mxu0 %v2887
    %v2955 = vpop.f32.mrb[0].mxu0
    %v2956 = vadd.f32 0.0, %v2955
    %v2957 = vpop.f32.mrb[0].mxu0
    %2958 = vdwg.mxu0
    %s2959 = scalar_lea.vmem [#allocation26], 128
    %v2960 = vld [vmem:[%s2959] sm:$0xff]
    %v2961 = vld [vmem:[%s2959 + $0x8] sm:$0xff]
    %v2962 = vld [vmem:[%s2959 + $0x10] sm:$0xff]
    %v2963 = vld [vmem:[%s2959 + $0x18] sm:$0xff]
    %v2964 = vld [vmem:[%s2959 + $0x20] sm:$0xff]
    %v2965 = vld [vmem:[%s2959 + $0x28] sm:$0xff]
    %v2966 = vld [vmem:[%s2959 + $0x30] sm:$0xff]
    %v2967 = vld [vmem:[%s2959 + $0x38] sm:$0xff]
    %v2968 = vld [vmem:[%s2959 + $0x40] sm:$0xff]
    %v2969 = vld [vmem:[%s2959 + $0x48] sm:$0xff]
    %v2970 = vld [vmem:[%s2959 + $0x50] sm:$0xff]
    %v2971 = vld [vmem:[%s2959 + $0x58] sm:$0xff]
    %v2972 = vld [vmem:[%s2959 + $0x60] sm:$0xff]
    %v2973 = vld [vmem:[%s2959 + $0x68] sm:$0xff]
    %v2974 = vld [vmem:[%s2959 + $0x70] sm:$0xff]
    %v2975 = vld [vmem:[%s2959 + $0x78] sm:$0xff]
    %2976 = vmatprep.subr.mxu0 0.0
    %2977 = vmatpush1.msra.mxu0 %v2960
    %2978 = vmatprep.subr.mxu0 0.0
    %2979 = vmatpush1.msra.mxu0 %v2961
    %2980 = vmatprep.subr.mxu0 0.0
    %2981 = vmatpush1.msra.mxu0 %v2962
    %2982 = vmatprep.subr.mxu0 0.0
    %2983 = vmatpush1.msra.mxu0 %v2963
    %2984 = vmatprep.subr.mxu0 0.0
    %2985 = vmatpush1.msra.mxu0 %v2964
    %2986 = vmatprep.subr.mxu0 0.0
    %2987 = vmatpush1.msra.mxu0 %v2965
    %2988 = vmatprep.subr.mxu0 0.0
    %2989 = vmatpush1.msra.mxu0 %v2966
    %2990 = vmatprep.subr.mxu0 0.0
    %2991 = vmatpush1.msra.mxu0 %v2967
    %2992 = vmatprep.subr.mxu0 0.0
    %2993 = vmatpush1.msra.mxu0 %v2968
    %2994 = vmatprep.subr.mxu0 0.0
    %2995 = vmatpush1.msra.mxu0 %v2969
    %2996 = vmatprep.subr.mxu0 0.0
    %2997 = vmatpush1.msra.mxu0 %v2970
    %2998 = vmatprep.subr.mxu0 0.0
    %2999 = vmatpush1.msra.mxu0 %v2971
    %3000 = vmatprep.subr.mxu0 0.0
    %3001 = vmatpush1.msra.mxu0 %v2972
    %3002 = vmatprep.subr.mxu0 0.0
    %3003 = vmatpush1.msra.mxu0 %v2973
    %3004 = vmatprep.subr.mxu0 0.0
    %3005 = vmatpush1.msra.mxu0 %v2974
    %3006 = vmatprep.subr.mxu0 0.0
    %3007 = vmatpush1.msra.mxu0 %v2975
    %3008 = vmatprep.subr.mxu0 0.0
    %3009 = vmatpush1.msra.mxu0 0.0
    %3010 = vmatprep.subr.mxu0 0.0
    %3011 = vmatpush1.msra.mxu0 0.0
    %3012 = vmatprep.subr.mxu0 0.0
    %3013 = vmatpush1.msra.mxu0 0.0
    %3014 = vmatprep.subr.mxu0 0.0
    %3015 = vmatpush1.msra.mxu0 0.0
    %3016 = vmatprep.subr.mxu0 0.0
    %3017 = vmatpush1.msra.mxu0 0.0
    %3018 = vmatprep.subr.mxu0 0.0
    %3019 = vmatpush1.msra.mxu0 0.0
    %3020 = vmatprep.subr.mxu0 0.0
    %3021 = vmatpush1.msra.mxu0 0.0
    %3022 = vmatprep.subr.mxu0 0.0
    %3023 = vmatpush1.msra.mxu0 0.0
    %3024 = vmatprep.subr.mxu0 0.0
    %3025 = vmatpush1.msra.mxu0 0.0
    %3026 = vmatprep.subr.mxu0 0.0
    %3027 = vmatpush1.msra.mxu0 0.0
    %3028 = vmatprep.subr.mxu0 0.0
    %3029 = vmatpush1.msra.mxu0 0.0
    %3030 = vmatprep.subr.mxu0 0.0
    %3031 = vmatpush1.msra.mxu0 0.0
    %3032 = vmatprep.subr.mxu0 0.0
    %3033 = vmatpush1.msra.mxu0 0.0
    %3034 = vmatprep.subr.mxu0 0.0
    %3035 = vmatpush1.msra.mxu0 0.0
    %3036 = vmatprep.subr.mxu0 0.0
    %3037 = vmatpush1.msra.mxu0 0.0
    %3038 = vmatprep.subr.mxu0 0.0
    %3039 = vmatpush1.msra.mxu0 0.0
    %3040 = vmatprep.mubr.f32.mxu0 0.0
    %3041 = vmatmul.mubr.f32.gmra.mrb[0].mxu0 %v2956
    %v3042 = vpop.f32.mrb[0].mxu0
    %v3043 = vadd.f32 0.0, %v3042
    %v3044 = vpop.f32.mrb[0].mxu0
    %3045 = vdwg.mxu0
    %3046 = vmatprep.subr.mxu0 0.0
    %3047 = vmatpush1.msra.mxu0 %v2868
    %3048 = vmatprep.subr.mxu0 0.0
    %3049 = vmatpush1.msra.mxu0 %v2869
    %3050 = vmatprep.subr.mxu0 0.0
    %3051 = vmatpush1.msra.mxu0 %v2870
    %3052 = vmatprep.subr.mxu0 0.0
    %3053 = vmatpush1.msra.mxu0 %v2871
    %3054 = vmatprep.subr.mxu0 0.0
    %3055 = vmatpush1.msra.mxu0 %v2872
    %3056 = vmatprep.subr.mxu0 0.0
    %3057 = vmatpush1.msra.mxu0 %v2873
    %3058 = vmatprep.subr.mxu0 0.0
    %3059 = vmatpush1.msra.mxu0 %v2874
    %3060 = vmatprep.subr.mxu0 0.0
    %3061 = vmatpush1.msra.mxu0 %v2875
    %3062 = vmatprep.subr.mxu0 0.0
    %3063 = vmatpush1.msra.mxu0 %v2876
    %3064 = vmatprep.subr.mxu0 0.0
    %3065 = vmatpush1.msra.mxu0 %v2877
    %3066 = vmatprep.subr.mxu0 0.0
    %3067 = vmatpush1.msra.mxu0 %v2878
    %3068 = vmatprep.subr.mxu0 0.0
    %3069 = vmatpush1.msra.mxu0 %v2879
    %3070 = vmatprep.subr.mxu0 0.0
    %3071 = vmatpush1.msra.mxu0 %v2880
    %3072 = vmatprep.subr.mxu0 0.0
    %3073 = vmatpush1.msra.mxu0 %v2881
    %3074 = vmatprep.subr.mxu0 0.0
    %3075 = vmatpush1.msra.mxu0 %v2882
    %3076 = vmatprep.subr.mxu0 0.0
    %3077 = vmatpush1.msra.mxu0 %v2883
    %3078 = vmatprep.subr.mxu0 0.0
    %3079 = vmatpush1.msra.mxu0 0.0
    %3080 = vmatprep.subr.mxu0 0.0
    %3081 = vmatpush1.msra.mxu0 0.0
    %3082 = vmatprep.subr.mxu0 0.0
    %3083 = vmatpush1.msra.mxu0 0.0
    %3084 = vmatprep.subr.mxu0 0.0
    %3085 = vmatpush1.msra.mxu0 0.0
    %3086 = vmatprep.subr.mxu0 0.0
    %3087 = vmatpush1.msra.mxu0 0.0
    %3088 = vmatprep.subr.mxu0 0.0
    %3089 = vmatpush1.msra.mxu0 0.0
    %3090 = vmatprep.subr.mxu0 0.0
    %3091 = vmatpush1.msra.mxu0 0.0
    %3092 = vmatprep.subr.mxu0 0.0
    %3093 = vmatpush1.msra.mxu0 0.0
    %3094 = vmatprep.subr.mxu0 0.0
    %3095 = vmatpush1.msra.mxu0 0.0
    %3096 = vmatprep.subr.mxu0 0.0
    %3097 = vmatpush1.msra.mxu0 0.0
    %3098 = vmatprep.subr.mxu0 0.0
    %3099 = vmatpush1.msra.mxu0 0.0
    %3100 = vmatprep.subr.mxu0 0.0
    %3101 = vmatpush1.msra.mxu0 0.0
    %3102 = vmatprep.subr.mxu0 0.0
    %3103 = vmatpush1.msra.mxu0 0.0
    %3104 = vmatprep.subr.mxu0 0.0
    %3105 = vmatpush1.msra.mxu0 0.0
    %3106 = vmatprep.subr.mxu0 0.0
    %3107 = vmatpush1.msra.mxu0 0.0
    %3108 = vmatprep.subr.mxu0 0.0
    %3109 = vmatpush1.msra.mxu0 0.0
    %3110 = vmatprep.mubr.f32.mxu0 0.0
    %3111 = vmatmul.mubr.f32.gmra.mrb[0].mxu0 %v2865
    %v3112 = vpop.f32.mrb[0].mxu0
    %v3113 = vadd.f32 %v3043, %v3112
    %v3114 = vpop.f32.mrb[0].mxu0
    %3115 = vdwg.mxu0
    %s3116 = scalar_lea.vmem %s17, 16
    %v3117 = vld [vmem:[%s3116] sm:$0xff]
    %v3119 = vsel %vm1548, %v3117, 0
    %3121 = vmatprep.subr.mxu0 0.0
    %3122 = vmatpush1.msra.mxu0 %v2625
    %3123 = vmatprep.subr.mxu0 0.0
    %3124 = vmatpush1.msra.mxu0 %v2626
    %3125 = vmatprep.subr.mxu0 0.0
    %3126 = vmatpush1.msra.mxu0 0.0
    %3127 = vmatprep.subr.mxu0 0.0
    %3128 = vmatpush1.msra.mxu0 0.0
    %3129 = vmatprep.subr.mxu0 0.0
    %3130 = vmatpush1.msra.mxu0 0.0
    %3131 = vmatprep.subr.mxu0 0.0
    %3132 = vmatpush1.msra.mxu0 0.0
    %3133 = vmatprep.subr.mxu0 0.0
    %3134 = vmatpush1.msra.mxu0 0.0
    %3135 = vmatprep.subr.mxu0 0.0
    %3136 = vmatpush1.msra.mxu0 0.0
    %3137 = vmatprep.subr.mxu0 0.0
    %3138 = vmatpush1.msra.mxu0 0.0
    %3139 = vmatprep.subr.mxu0 0.0
    %3140 = vmatpush1.msra.mxu0 0.0
    %3141 = vmatprep.subr.mxu0 0.0
    %3142 = vmatpush1.msra.mxu0 0.0
    %3143 = vmatprep.subr.mxu0 0.0
    %3144 = vmatpush1.msra.mxu0 0.0
    %3145 = vmatprep.subr.mxu0 0.0
    %3146 = vmatpush1.msra.mxu0 0.0
    %3147 = vmatprep.subr.mxu0 0.0
    %3148 = vmatpush1.msra.mxu0 0.0
    %3149 = vmatprep.subr.mxu0 0.0
    %3150 = vmatpush1.msra.mxu0 0.0
    %3151 = vmatprep.subr.mxu0 0.0
    %3152 = vmatpush1.msra.mxu0 0.0
    %3153 = vmatprep.subr.mxu0 0.0
    %3154 = vmatpush1.msra.mxu0 0.0
    %3155 = vmatprep.subr.mxu0 0.0
    %3156 = vmatpush1.msra.mxu0 0.0
    %3157 = vmatprep.subr.mxu0 0.0
    %3158 = vmatpush1.msra.mxu0 0.0
    %3159 = vmatprep.subr.mxu0 0.0
    %3160 = vmatpush1.msra.mxu0 0.0
    %3161 = vmatprep.subr.mxu0 0.0
    %3162 = vmatpush1.msra.mxu0 0.0
    %3163 = vmatprep.subr.mxu0 0.0
    %3164 = vmatpush1.msra.mxu0 0.0
    %3165 = vmatprep.subr.mxu0 0.0
    %3166 = vmatpush1.msra.mxu0 0.0
    %3167 = vmatprep.subr.mxu0 0.0
    %3168 = vmatpush1.msra.mxu0 0.0
    %3169 = vmatprep.subr.mxu0 0.0
    %3170 = vmatpush1.msra.mxu0 0.0
    %3171 = vmatprep.subr.mxu0 0.0
    %3172 = vmatpush1.msra.mxu0 0.0
    %3173 = vmatprep.subr.mxu0 0.0
    %3174 = vmatpush1.msra.mxu0 0.0
    %3175 = vmatprep.subr.mxu0 0.0
    %3176 = vmatpush1.msra.mxu0 0.0
    %3177 = vmatprep.subr.mxu0 0.0
    %3178 = vmatpush1.msra.mxu0 0.0
    %3179 = vmatprep.subr.mxu0 0.0
    %3180 = vmatpush1.msra.mxu0 0.0
    %3181 = vmatprep.subr.mxu0 0.0
    %3182 = vmatpush1.msra.mxu0 0.0
    %3183 = vmatprep.subr.mxu0 0.0
    %3184 = vmatpush1.msra.mxu0 0.0
    %3185 = vmatprep.mubr.f32.mxu0 0.0
    %3186 = vmatmul.mubr.f32.gmra.mrb[0].mxu0 %v3119
    %v3187 = vpop.f32.mrb[0].mxu0
    %v3188 = vadd.f32 0.0, %v3187
    %v3189 = vpop.f32.mrb[0].mxu0
    %3190 = vdwg.mxu0
    %s3191 = scalar_lea.vmem [#allocation26], 256
    %v3192 = vld [vmem:[%s3191] sm:$0xff]
    %v3193 = vld [vmem:[%s3191 + $0x8] sm:$0xff]
    %v3194 = vld [vmem:[%s3191 + $0x10] sm:$0xff]
    %v3195 = vld [vmem:[%s3191 + $0x18] sm:$0xff]
    %v3196 = vld [vmem:[%s3191 + $0x20] sm:$0xff]
    %v3197 = vld [vmem:[%s3191 + $0x28] sm:$0xff]
    %v3198 = vld [vmem:[%s3191 + $0x30] sm:$0xff]
    %v3199 = vld [vmem:[%s3191 + $0x38] sm:$0xff]
    %v3200 = vld [vmem:[%s3191 + $0x40] sm:$0xff]
    %v3201 = vld [vmem:[%s3191 + $0x48] sm:$0xff]
    %v3202 = vld [vmem:[%s3191 + $0x50] sm:$0xff]
    %v3203 = vld [vmem:[%s3191 + $0x58] sm:$0xff]
    %v3204 = vld [vmem:[%s3191 + $0x60] sm:$0xff]
    %v3205 = vld [vmem:[%s3191 + $0x68] sm:$0xff]
    %v3206 = vld [vmem:[%s3191 + $0x70] sm:$0xff]
    %v3207 = vld [vmem:[%s3191 + $0x78] sm:$0xff]
    %3208 = vmatprep.subr.mxu0 0.0
    %3209 = vmatpush1.msra.mxu0 %v3192
    %3210 = vmatprep.subr.mxu0 0.0
    %3211 = vmatpush1.msra.mxu0 %v3193
    %3212 = vmatprep.subr.mxu0 0.0
    %3213 = vmatpush1.msra.mxu0 %v3194
    %3214 = vmatprep.subr.mxu0 0.0
    %3215 = vmatpush1.msra.mxu0 %v3195
    %3216 = vmatprep.subr.mxu0 0.0
    %3217 = vmatpush1.msra.mxu0 %v3196
    %3218 = vmatprep.subr.mxu0 0.0
    %3219 = vmatpush1.msra.mxu0 %v3197
    %3220 = vmatprep.subr.mxu0 0.0
    %3221 = vmatpush1.msra.mxu0 %v3198
    %3222 = vmatprep.subr.mxu0 0.0
    %3223 = vmatpush1.msra.mxu0 %v3199
    %3224 = vmatprep.subr.mxu0 0.0
    %3225 = vmatpush1.msra.mxu0 %v3200
    %3226 = vmatprep.subr.mxu0 0.0
    %3227 = vmatpush1.msra.mxu0 %v3201
    %3228 = vmatprep.subr.mxu0 0.0
    %3229 = vmatpush1.msra.mxu0 %v3202
    %3230 = vmatprep.subr.mxu0 0.0
    %3231 = vmatpush1.msra.mxu0 %v3203
    %3232 = vmatprep.subr.mxu0 0.0
    %3233 = vmatpush1.msra.mxu0 %v3204
    %3234 = vmatprep.subr.mxu0 0.0
    %3235 = vmatpush1.msra.mxu0 %v3205
    %3236 = vmatprep.subr.mxu0 0.0
    %3237 = vmatpush1.msra.mxu0 %v3206
    %3238 = vmatprep.subr.mxu0 0.0
    %3239 = vmatpush1.msra.mxu0 %v3207
    %3240 = vmatprep.subr.mxu0 0.0
    %3241 = vmatpush1.msra.mxu0 0.0
    %3242 = vmatprep.subr.mxu0 0.0
    %3243 = vmatpush1.msra.mxu0 0.0
    %3244 = vmatprep.subr.mxu0 0.0
    %3245 = vmatpush1.msra.mxu0 0.0
    %3246 = vmatprep.subr.mxu0 0.0
    %3247 = vmatpush1.msra.mxu0 0.0
    %3248 = vmatprep.subr.mxu0 0.0
    %3249 = vmatpush1.msra.mxu0 0.0
    %3250 = vmatprep.subr.mxu0 0.0
    %3251 = vmatpush1.msra.mxu0 0.0
    %3252 = vmatprep.subr.mxu0 0.0
    %3253 = vmatpush1.msra.mxu0 0.0
    %3254 = vmatprep.subr.mxu0 0.0
    %3255 = vmatpush1.msra.mxu0 0.0
    %3256 = vmatprep.subr.mxu0 0.0
    %3257 = vmatpush1.msra.mxu0 0.0
    %3258 = vmatprep.subr.mxu0 0.0
    %3259 = vmatpush1.msra.mxu0 0.0
    %3260 = vmatprep.subr.mxu0 0.0
    %3261 = vmatpush1.msra.mxu0 0.0
    %3262 = vmatprep.subr.mxu0 0.0
    %3263 = vmatpush1.msra.mxu0 0.0
    %3264 = vmatprep.subr.mxu0 0.0
    %3265 = vmatpush1.msra.mxu0 0.0
    %3266 = vmatprep.subr.mxu0 0.0
    %3267 = vmatpush1.msra.mxu0 0.0
    %3268 = vmatprep.subr.mxu0 0.0
    %3269 = vmatpush1.msra.mxu0 0.0
    %3270 = vmatprep.subr.mxu0 0.0
    %3271 = vmatpush1.msra.mxu0 0.0
    %3272 = vmatprep.mubr.f32.mxu0 0.0
    %3273 = vmatmul.mubr.f32.gmra.mrb[0].mxu0 %v3188
    %v3274 = vpop.f32.mrb[0].mxu0
    %v3275 = vadd.f32 0.0, %v3274
    %v3276 = vpop.f32.mrb[0].mxu0
    %3277 = vdwg.mxu0
    %v3278 = vadd.f32 %v3113, %v3275
    %v3279 = vld [vmem:[%s19] sm:$0x1]
    %v3281 = vlaneseq
    %v3282 = vshrl.u32 %v3281, 7
    %v3283 = vsub.s32 0, %v3282
    %v3284 = vrot.slane %v3279, %v3283
    %v3286 = vadd.f32 %v3278, %v3284
    %v3287 = vmax.f32 %v3286, 0.0
    %v3288 = vld [vmem:[#allocation28] sm:$0xff]
    %vm3289 = vcmask 64512
    %v3291 = vsel %vm3289, %v3288, 0
    %3293 = vmatprep.subr.mxu0 0.0
    %3294 = vmatpush1.msra.mxu0 %v3287
    %3295 = vmatprep.subr.mxu0 0.0
    %3296 = vmatpush1.msra.mxu0 0.0
    %3297 = vmatprep.subr.mxu0 0.0
    %3298 = vmatpush1.msra.mxu0 0.0
    %3299 = vmatprep.subr.mxu0 0.0
    %3300 = vmatpush1.msra.mxu0 0.0
    %3301 = vmatprep.subr.mxu0 0.0
    %3302 = vmatpush1.msra.mxu0 0.0
    %3303 = vmatprep.subr.mxu0 0.0
    %3304 = vmatpush1.msra.mxu0 0.0
    %3305 = vmatprep.subr.mxu0 0.0
    %3306 = vmatpush1.msra.mxu0 0.0
    %3307 = vmatprep.subr.mxu0 0.0
    %3308 = vmatpush1.msra.mxu0 0.0
    %3309 = vmatprep.subr.mxu0 0.0
    %3310 = vmatpush1.msra.mxu0 0.0
    %3311 = vmatprep.subr.mxu0 0.0
    %3312 = vmatpush1.msra.mxu0 0.0
    %3313 = vmatprep.subr.mxu0 0.0
    %3314 = vmatpush1.msra.mxu0 0.0
    %3315 = vmatprep.subr.mxu0 0.0
    %3316 = vmatpush1.msra.mxu0 0.0
    %3317 = vmatprep.subr.mxu0 0.0
    %3318 = vmatpush1.msra.mxu0 0.0
    %3319 = vmatprep.subr.mxu0 0.0
    %3320 = vmatpush1.msra.mxu0 0.0
    %3321 = vmatprep.subr.mxu0 0.0
    %3322 = vmatpush1.msra.mxu0 0.0
    %3323 = vmatprep.subr.mxu0 0.0
    %3324 = vmatpush1.msra.mxu0 0.0
    %3325 = vmatprep.subr.mxu0 0.0
    %3326 = vmatpush1.msra.mxu0 0.0
    %3327 = vmatprep.subr.mxu0 0.0
    %3328 = vmatpush1.msra.mxu0 0.0
    %3329 = vmatprep.subr.mxu0 0.0
    %3330 = vmatpush1.msra.mxu0 0.0
    %3331 = vmatprep.subr.mxu0 0.0
    %3332 = vmatpush1.msra.mxu0 0.0
    %3333 = vmatprep.subr.mxu0 0.0
    %3334 = vmatpush1.msra.mxu0 0.0
    %3335 = vmatprep.subr.mxu0 0.0
    %3336 = vmatpush1.msra.mxu0 0.0
    %3337 = vmatprep.subr.mxu0 0.0
    %3338 = vmatpush1.msra.mxu0 0.0
    %3339 = vmatprep.subr.mxu0 0.0
    %3340 = vmatpush1.msra.mxu0 0.0
    %3341 = vmatprep.subr.mxu0 0.0
    %3342 = vmatpush1.msra.mxu0 0.0
    %3343 = vmatprep.subr.mxu0 0.0
    %3344 = vmatpush1.msra.mxu0 0.0
    %3345 = vmatprep.subr.mxu0 0.0
    %3346 = vmatpush1.msra.mxu0 0.0
    %3347 = vmatprep.subr.mxu0 0.0
    %3348 = vmatpush1.msra.mxu0 0.0
    %3349 = vmatprep.subr.mxu0 0.0
    %3350 = vmatpush1.msra.mxu0 0.0
    %3351 = vmatprep.subr.mxu0 0.0
    %3352 = vmatpush1.msra.mxu0 0.0
    %3353 = vmatprep.subr.mxu0 0.0
    %3354 = vmatpush1.msra.mxu0 0.0
    %3355 = vmatprep.subr.mxu0 0.0
    %3356 = vmatpush1.msra.mxu0 0.0
    %3357 = vmatprep.mubr.f32.mxu0 0.0
    %3358 = vmatmul.mubr.f32.gmra.mrb[0].mxu0 %v3291
    %v3359 = vpop.f32.mrb[0].mxu0
    %v3360 = vadd.f32 0.0, %v3359
    %v3361 = vpop.f32.mrb[0].mxu0
    %3362 = vdwg.mxu0
    %v3363 = vld [vmem:[#allocation29] sm:$0xff]
    %v3364 = vld [vmem:[#allocation29 + $0x8] sm:$0xff]
    %v3365 = vld [vmem:[#allocation29 + $0x10] sm:$0xff]
    %v3366 = vld [vmem:[#allocation29 + $0x18] sm:$0xff]
    %v3367 = vld [vmem:[#allocation29 + $0x20] sm:$0xff]
    %v3368 = vld [vmem:[#allocation29 + $0x28] sm:$0xff]
    %v3369 = vld [vmem:[#allocation29 + $0x30] sm:$0xff]
    %v3370 = vld [vmem:[#allocation29 + $0x38] sm:$0xff]
    %v3371 = vld [vmem:[#allocation29 + $0x40] sm:$0xff]
    %v3372 = vld [vmem:[#allocation29 + $0x48] sm:$0xff]
    %v3373 = vld [vmem:[#allocation29 + $0x50] sm:$0xff]
    %v3374 = vld [vmem:[#allocation29 + $0x58] sm:$0xff]
    %v3375 = vld [vmem:[#allocation29 + $0x60] sm:$0xff]
    %v3376 = vld [vmem:[#allocation29 + $0x68] sm:$0xff]
    %v3377 = vld [vmem:[#allocation29 + $0x70] sm:$0xff]
    %v3378 = vld [vmem:[#allocation29 + $0x78] sm:$0xff]
    %s3379 = scalar_lea.vmem [#allocation28], 8
    %v3380 = vld [vmem:[%s3379] sm:$0xff]
    %v3382 = vsel %vm3289, %v3380, 0
    %3384 = vmatprep.subr.mxu0 0.0
    %3385 = vmatpush1.msra.mxu0 %v3287
    %3386 = vmatprep.subr.mxu0 0.0
    %3387 = vmatpush1.msra.mxu0 0.0
    %3388 = vmatprep.subr.mxu0 0.0
    %3389 = vmatpush1.msra.mxu0 0.0
    %3390 = vmatprep.subr.mxu0 0.0
    %3391 = vmatpush1.msra.mxu0 0.0
    %3392 = vmatprep.subr.mxu0 0.0
    %3393 = vmatpush1.msra.mxu0 0.0
    %3394 = vmatprep.subr.mxu0 0.0
    %3395 = vmatpush1.msra.mxu0 0.0
    %3396 = vmatprep.subr.mxu0 0.0
    %3397 = vmatpush1.msra.mxu0 0.0
    %3398 = vmatprep.subr.mxu0 0.0
    %3399 = vmatpush1.msra.mxu0 0.0
    %3400 = vmatprep.subr.mxu0 0.0
    %3401 = vmatpush1.msra.mxu0 0.0
    %3402 = vmatprep.subr.mxu0 0.0
    %3403 = vmatpush1.msra.mxu0 0.0
    %3404 = vmatprep.subr.mxu0 0.0
    %3405 = vmatpush1.msra.mxu0 0.0
    %3406 = vmatprep.subr.mxu0 0.0
    %3407 = vmatpush1.msra.mxu0 0.0
    %3408 = vmatprep.subr.mxu0 0.0
    %3409 = vmatpush1.msra.mxu0 0.0
    %3410 = vmatprep.subr.mxu0 0.0
    %3411 = vmatpush1.msra.mxu0 0.0
    %3412 = vmatprep.subr.mxu0 0.0
    %3413 = vmatpush1.msra.mxu0 0.0
    %3414 = vmatprep.subr.mxu0 0.0
    %3415 = vmatpush1.msra.mxu0 0.0
    %3416 = vmatprep.subr.mxu0 0.0
    %3417 = vmatpush1.msra.mxu0 0.0
    %3418 = vmatprep.subr.mxu0 0.0
    %3419 = vmatpush1.msra.mxu0 0.0
    %3420 = vmatprep.subr.mxu0 0.0
    %3421 = vmatpush1.msra.mxu0 0.0
    %3422 = vmatprep.subr.mxu0 0.0
    %3423 = vmatpush1.msra.mxu0 0.0
    %3424 = vmatprep.subr.mxu0 0.0
    %3425 = vmatpush1.msra.mxu0 0.0
    %3426 = vmatprep.subr.mxu0 0.0
    %3427 = vmatpush1.msra.mxu0 0.0
    %3428 = vmatprep.subr.mxu0 0.0
    %3429 = vmatpush1.msra.mxu0 0.0
    %3430 = vmatprep.subr.mxu0 0.0
    %3431 = vmatpush1.msra.mxu0 0.0
    %3432 = vmatprep.subr.mxu0 0.0
    %3433 = vmatpush1.msra.mxu0 0.0
    %3434 = vmatprep.subr.mxu0 0.0
    %3435 = vmatpush1.msra.mxu0 0.0
    %3436 = vmatprep.subr.mxu0 0.0
    %3437 = vmatpush1.msra.mxu0 0.0
    %3438 = vmatprep.subr.mxu0 0.0
    %3439 = vmatpush1.msra.mxu0 0.0
    %3440 = vmatprep.subr.mxu0 0.0
    %3441 = vmatpush1.msra.mxu0 0.0
    %3442 = vmatprep.subr.mxu0 0.0
    %3443 = vmatpush1.msra.mxu0 0.0
    %3444 = vmatprep.subr.mxu0 0.0
    %3445 = vmatpush1.msra.mxu0 0.0
    %3446 = vmatprep.subr.mxu0 0.0
    %3447 = vmatpush1.msra.mxu0 0.0
    %3448 = vmatprep.mubr.f32.mxu0 0.0
    %3449 = vmatmul.mubr.f32.gmra.mrb[0].mxu0 %v3382
    %v3450 = vpop.f32.mrb[0].mxu0
    %v3451 = vadd.f32 0.0, %v3450
    %v3452 = vpop.f32.mrb[0].mxu0
    %3453 = vdwg.mxu0
    %s3454 = scalar_lea.vmem [#allocation29], 128
    %v3455 = vld [vmem:[%s3454] sm:$0xff]
    %v3456 = vld [vmem:[%s3454 + $0x8] sm:$0xff]
    %v3457 = vld [vmem:[%s3454 + $0x10] sm:$0xff]
    %v3458 = vld [vmem:[%s3454 + $0x18] sm:$0xff]
    %v3459 = vld [vmem:[%s3454 + $0x20] sm:$0xff]
    %v3460 = vld [vmem:[%s3454 + $0x28] sm:$0xff]
    %v3461 = vld [vmem:[%s3454 + $0x30] sm:$0xff]
    %v3462 = vld [vmem:[%s3454 + $0x38] sm:$0xff]
    %v3463 = vld [vmem:[%s3454 + $0x40] sm:$0xff]
    %v3464 = vld [vmem:[%s3454 + $0x48] sm:$0xff]
    %v3465 = vld [vmem:[%s3454 + $0x50] sm:$0xff]
    %v3466 = vld [vmem:[%s3454 + $0x58] sm:$0xff]
    %v3467 = vld [vmem:[%s3454 + $0x60] sm:$0xff]
    %v3468 = vld [vmem:[%s3454 + $0x68] sm:$0xff]
    %v3469 = vld [vmem:[%s3454 + $0x70] sm:$0xff]
    %v3470 = vld [vmem:[%s3454 + $0x78] sm:$0xff]
    %3471 = vmatprep.subr.mxu0 0.0
    %3472 = vmatpush1.msra.mxu0 %v3455
    %3473 = vmatprep.subr.mxu0 0.0
    %3474 = vmatpush1.msra.mxu0 %v3456
    %3475 = vmatprep.subr.mxu0 0.0
    %3476 = vmatpush1.msra.mxu0 %v3457
    %3477 = vmatprep.subr.mxu0 0.0
    %3478 = vmatpush1.msra.mxu0 %v3458
    %3479 = vmatprep.subr.mxu0 0.0
    %3480 = vmatpush1.msra.mxu0 %v3459
    %3481 = vmatprep.subr.mxu0 0.0
    %3482 = vmatpush1.msra.mxu0 %v3460
    %3483 = vmatprep.subr.mxu0 0.0
    %3484 = vmatpush1.msra.mxu0 %v3461
    %3485 = vmatprep.subr.mxu0 0.0
    %3486 = vmatpush1.msra.mxu0 %v3462
    %3487 = vmatprep.subr.mxu0 0.0
    %3488 = vmatpush1.msra.mxu0 %v3463
    %3489 = vmatprep.subr.mxu0 0.0
    %3490 = vmatpush1.msra.mxu0 %v3464
    %3491 = vmatprep.subr.mxu0 0.0
    %3492 = vmatpush1.msra.mxu0 %v3465
    %3493 = vmatprep.subr.mxu0 0.0
    %3494 = vmatpush1.msra.mxu0 %v3466
    %3495 = vmatprep.subr.mxu0 0.0
    %3496 = vmatpush1.msra.mxu0 %v3467
    %3497 = vmatprep.subr.mxu0 0.0
    %3498 = vmatpush1.msra.mxu0 %v3468
    %3499 = vmatprep.subr.mxu0 0.0
    %3500 = vmatpush1.msra.mxu0 %v3469
    %3501 = vmatprep.subr.mxu0 0.0
    %3502 = vmatpush1.msra.mxu0 %v3470
    %3503 = vmatprep.subr.mxu0 0.0
    %3504 = vmatpush1.msra.mxu0 0.0
    %3505 = vmatprep.subr.mxu0 0.0
    %3506 = vmatpush1.msra.mxu0 0.0
    %3507 = vmatprep.subr.mxu0 0.0
    %3508 = vmatpush1.msra.mxu0 0.0
    %3509 = vmatprep.subr.mxu0 0.0
    %3510 = vmatpush1.msra.mxu0 0.0
    %3511 = vmatprep.subr.mxu0 0.0
    %3512 = vmatpush1.msra.mxu0 0.0
    %3513 = vmatprep.subr.mxu0 0.0
    %3514 = vmatpush1.msra.mxu0 0.0
    %3515 = vmatprep.subr.mxu0 0.0
    %3516 = vmatpush1.msra.mxu0 0.0
    %3517 = vmatprep.subr.mxu0 0.0
    %3518 = vmatpush1.msra.mxu0 0.0
    %3519 = vmatprep.subr.mxu0 0.0
    %3520 = vmatpush1.msra.mxu0 0.0
    %3521 = vmatprep.subr.mxu0 0.0
    %3522 = vmatpush1.msra.mxu0 0.0
    %3523 = vmatprep.subr.mxu0 0.0
    %3524 = vmatpush1.msra.mxu0 0.0
    %3525 = vmatprep.subr.mxu0 0.0
    %3526 = vmatpush1.msra.mxu0 0.0
    %3527 = vmatprep.subr.mxu0 0.0
    %3528 = vmatpush1.msra.mxu0 0.0
    %3529 = vmatprep.subr.mxu0 0.0
    %3530 = vmatpush1.msra.mxu0 0.0
    %3531 = vmatprep.subr.mxu0 0.0
    %3532 = vmatpush1.msra.mxu0 0.0
    %3533 = vmatprep.subr.mxu0 0.0
    %3534 = vmatpush1.msra.mxu0 0.0
    %3535 = vmatprep.mubr.f32.mxu0 0.0
    %3536 = vmatmul.mubr.f32.gmra.mrb[0].mxu0 %v3451
    %v3537 = vpop.f32.mrb[0].mxu0
    %v3538 = vadd.f32 0.0, %v3537
    %v3539 = vpop.f32.mrb[0].mxu0
    %3540 = vdwg.mxu0
    %3541 = vmatprep.subr.mxu0 0.0
    %3542 = vmatpush1.msra.mxu0 %v3363
    %3543 = vmatprep.subr.mxu0 0.0
    %3544 = vmatpush1.msra.mxu0 %v3364
    %3545 = vmatprep.subr.mxu0 0.0
    %3546 = vmatpush1.msra.mxu0 %v3365
    %3547 = vmatprep.subr.mxu0 0.0
    %3548 = vmatpush1.msra.mxu0 %v3366
    %3549 = vmatprep.subr.mxu0 0.0
    %3550 = vmatpush1.msra.mxu0 %v3367
    %3551 = vmatprep.subr.mxu0 0.0
    %3552 = vmatpush1.msra.mxu0 %v3368
    %3553 = vmatprep.subr.mxu0 0.0
    %3554 = vmatpush1.msra.mxu0 %v3369
    %3555 = vmatprep.subr.mxu0 0.0
    %3556 = vmatpush1.msra.mxu0 %v3370
    %3557 = vmatprep.subr.mxu0 0.0
    %3558 = vmatpush1.msra.mxu0 %v3371
    %3559 = vmatprep.subr.mxu0 0.0
    %3560 = vmatpush1.msra.mxu0 %v3372
    %3561 = vmatprep.subr.mxu0 0.0
    %3562 = vmatpush1.msra.mxu0 %v3373
    %3563 = vmatprep.subr.mxu0 0.0
    %3564 = vmatpush1.msra.mxu0 %v3374
    %3565 = vmatprep.subr.mxu0 0.0
    %3566 = vmatpush1.msra.mxu0 %v3375
    %3567 = vmatprep.subr.mxu0 0.0
    %3568 = vmatpush1.msra.mxu0 %v3376
    %3569 = vmatprep.subr.mxu0 0.0
    %3570 = vmatpush1.msra.mxu0 %v3377
    %3571 = vmatprep.subr.mxu0 0.0
    %3572 = vmatpush1.msra.mxu0 %v3378
    %3573 = vmatprep.subr.mxu0 0.0
    %3574 = vmatpush1.msra.mxu0 0.0
    %3575 = vmatprep.subr.mxu0 0.0
    %3576 = vmatpush1.msra.mxu0 0.0
    %3577 = vmatprep.subr.mxu0 0.0
    %3578 = vmatpush1.msra.mxu0 0.0
    %3579 = vmatprep.subr.mxu0 0.0
    %3580 = vmatpush1.msra.mxu0 0.0
    %3581 = vmatprep.subr.mxu0 0.0
    %3582 = vmatpush1.msra.mxu0 0.0
    %3583 = vmatprep.subr.mxu0 0.0
    %3584 = vmatpush1.msra.mxu0 0.0
    %3585 = vmatprep.subr.mxu0 0.0
    %3586 = vmatpush1.msra.mxu0 0.0
    %3587 = vmatprep.subr.mxu0 0.0
    %3588 = vmatpush1.msra.mxu0 0.0
    %3589 = vmatprep.subr.mxu0 0.0
    %3590 = vmatpush1.msra.mxu0 0.0
    %3591 = vmatprep.subr.mxu0 0.0
    %3592 = vmatpush1.msra.mxu0 0.0
    %3593 = vmatprep.subr.mxu0 0.0
    %3594 = vmatpush1.msra.mxu0 0.0
    %3595 = vmatprep.subr.mxu0 0.0
    %3596 = vmatpush1.msra.mxu0 0.0
    %3597 = vmatprep.subr.mxu0 0.0
    %3598 = vmatpush1.msra.mxu0 0.0
    %3599 = vmatprep.subr.mxu0 0.0
    %3600 = vmatpush1.msra.mxu0 0.0
    %3601 = vmatprep.subr.mxu0 0.0
    %3602 = vmatpush1.msra.mxu0 0.0
    %3603 = vmatprep.subr.mxu0 0.0
    %3604 = vmatpush1.msra.mxu0 0.0
    %3605 = vmatprep.mubr.f32.mxu0 0.0
    %3606 = vmatmul.mubr.f32.gmra.mrb[0].mxu0 %v3360
    %v3607 = vpop.f32.mrb[0].mxu0
    %v3608 = vadd.f32 %v3538, %v3607
    %v3609 = vpop.f32.mrb[0].mxu0
    %3610 = vdwg.mxu0
    %s3611 = scalar_lea.vmem [#allocation28], 16
    %v3612 = vld [vmem:[%s3611] sm:$0xff]
    %v3614 = vsel %vm3289, %v3612, 0
    %3616 = vmatprep.subr.mxu0 0.0
    %3617 = vmatpush1.msra.mxu0 %v3287
    %3618 = vmatprep.subr.mxu0 0.0
    %3619 = vmatpush1.msra.mxu0 0.0
    %3620 = vmatprep.subr.mxu0 0.0
    %3621 = vmatpush1.msra.mxu0 0.0
    %3622 = vmatprep.subr.mxu0 0.0
    %3623 = vmatpush1.msra.mxu0 0.0
    %3624 = vmatprep.subr.mxu0 0.0
    %3625 = vmatpush1.msra.mxu0 0.0
    %3626 = vmatprep.subr.mxu0 0.0
    %3627 = vmatpush1.msra.mxu0 0.0
    %3628 = vmatprep.subr.mxu0 0.0
    %3629 = vmatpush1.msra.mxu0 0.0
    %3630 = vmatprep.subr.mxu0 0.0
    %3631 = vmatpush1.msra.mxu0 0.0
    %3632 = vmatprep.subr.mxu0 0.0
    %3633 = vmatpush1.msra.mxu0 0.0
    %3634 = vmatprep.subr.mxu0 0.0
    %3635 = vmatpush1.msra.mxu0 0.0
    %3636 = vmatprep.subr.mxu0 0.0
    %3637 = vmatpush1.msra.mxu0 0.0
    %3638 = vmatprep.subr.mxu0 0.0
    %3639 = vmatpush1.msra.mxu0 0.0
    %3640 = vmatprep.subr.mxu0 0.0
    %3641 = vmatpush1.msra.mxu0 0.0
    %3642 = vmatprep.subr.mxu0 0.0
    %3643 = vmatpush1.msra.mxu0 0.0
    %3644 = vmatprep.subr.mxu0 0.0
    %3645 = vmatpush1.msra.mxu0 0.0
    %3646 = vmatprep.subr.mxu0 0.0
    %3647 = vmatpush1.msra.mxu0 0.0
    %3648 = vmatprep.subr.mxu0 0.0
    %3649 = vmatpush1.msra.mxu0 0.0
    %3650 = vmatprep.subr.mxu0 0.0
    %3651 = vmatpush1.msra.mxu0 0.0
    %3652 = vmatprep.subr.mxu0 0.0
    %3653 = vmatpush1.msra.mxu0 0.0
    %3654 = vmatprep.subr.mxu0 0.0
    %3655 = vmatpush1.msra.mxu0 0.0
    %3656 = vmatprep.subr.mxu0 0.0
    %3657 = vmatpush1.msra.mxu0 0.0
    %3658 = vmatprep.subr.mxu0 0.0
    %3659 = vmatpush1.msra.mxu0 0.0
    %3660 = vmatprep.subr.mxu0 0.0
    %3661 = vmatpush1.msra.mxu0 0.0
    %3662 = vmatprep.subr.mxu0 0.0
    %3663 = vmatpush1.msra.mxu0 0.0
    %3664 = vmatprep.subr.mxu0 0.0
    %3665 = vmatpush1.msra.mxu0 0.0
    %3666 = vmatprep.subr.mxu0 0.0
    %3667 = vmatpush1.msra.mxu0 0.0
    %3668 = vmatprep.subr.mxu0 0.0
    %3669 = vmatpush1.msra.mxu0 0.0
    %3670 = vmatprep.subr.mxu0 0.0
    %3671 = vmatpush1.msra.mxu0 0.0
    %3672 = vmatprep.subr.mxu0 0.0
    %3673 = vmatpush1.msra.mxu0 0.0
    %3674 = vmatprep.subr.mxu0 0.0
    %3675 = vmatpush1.msra.mxu0 0.0
    %3676 = vmatprep.subr.mxu0 0.0
    %3677 = vmatpush1.msra.mxu0 0.0
    %3678 = vmatprep.subr.mxu0 0.0
    %3679 = vmatpush1.msra.mxu0 0.0
    %3680 = vmatprep.mubr.f32.mxu0 0.0
    %3681 = vmatmul.mubr.f32.gmra.mrb[0].mxu0 %v3614
    %v3682 = vpop.f32.mrb[0].mxu0
    %v3683 = vadd.f32 0.0, %v3682
    %v3684 = vpop.f32.mrb[0].mxu0
    %3685 = vdwg.mxu0
    %s3686 = scalar_lea.vmem [#allocation29], 256
    %v3687 = vld [vmem:[%s3686] sm:$0xff]
    %v3688 = vld [vmem:[%s3686 + $0x8] sm:$0xff]
    %v3689 = vld [vmem:[%s3686 + $0x10] sm:$0xff]
    %v3690 = vld [vmem:[%s3686 + $0x18] sm:$0xff]
    %v3691 = vld [vmem:[%s3686 + $0x20] sm:$0xff]
    %v3692 = vld [vmem:[%s3686 + $0x28] sm:$0xff]
    %v3693 = vld [vmem:[%s3686 + $0x30] sm:$0xff]
    %v3694 = vld [vmem:[%s3686 + $0x38] sm:$0xff]
    %v3695 = vld [vmem:[%s3686 + $0x40] sm:$0xff]
    %v3696 = vld [vmem:[%s3686 + $0x48] sm:$0xff]
    %v3697 = vld [vmem:[%s3686 + $0x50] sm:$0xff]
    %v3698 = vld [vmem:[%s3686 + $0x58] sm:$0xff]
    %v3699 = vld [vmem:[%s3686 + $0x60] sm:$0xff]
    %v3700 = vld [vmem:[%s3686 + $0x68] sm:$0xff]
    %v3701 = vld [vmem:[%s3686 + $0x70] sm:$0xff]
    %v3702 = vld [vmem:[%s3686 + $0x78] sm:$0xff]
    %3703 = vmatprep.subr.mxu0 0.0
    %3704 = vmatpush1.msra.mxu0 %v3687
    %3705 = vmatprep.subr.mxu0 0.0
    %3706 = vmatpush1.msra.mxu0 %v3688
    %3707 = vmatprep.subr.mxu0 0.0
    %3708 = vmatpush1.msra.mxu0 %v3689
    %3709 = vmatprep.subr.mxu0 0.0
    %3710 = vmatpush1.msra.mxu0 %v3690
    %3711 = vmatprep.subr.mxu0 0.0
    %3712 = vmatpush1.msra.mxu0 %v3691
    %3713 = vmatprep.subr.mxu0 0.0
    %3714 = vmatpush1.msra.mxu0 %v3692
    %3715 = vmatprep.subr.mxu0 0.0
    %3716 = vmatpush1.msra.mxu0 %v3693
    %3717 = vmatprep.subr.mxu0 0.0
    %3718 = vmatpush1.msra.mxu0 %v3694
    %3719 = vmatprep.subr.mxu0 0.0
    %3720 = vmatpush1.msra.mxu0 %v3695
    %3721 = vmatprep.subr.mxu0 0.0
    %3722 = vmatpush1.msra.mxu0 %v3696
    %3723 = vmatprep.subr.mxu0 0.0
    %3724 = vmatpush1.msra.mxu0 %v3697
    %3725 = vmatprep.subr.mxu0 0.0
    %3726 = vmatpush1.msra.mxu0 %v3698
    %3727 = vmatprep.subr.mxu0 0.0
    %3728 = vmatpush1.msra.mxu0 %v3699
    %3729 = vmatprep.subr.mxu0 0.0
    %3730 = vmatpush1.msra.mxu0 %v3700
    %3731 = vmatprep.subr.mxu0 0.0
    %3732 = vmatpush1.msra.mxu0 %v3701
    %3733 = vmatprep.subr.mxu0 0.0
    %3734 = vmatpush1.msra.mxu0 %v3702
    %3735 = vmatprep.subr.mxu0 0.0
    %3736 = vmatpush1.msra.mxu0 0.0
    %3737 = vmatprep.subr.mxu0 0.0
    %3738 = vmatpush1.msra.mxu0 0.0
    %3739 = vmatprep.subr.mxu0 0.0
    %3740 = vmatpush1.msra.mxu0 0.0
    %3741 = vmatprep.subr.mxu0 0.0
    %3742 = vmatpush1.msra.mxu0 0.0
    %3743 = vmatprep.subr.mxu0 0.0
    %3744 = vmatpush1.msra.mxu0 0.0
    %3745 = vmatprep.subr.mxu0 0.0
    %3746 = vmatpush1.msra.mxu0 0.0
    %3747 = vmatprep.subr.mxu0 0.0
    %3748 = vmatpush1.msra.mxu0 0.0
    %3749 = vmatprep.subr.mxu0 0.0
    %3750 = vmatpush1.msra.mxu0 0.0
    %3751 = vmatprep.subr.mxu0 0.0
    %3752 = vmatpush1.msra.mxu0 0.0
    %3753 = vmatprep.subr.mxu0 0.0
    %3754 = vmatpush1.msra.mxu0 0.0
    %3755 = vmatprep.subr.mxu0 0.0
    %3756 = vmatpush1.msra.mxu0 0.0
    %3757 = vmatprep.subr.mxu0 0.0
    %3758 = vmatpush1.msra.mxu0 0.0
    %3759 = vmatprep.subr.mxu0 0.0
    %3760 = vmatpush1.msra.mxu0 0.0
    %3761 = vmatprep.subr.mxu0 0.0
    %3762 = vmatpush1.msra.mxu0 0.0
    %3763 = vmatprep.subr.mxu0 0.0
    %3764 = vmatpush1.msra.mxu0 0.0
    %3765 = vmatprep.subr.mxu0 0.0
    %3766 = vmatpush1.msra.mxu0 0.0
    %3767 = vmatprep.mubr.f32.mxu0 0.0
    %3768 = vmatmul.mubr.f32.gmra.mrb[0].mxu0 %v3683
    %v3769 = vpop.f32.mrb[0].mxu0
    %v3770 = vadd.f32 0.0, %v3769
    %v3771 = vpop.f32.mrb[0].mxu0
    %3772 = vdwg.mxu0
    %v3773 = vadd.f32 %v3608, %v3770
    %v3774 = vld [vmem:[%s22] sm:$0x1]
    %v3776 = vlaneseq
    %v3777 = vshrl.u32 %v3776, 7
    %v3778 = vsub.s32 0, %v3777
    %v3779 = vrot.slane %v3774, %v3778
    %v3781 = vadd.f32 %v3773, %v3779
    %v3782 = vadd.f32 %v3781, %v2791
    %v3783 = vmax.f32 %v3782, 0.0
    %v3784 = vld [vmem:[%s23] sm:$0x3]
    %v3786 = vsel %vm3289, %v3784, 0
    %3788 = vmatprep.subr.mxu0 0.0
    %3789 = vmatpush1.msra.mxu0 %v3783
    %3790 = vmatprep.subr.mxu0 0.0
    %3791 = vmatpush1.msra.mxu0 0.0
    %3792 = vmatprep.subr.mxu0 0.0
    %3793 = vmatpush1.msra.mxu0 0.0
    %3794 = vmatprep.subr.mxu0 0.0
    %3795 = vmatpush1.msra.mxu0 0.0
    %3796 = vmatprep.subr.mxu0 0.0
    %3797 = vmatpush1.msra.mxu0 0.0
    %3798 = vmatprep.subr.mxu0 0.0
    %3799 = vmatpush1.msra.mxu0 0.0
    %3800 = vmatprep.subr.mxu0 0.0
    %3801 = vmatpush1.msra.mxu0 0.0
    %3802 = vmatprep.subr.mxu0 0.0
    %3803 = vmatpush1.msra.mxu0 0.0
    %3804 = vmatprep.subr.mxu0 0.0
    %3805 = vmatpush1.msra.mxu0 0.0
    %3806 = vmatprep.subr.mxu0 0.0
    %3807 = vmatpush1.msra.mxu0 0.0
    %3808 = vmatprep.subr.mxu0 0.0
    %3809 = vmatpush1.msra.mxu0 0.0
    %3810 = vmatprep.subr.mxu0 0.0
    %3811 = vmatpush1.msra.mxu0 0.0
    %3812 = vmatprep.subr.mxu0 0.0
    %3813 = vmatpush1.msra.mxu0 0.0
    %3814 = vmatprep.subr.mxu0 0.0
    %3815 = vmatpush1.msra.mxu0 0.0
    %3816 = vmatprep.subr.mxu0 0.0
    %3817 = vmatpush1.msra.mxu0 0.0
    %3818 = vmatprep.subr.mxu0 0.0
    %3819 = vmatpush1.msra.mxu0 0.0
    %3820 = vmatprep.subr.mxu0 0.0
    %3821 = vmatpush1.msra.mxu0 0.0
    %3822 = vmatprep.subr.mxu0 0.0
    %3823 = vmatpush1.msra.mxu0 0.0
    %3824 = vmatprep.subr.mxu0 0.0
    %3825 = vmatpush1.msra.mxu0 0.0
    %3826 = vmatprep.subr.mxu0 0.0
    %3827 = vmatpush1.msra.mxu0 0.0
    %3828 = vmatprep.subr.mxu0 0.0
    %3829 = vmatpush1.msra.mxu0 0.0
    %3830 = vmatprep.subr.mxu0 0.0
    %3831 = vmatpush1.msra.mxu0 0.0
    %3832 = vmatprep.subr.mxu0 0.0
    %3833 = vmatpush1.msra.mxu0 0.0
    %3834 = vmatprep.subr.mxu0 0.0
    %3835 = vmatpush1.msra.mxu0 0.0
    %3836 = vmatprep.subr.mxu0 0.0
    %3837 = vmatpush1.msra.mxu0 0.0
    %3838 = vmatprep.subr.mxu0 0.0
    %3839 = vmatpush1.msra.mxu0 0.0
    %3840 = vmatprep.subr.mxu0 0.0
    %3841 = vmatpush1.msra.mxu0 0.0
    %3842 = vmatprep.subr.mxu0 0.0
    %3843 = vmatpush1.msra.mxu0 0.0
    %3844 = vmatprep.subr.mxu0 0.0
    %3845 = vmatpush1.msra.mxu0 0.0
    %3846 = vmatprep.subr.mxu0 0.0
    %3847 = vmatpush1.msra.mxu0 0.0
    %3848 = vmatprep.subr.mxu0 0.0
    %3849 = vmatpush1.msra.mxu0 0.0
    %3850 = vmatprep.subr.mxu0 0.0
    %3851 = vmatpush1.msra.mxu0 0.0
    %3852 = vmatprep.mubr.f32.mxu0 0.0
    %3853 = vmatmul.mubr.f32.gmra.mrb[0].mxu0 %v3786
    %v3854 = vpop.f32.mrb[0].mxu0
    %v3855 = vadd.f32 0.0, %v3854
    %v3856 = vpop.f32.mrb[0].mxu0
    %3857 = vdwg.mxu0
    %v3858 = vld [vmem:[%s24] sm:$0xff]
    %v3859 = vld [vmem:[%s24 + $0x8] sm:$0xff]
    %v3860 = vld [vmem:[%s24 + $0x10] sm:$0xff]
    %v3861 = vld [vmem:[%s24 + $0x18] sm:$0xff]
    %v3862 = vld [vmem:[%s24 + $0x20] sm:$0xff]
    %v3863 = vld [vmem:[%s24 + $0x28] sm:$0xff]
    %v3864 = vld [vmem:[%s24 + $0x30] sm:$0xff]
    %v3865 = vld [vmem:[%s24 + $0x38] sm:$0xff]
    %v3866 = vld [vmem:[%s24 + $0x40] sm:$0xff]
    %v3867 = vld [vmem:[%s24 + $0x48] sm:$0xff]
    %v3868 = vld [vmem:[%s24 + $0x50] sm:$0xff]
    %v3869 = vld [vmem:[%s24 + $0x58] sm:$0xff]
    %v3870 = vld [vmem:[%s24 + $0x60] sm:$0xff]
    %v3871 = vld [vmem:[%s24 + $0x68] sm:$0xff]
    %v3872 = vld [vmem:[%s24 + $0x70] sm:$0xff]
    %v3873 = vld [vmem:[%s24 + $0x78] sm:$0xff]
    %v3874 = vld [vmem:[%s25] sm:$0x1]
    %v3876 = vlaneseq
    %v3877 = vshrl.u32 %v3876, 7
    %v3878 = vsub.s32 0, %v3877
    %v3879 = vrot.slane %v3874, %v3878
    %3881 = vmatprep.subr.mxu0 0.0
    %3882 = vmatpush1.msra.mxu0 %v3858
    %3883 = vmatprep.subr.mxu0 0.0
    %3884 = vmatpush1.msra.mxu0 %v3859
    %3885 = vmatprep.subr.mxu0 0.0
    %3886 = vmatpush1.msra.mxu0 %v3860
    %3887 = vmatprep.subr.mxu0 0.0
    %3888 = vmatpush1.msra.mxu0 %v3861
    %3889 = vmatprep.subr.mxu0 0.0
    %3890 = vmatpush1.msra.mxu0 %v3862
    %3891 = vmatprep.subr.mxu0 0.0
    %3892 = vmatpush1.msra.mxu0 %v3863
    %3893 = vmatprep.subr.mxu0 0.0
    %3894 = vmatpush1.msra.mxu0 %v3864
    %3895 = vmatprep.subr.mxu0 0.0
    %3896 = vmatpush1.msra.mxu0 %v3865
    %3897 = vmatprep.subr.mxu0 0.0
    %3898 = vmatpush1.msra.mxu0 %v3866
    %3899 = vmatprep.subr.mxu0 0.0
    %3900 = vmatpush1.msra.mxu0 %v3867
    %3901 = vmatprep.subr.mxu0 0.0
    %3902 = vmatpush1.msra.mxu0 %v3868
    %3903 = vmatprep.subr.mxu0 0.0
    %3904 = vmatpush1.msra.mxu0 %v3869
    %3905 = vmatprep.subr.mxu0 0.0
    %3906 = vmatpush1.msra.mxu0 %v3870
    %3907 = vmatprep.subr.mxu0 0.0
    %3908 = vmatpush1.msra.mxu0 %v3871
    %3909 = vmatprep.subr.mxu0 0.0
    %3910 = vmatpush1.msra.mxu0 %v3872
    %3911 = vmatprep.subr.mxu0 0.0
    %3912 = vmatpush1.msra.mxu0 %v3873
    %3913 = vmatprep.subr.mxu0 0.0
    %3914 = vmatpush1.msra.mxu0 0.0
    %3915 = vmatprep.subr.mxu0 0.0
    %3916 = vmatpush1.msra.mxu0 0.0
    %3917 = vmatprep.subr.mxu0 0.0
    %3918 = vmatpush1.msra.mxu0 0.0
    %3919 = vmatprep.subr.mxu0 0.0
    %3920 = vmatpush1.msra.mxu0 0.0
    %3921 = vmatprep.subr.mxu0 0.0
    %3922 = vmatpush1.msra.mxu0 0.0
    %3923 = vmatprep.subr.mxu0 0.0
    %3924 = vmatpush1.msra.mxu0 0.0
    %3925 = vmatprep.subr.mxu0 0.0
    %3926 = vmatpush1.msra.mxu0 0.0
    %3927 = vmatprep.subr.mxu0 0.0
    %3928 = vmatpush1.msra.mxu0 0.0
    %3929 = vmatprep.subr.mxu0 0.0
    %3930 = vmatpush1.msra.mxu0 0.0
    %3931 = vmatprep.subr.mxu0 0.0
    %3932 = vmatpush1.msra.mxu0 0.0
    %3933 = vmatprep.subr.mxu0 0.0
    %3934 = vmatpush1.msra.mxu0 0.0
    %3935 = vmatprep.subr.mxu0 0.0
    %3936 = vmatpush1.msra.mxu0 0.0
    %3937 = vmatprep.subr.mxu0 0.0
    %3938 = vmatpush1.msra.mxu0 0.0
    %3939 = vmatprep.subr.mxu0 0.0
    %3940 = vmatpush1.msra.mxu0 0.0
    %3941 = vmatprep.subr.mxu0 0.0
    %3942 = vmatpush1.msra.mxu0 0.0
    %3943 = vmatprep.subr.mxu0 0.0
    %3944 = vmatpush1.msra.mxu0 0.0
    %3945 = vmatprep.mubr.f32.mxu0 0.0
    %3946 = vmatmul.mubr.f32.gmra.mrb[0].mxu0 %v3855
    %v3947 = vpop.f32.mrb[0].mxu0
    %v3948 = vadd.f32 %v3879, %v3947
    %v3949 = vpop.f32.mrb[0].mxu0
    %3950 = vdwg.mxu0
    %vm3951 = vcmask 33792
    %3952 = vst.msk [vmem:[#allocation31] sm:$0x3] %vm3951, %v3948
    // Predicated region
    $region178: #{tpu_custom_call.1} parent=1 // pred_check
      _
    $region179: #{tpu_custom_call.1} parent=1 // pred_check_branch
      %3954 = sbr.rel (0) target = $region181
    $region180: #{tpu_custom_call.1} parent=1 // pred_region
      %s3956 = ssub.s32 32, 32
      %3957 = vsyncadd [#allocation4], %s3956
      %s3959 = sshll.u32 [#allocation31], 4
      %s3960 = int_to_ptr.vmem [resolvable:$true] %s3959
      %3962 = dma.vmem_to_hbm [thread:$0]  %s3960, 32, %s26, [#allocation4]
    $region181: #{tpu_custom_call.1} parent=1 // pred_fallthru
      _
    // Predicated region
    $region182: #{tpu_custom_call.1} parent=1 // pred_check
      _
    $region183: #{tpu_custom_call.1} parent=1 // pred_check_branch
      %3964 = sbr.rel (0) target = $region185
    $region184: #{tpu_custom_call.1} parent=1 // pred_region
      %3965 = dma.done [#allocation4], 32
    $region185: #{tpu_custom_call.1} parent=1 // pred_fallthru
      _
    %3966 = vsyncpa [#allocation3], 1
    %3967 = vsyncpa [#allocation6], 1
    %3968 = vsyncpa [#allocation9], 1
    %3969 = vsyncpa [#allocation12], 1
    %3970 = vsyncpa [#allocation15], 1
    %3971 = vsyncpa [#allocation18], 1
    %3972 = vsyncpa [#allocation21], 1
    %3973 = vsyncpa [#allocation24], 1
    %3974 = vsyncpa [#allocation27], 1
    %3975 = vsyncpa [#allocation30], 1
    %3976 = vsyncpa [#allocation4], 1

</llo_original>
